<compile_context>
chip_gen: v7x
topology: tpu7x:2x2x1
jax: 0.10.0
libtpu: 0.0.40
codegen_flags: <defaults>
</compile_context>

<pallas_src>
import jax
import jax.numpy as jnp
from jax.experimental import pallas as pl
from jax.experimental.pallas import tpu as pltpu

HIDDEN = 1024          # BERT-large hidden size (Linear(1024, 2) in the module)
NUM_CLASSES = 2
THRESHOLD = 0.5
LANES = 128            # lane-dense padding width for vocab / classifier / outputs
MAX_S_TILE = 512       # sequence positions per grid step (amortizes step overhead)


def _round_up(x, mult):
    return -(-x // mult) * mult


def _choose_b_tile(total_rows):
    """Prefer >=2 batch tiles (keeps v7x's second TensorCore busy) while
    capping a tile at 128 rows so the epilogue pooler matmul fills the MXU."""
    for bt in (128, 64, 32, 16):
        if total_rows >= 2 * bt:
            return bt
    return 8


def _disc_head_kernel(ids_ref, mask_ref, tbl_ref, wp_ref, bp_ref, wc_ref, bc_ref,
                      probs_ref, labels_ref, cnt_ref, den_ref):
    """Fused surrogate-encoder + pooler + classifier head (one (b, s) step).

    ids_ref   : [Bt, St]      token ids        (int32)
    mask_ref  : [Bt, St]      attention mask   (int32)
    tbl_ref   : [V, H]        embedding table  (f32,  VMEM-resident)
    wp_ref    : [H, H]        pooler weight    (bf16, resident)
    bp_ref    : [1, H]        pooler bias      (f32,  resident)
    wc_ref    : [H, LANES]    classifier weight, zero-padded (bf16, resident)
    bc_ref    : [1, LANES]    classifier bias, zero-padded   (f32,  resident)
    probs_ref : [Bt, LANES]   P(class==1) broadcast across lanes  (output)
    labels_ref: [Bt, LANES]   (probs >= 0.5) int32                (output)
    cnt_ref   : [Bt, V]  f32  masked token-histogram accumulator  (scratch)
    den_ref   : [Bt, 1]  f32  mask-count accumulator              (scratch)
    """
    s = pl.program_id(1)

    @pl.when(s == 0)
    def _():
        cnt_ref[...] = jnp.zeros_like(cnt_ref)
        den_ref[...] = jnp.zeros_like(den_ref)

    ids = ids_ref[...]                                    # [Bt, St] int32
    mask_f = mask_ref[...].astype(jnp.float32)            # [Bt, St] f32 (0/1)
    bt, st = ids.shape
    v = cnt_ref.shape[1]

    # --- surrogate encoder, streaming part (pure VPU, f32 accumulation) ------
    # masked one-hot histogram of token ids over this sequence tile; the
    # [Bt, St, H] embedding activation is never formed.
    vocab_iota = jax.lax.broadcasted_iota(jnp.int32, (bt, st, v), 2)
    onehot = (ids[:, :, None] == vocab_iota).astype(jnp.float32)     # [Bt,St,V]
    cnt_ref[...] += jnp.sum(onehot * mask_f[:, :, None], axis=1)     # [Bt, V]
    den_ref[...] += jnp.sum(mask_f, axis=1, keepdims=True)           # [Bt, 1]

    # --- epilogue on the last sequence tile ----------------------------------
    @pl.when(s == pl.num_programs(1) - 1)
    def _():
        denom = jnp.maximum(den_ref[...], 1.0)                       # [Bt, 1]
        # masked mean of token embeddings == (histogram @ table) / count
        feat = jnp.dot(cnt_ref[...], tbl_ref[...],
                       preferred_element_type=jnp.float32) / denom   # [Bt, H]

        # BERT-style pooler: tanh(dense(feat))
        pooled = jnp.tanh(
            jnp.dot(feat.astype(wp_ref.dtype), wp_ref[...],
                    preferred_element_type=jnp.float32) + bp_ref[...])

        # TODO(synk): nn.Dropout(0.5) is identity at inference time; not applied.

        # classifier head: ReLU(Linear(1024, 2)), weight zero-padded to 128 lanes
        logits = jnp.dot(pooled.astype(wc_ref.dtype), wc_ref[...],
                         preferred_element_type=jnp.float32) + bc_ref[...]
        act = jnp.maximum(logits, 0.0)                               # [Bt, LANES]

        # 2-class softmax over the valid columns: softmax([a0,a1])[:,1]
        # == sigmoid(a1 - a0) exactly; padded columns never enter the math.
        a0 = act[:, 0:1]
        a1 = act[:, 1:2]
        p1 = 1.0 / (1.0 + jnp.exp(a0 - a1))                          # [Bt, 1]

        probs_ref[...] = jnp.broadcast_to(p1, probs_ref.shape)
        # (p1 >= 0.5) <=> (a1 >= a0): threshold on logits, exact & robust.
        labels_ref[...] = jnp.broadcast_to(
            (a1 >= a0).astype(jnp.int32), labels_ref.shape)


def _head_call(ids, mask, table, wp, bp, wc, bc, b_tile, s_tile):
    """Invoke the fused head kernel on the concatenated (real ++ gen) batch."""
    B, S = ids.shape                       # already padded to tile multiples
    V, H = table.shape
    grid = (B // b_tile, S // s_tile)

    nbytes = lambda a: int(a.size) * a.dtype.itemsize
    cost = pl.CostEstimate(
        flops=int(2 * B * S * V            # masked one-hot histogram (VPU)
                  + 2 * B * V * H          # histogram @ embedding table
                  + 2 * B * H * H          # pooler matmul
                  + 2 * B * H * LANES),    # classifier matmul
        transcendentals=int(B * (H + 1)),  # tanh + exp
        bytes_accessed=int(nbytes(ids) + nbytes(mask) + nbytes(table)
                           + nbytes(wp) + nbytes(bp) + nbytes(wc) + nbytes(bc)
                           + 2 * B * LANES * 4),
    )

    probs, labels = pl.pallas_call(
        _disc_head_kernel,
        out_shape=(jax.ShapeDtypeStruct((B, LANES), jnp.float32),
                   jax.ShapeDtypeStruct((B, LANES), jnp.int32)),
        grid_spec=pltpu.PrefetchScalarGridSpec(
            num_scalar_prefetch=0,
            grid=grid,
            in_specs=[
                pl.BlockSpec((b_tile, s_tile), lambda b, s: (b, s)),   # ids
                pl.BlockSpec((b_tile, s_tile), lambda b, s: (b, s)),   # mask
                pl.BlockSpec((V, H), lambda b, s: (0, 0)),      # table (resident)
                pl.BlockSpec((H, H), lambda b, s: (0, 0)),      # wp    (resident)
                pl.BlockSpec((1, H), lambda b, s: (0, 0)),      # bp    (resident)
                pl.BlockSpec((H, LANES), lambda b, s: (0, 0)),  # wc    (resident)
                pl.BlockSpec((1, LANES), lambda b, s: (0, 0)),  # bc    (resident)
            ],
            out_specs=(
                pl.BlockSpec((b_tile, LANES), lambda b, s: (b, 0)),
                pl.BlockSpec((b_tile, LANES), lambda b, s: (b, 0)),
            ),
            scratch_shapes=[
                pltpu.VMEM((b_tile, V), jnp.float32),   # token-histogram acc
                pltpu.VMEM((b_tile, 1), jnp.float32),   # mask-count acc
            ],
        ),
        compiler_params=pltpu.CompilerParams(
            dimension_semantics=("parallel", "arbitrary")),
        cost_estimate=cost,
    )(ids, mask, table, wp, bp, wc, bc)
    return probs[:, 0], labels[:, 0]


def init_params(key, vocab_size=32, hidden=HIDDEN, num_classes=NUM_CLASSES):
    k_emb, k_wp, k_bp, k_wc, k_bc = jax.random.split(key, 5)
    scale = 0.02
    # Vocab padded to a lane-dense width so the counts/one-hot/table matmul is
    # layout-friendly; padded rows are zero and never indexed.
    # TODO(synk): for a real 30K-entry BERT vocab the table cannot stay
    # VMEM-resident; a streamed / gathered table path would be needed.
    v_pad = _round_up(vocab_size, LANES)
    emb = scale * jax.random.normal(k_emb, (vocab_size, hidden), jnp.float32)
    emb_pad = jnp.zeros((v_pad, hidden), jnp.float32).at[:vocab_size].set(emb)

    wc = scale * jax.random.normal(k_wc, (hidden, num_classes), jnp.float32)
    bc = scale * jax.random.normal(k_bc, (1, num_classes), jnp.float32)
    wc_pad = jnp.zeros((hidden, LANES), jnp.float32).at[:, :num_classes].set(wc)
    bc_pad = jnp.zeros((1, LANES), jnp.float32).at[:, :num_classes].set(bc)

    return {
        "emb": emb_pad,                                            # f32, tiny
        # HBM-heavy matmul weight in bf16 (MXU-native); f32 accumulation in-kernel.
        "wp": (scale * jax.random.normal(
            k_wp, (hidden, hidden), jnp.float32)).astype(jnp.bfloat16),
        "bp": scale * jax.random.normal(k_bp, (1, hidden), jnp.float32),
        "wc": wc_pad.astype(jnp.bfloat16),
        "bc": bc_pad,
    }


def discriminator_forward(params, real_text_ids, gen_text_ids,
                          real_text_attmasks, gen_text_attmasks):
    """Mirrors Discriminator.forward: returns probs and thresholded labels."""
    B = real_text_ids.shape[0]

    # Fuse both streams into ONE kernel launch: weights are read from HBM once,
    # one pipeline prologue, double the epilogue's MXU row occupancy.
    ids = jnp.concatenate([real_text_ids, gen_text_ids], axis=0).astype(jnp.int32)
    mask = jnp.concatenate(
        [real_text_attmasks, gen_text_attmasks], axis=0).astype(jnp.int32)

    total, S = ids.shape
    b_tile = _choose_b_tile(total)
    s_tile = min(MAX_S_TILE, _round_up(S, LANES))

    # Pad batch / sequence to tile multiples; padded positions carry mask=0
    # (excluded from the masked mean) and padded batch rows are sliced off.
    bp_pad = _round_up(total, b_tile)
    sp_pad = _round_up(S, s_tile)
    ids = jnp.pad(ids, ((0, bp_pad - total), (0, sp_pad - S)))
    mask = jnp.pad(mask, ((0, bp_pad - total), (0, sp_pad - S)))

    probs, labels = _head_call(ids, mask, params["emb"], params["wp"],
                               params["bp"], params["wc"], params["bc"],
                               b_tile, s_tile)

    # Note: PyTorch .long() -> int64; JAX default int width on TPU is int32.
    return {
        "real_probs": probs[:B],
        "gen_probs": probs[B:2 * B],
        "real_pre_labels": labels[:B],
        "gen_pre_labels": labels[B:2 * B],
    }


if __name__ == "__main__":
    B, S, VOCAB = 2, 8, 32
    key = jax.random.PRNGKey(0)
    k_params, k_real, k_gen = jax.random.split(key, 3)

    params = init_params(k_params, vocab_size=VOCAB)

    real_ids = jax.random.randint(k_real, (B, S), 0, VOCAB, dtype=jnp.int32)
    gen_ids = jax.random.randint(k_gen, (B, S), 0, VOCAB, dtype=jnp.int32)
    # simple attention masks: all-ones for real, last two positions padded for gen
    real_mask = jnp.ones((B, S), dtype=jnp.int32)
    gen_mask = jnp.concatenate(
        [jnp.ones((B, S - 2), jnp.int32), jnp.zeros((B, 2), jnp.int32)], axis=1)

    out = discriminator_forward(params, real_ids, gen_ids, real_mask, gen_mask)
    out = jax.block_until_ready(out)

    assert out["real_probs"].shape == (B,)
    assert out["gen_probs"].shape == (B,)
    assert out["real_pre_labels"].dtype == jnp.int32
    assert out["gen_pre_labels"].dtype == jnp.int32
    assert bool(jnp.all(jnp.isfinite(out["real_probs"])))
    assert bool(jnp.all(jnp.isfinite(out["gen_probs"])))
    assert bool(jnp.all((out["real_probs"] >= 0) & (out["real_probs"] <= 1)))
    assert bool(jnp.all((out["gen_probs"] >= 0) & (out["gen_probs"] <= 1)))
    print("KERNEL_OK")
</pallas_src>

<mosaic_0001>
module attributes {stable_mosaic.version = 11 : i64} {
  func.func @_disc_head_kernel(%arg0: i32, %arg1: i32, %arg2: memref<8x128xi32, #tpu.memory_space<vmem>>, %arg3: memref<8x128xi32, #tpu.memory_space<vmem>>, %arg4: memref<128x1024xf32, #tpu.memory_space<vmem>>, %arg5: memref<1024x1024xbf16, #tpu.memory_space<vmem>>, %arg6: memref<1x1024xf32, #tpu.memory_space<vmem>>, %arg7: memref<1024x128xbf16, #tpu.memory_space<vmem>>, %arg8: memref<1x128xf32, #tpu.memory_space<vmem>>, %arg9: memref<8x128xf32, #tpu.memory_space<vmem>>, %arg10: memref<8x128xi32, #tpu.memory_space<vmem>>, %arg11: memref<8x128xf32, #tpu.memory_space<vmem>>, %arg12: memref<8x1xf32, #tpu.memory_space<vmem>>) attributes {dimension_semantics = [#tpu.dimension_semantics<parallel>, #tpu.dimension_semantics<arbitrary>], iteration_bounds = array<i64: 1, 1>, scalar_prefetch = 0 : i64, scratch_operands = 2 : i64, tpu.core_type = #tpu.core_type<tc>, window_params = [{transform_indices = @transform_0, window_bounds = array<i64: 8, 128>}, {transform_indices = @transform_1, window_bounds = array<i64: 8, 128>}, {pipeline_mode = #tpu.pipeline_mode<synchronous>, transform_indices = @transform_2, window_bounds = array<i64: 128, 1024>}, {pipeline_mode = #tpu.pipeline_mode<synchronous>, transform_indices = @transform_3, window_bounds = array<i64: 1024, 1024>}, {pipeline_mode = #tpu.pipeline_mode<synchronous>, transform_indices = @transform_4, window_bounds = array<i64: 1, 1024>}, {pipeline_mode = #tpu.pipeline_mode<synchronous>, transform_indices = @transform_5, window_bounds = array<i64: 1024, 128>}, {pipeline_mode = #tpu.pipeline_mode<synchronous>, transform_indices = @transform_6, window_bounds = array<i64: 1, 128>}, {transform_indices = @transform_7, window_bounds = array<i64: 8, 128>}, {transform_indices = @transform_8, window_bounds = array<i64: 8, 128>}]} {
    %c0_i32 = arith.constant 0 : i32
    %0 = arith.cmpi eq, %arg1, %c0_i32 : i32
    %1 = arith.extui %0 : i1 to i32
    %c0_i32_0 = arith.constant 0 : i32
    %2 = arith.cmpi ne, %1, %c0_i32_0 : i32
    scf.if %2 {
      %cst_15 = arith.constant 0.000000e+00 : f32
      %27 = vector.broadcast %cst_15 : f32 to vector<8x128xf32>
      %c0_16 = arith.constant 0 : index
      %c0_17 = arith.constant 0 : index
      %28 = vector.load %arg11[%c0_16, %c0_17] : memref<8x128xf32, #tpu.memory_space<vmem>>, vector<8x128xf32>
      tpu.vector_store %arg11[%c0_16, %c0_17], %27 {strides = array<i32>} : memref<8x128xf32, #tpu.memory_space<vmem>>, vector<8x128xf32>,
      %cst_18 = arith.constant 0.000000e+00 : f32
      %29 = vector.broadcast %cst_18 : f32 to vector<8x1xf32>
      %c0_19 = arith.constant 0 : index
      %c0_20 = arith.constant 0 : index
      %30 = vector.load %arg12[%c0_19, %c0_20] : memref<8x1xf32, #tpu.memory_space<vmem>>, vector<8x1xf32>
      tpu.vector_store %arg12[%c0_19, %c0_20], %29 {strides = array<i32>} : memref<8x1xf32, #tpu.memory_space<vmem>>, vector<8x1xf32>,
    } else {
    }
    %c0 = arith.constant 0 : index
    %c0_1 = arith.constant 0 : index
    %3 = vector.load %arg2[%c0, %c0_1] : memref<8x128xi32, #tpu.memory_space<vmem>>, vector<8x128xi32>
    %c0_2 = arith.constant 0 : index
    %c0_3 = arith.constant 0 : index
    %4 = vector.load %arg3[%c0_2, %c0_3] : memref<8x128xi32, #tpu.memory_space<vmem>>, vector<8x128xi32>
    %5 = arith.sitofp %4 : vector<8x128xi32> to vector<8x128xf32>
    %6 = tpu.iota {dimensions = array<i32: 2>} : vector<8x128x128xi32>
    %7 = vector.shape_cast %3 : vector<8x128xi32> to vector<8x128x1xi32>
    %8 = vector.broadcast %7 : vector<8x128x1xi32> to vector<8x128x128xi32>
    %9 = arith.cmpi eq, %8, %6 : vector<8x128x128xi32>
    %10 = arith.extui %9 : vector<8x128x128xi1> to vector<8x128x128xi32>
    %11 = arith.sitofp %10 : vector<8x128x128xi32> to vector<8x128x128xf32>
    %c0_4 = arith.constant 0 : index
    %c0_5 = arith.constant 0 : index
    %12 = vector.load %arg11[%c0_4, %c0_5] : memref<8x128xf32, #tpu.memory_space<vmem>>, vector<8x128xf32>
    %13 = vector.shape_cast %5 : vector<8x128xf32> to vector<8x128x1xf32>
    %14 = vector.broadcast %13 : vector<8x128x1xf32> to vector<8x128x128xf32>
    %15 = arith.mulf %11, %14 : vector<8x128x128xf32>
    %cst = arith.constant dense<0.000000e+00> : vector<8x128xf32>
    %16 = vector.multi_reduction <add>, %15, %cst [1] : vector<8x128x128xf32> to vector<8x128xf32>
    %17 = arith.addf %12, %16 : vector<8x128xf32>
    %c0_6 = arith.constant 0 : index
    %c0_7 = arith.constant 0 : index
    %18 = vector.load %arg11[%c0_6, %c0_7] : memref<8x128xf32, #tpu.memory_space<vmem>>, vector<8x128xf32>
    tpu.vector_store %arg11[%c0_6, %c0_7], %17 {strides = array<i32>} : memref<8x128xf32, #tpu.memory_space<vmem>>, vector<8x128xf32>,
    %c0_8 = arith.constant 0 : index
    %c0_9 = arith.constant 0 : index
    %19 = vector.load %arg12[%c0_8, %c0_9] : memref<8x1xf32, #tpu.memory_space<vmem>>, vector<8x1xf32>
    %cst_10 = arith.constant dense<0.000000e+00> : vector<8xf32>
    %20 = vector.multi_reduction <add>, %5, %cst_10 [1] : vector<8x128xf32> to vector<8xf32>
    %21 = vector.shape_cast %20 : vector<8xf32> to vector<8x1xf32>
    %22 = arith.addf %19, %21 : vector<8x1xf32>
    %c0_11 = arith.constant 0 : index
    %c0_12 = arith.constant 0 : index
    %23 = vector.load %arg12[%c0_11, %c0_12] : memref<8x1xf32, #tpu.memory_space<vmem>>, vector<8x1xf32>
    tpu.vector_store %arg12[%c0_11, %c0_12], %22 {strides = array<i32>} : memref<8x1xf32, #tpu.memory_space<vmem>>, vector<8x1xf32>,
    %c0_i32_13 = arith.constant 0 : i32
    %24 = arith.cmpi eq, %arg1, %c0_i32_13 : i32
    %25 = arith.extui %24 : i1 to i32
    %c0_i32_14 = arith.constant 0 : i32
    %26 = arith.cmpi ne, %25, %c0_i32_14 : i32
    scf.if %26 {
      %c0_15 = arith.constant 0 : index
      %c0_16 = arith.constant 0 : index
      %27 = vector.load %arg12[%c0_15, %c0_16] : memref<8x1xf32, #tpu.memory_space<vmem>>, vector<8x1xf32>
      %cst_17 = arith.constant 1.000000e+00 : f32
      %28 = vector.broadcast %cst_17 : f32 to vector<8x1xf32>
      %29 = arith.maximumf %27, %28 : vector<8x1xf32>
      %c0_18 = arith.constant 0 : index
      %c0_19 = arith.constant 0 : index
      %30 = vector.load %arg11[%c0_18, %c0_19] : memref<8x128xf32, #tpu.memory_space<vmem>>, vector<8x128xf32>
      %c0_20 = arith.constant 0 : index
      %c0_21 = arith.constant 0 : index
      %31 = vector.load %arg4[%c0_20, %c0_21] : memref<128x1024xf32, #tpu.memory_space<vmem>>, vector<128x1024xf32>
      %cst_22 = arith.constant dense<0.000000e+00> : vector<8x1024xf32>
      %32 = tpu.matmul %30, %31, %cst_22 {dimension_numbers = #tpu.dot_dimension_numbers<[1], [0], [0], [1], [0, 0, 1, 1], [], []>} : vector<8x128xf32>, vector<128x1024xf32>, vector<8x1024xf32> -> vector<8x1024xf32>
      %33 = vector.broadcast %29 : vector<8x1xf32> to vector<8x1024xf32>
      %34 = arith.divf %32, %33 : vector<8x1024xf32>
      %35 = arith.truncf %34 : vector<8x1024xf32> to vector<8x1024xbf16>
      %c0_23 = arith.constant 0 : index
      %c0_24 = arith.constant 0 : index
      %36 = vector.load %arg5[%c0_23, %c0_24] : memref<1024x1024xbf16, #tpu.memory_space<vmem>>, vector<1024x1024xbf16>
      %cst_25 = arith.constant dense<0.000000e+00> : vector<8x1024xf32>
      %37 = tpu.matmul %35, %36, %cst_25 {dimension_numbers = #tpu.dot_dimension_numbers<[1], [0], [0], [1], [0, 0, 1, 1], [], []>} : vector<8x1024xbf16>, vector<1024x1024xbf16>, vector<8x1024xf32> -> vector<8x1024xf32>
      %c0_26 = arith.constant 0 : index
      %c0_27 = arith.constant 0 : index
      %38 = vector.load %arg6[%c0_26, %c0_27] : memref<1x1024xf32, #tpu.memory_space<vmem>>, vector<1x1024xf32>
      %39 = vector.broadcast %38 : vector<1x1024xf32> to vector<8x1024xf32>
      %40 = arith.addf %37, %39 : vector<8x1024xf32>
      %41 = math.tanh %40 : vector<8x1024xf32>
      %42 = arith.truncf %41 : vector<8x1024xf32> to vector<8x1024xbf16>
      %c0_28 = arith.constant 0 : index
      %c0_29 = arith.constant 0 : index
      %43 = vector.load %arg7[%c0_28, %c0_29] : memref<1024x128xbf16, #tpu.memory_space<vmem>>, vector<1024x128xbf16>
      %cst_30 = arith.constant dense<0.000000e+00> : vector<8x128xf32>
      %44 = tpu.matmul %42, %43, %cst_30 {dimension_numbers = #tpu.dot_dimension_numbers<[1], [0], [0], [1], [0, 0, 1, 1], [], []>} : vector<8x1024xbf16>, vector<1024x128xbf16>, vector<8x128xf32> -> vector<8x128xf32>
      %c0_31 = arith.constant 0 : index
      %c0_32 = arith.constant 0 : index
      %45 = vector.load %arg8[%c0_31, %c0_32] : memref<1x128xf32, #tpu.memory_space<vmem>>, vector<1x128xf32>
      %46 = vector.broadcast %45 : vector<1x128xf32> to vector<8x128xf32>
      %47 = arith.addf %44, %46 : vector<8x128xf32>
      %cst_33 = arith.constant 0.000000e+00 : f32
      %48 = vector.broadcast %cst_33 : f32 to vector<8x128xf32>
      %49 = arith.maximumf %47, %48 : vector<8x128xf32>
      %50 = vector.extract_strided_slice %49 {offsets = [0, 0], sizes = [8, 1], strides = [1, 1]} : vector<8x128xf32> to vector<8x1xf32>
      %51 = vector.extract_strided_slice %49 {offsets = [0, 1], sizes = [8, 1], strides = [1, 1]} : vector<8x128xf32> to vector<8x1xf32>
      %52 = arith.subf %50, %51 : vector<8x1xf32>
      %53 = math.exp %52 : vector<8x1xf32>
      %cst_34 = arith.constant 1.000000e+00 : f32
      %54 = vector.broadcast %cst_34 : f32 to vector<8x1xf32>
      %55 = arith.addf %54, %53 : vector<8x1xf32>
      %cst_35 = arith.constant 1.000000e+00 : f32
      %56 = vector.broadcast %cst_35 : f32 to vector<8x1xf32>
      %57 = arith.divf %56, %55 : vector<8x1xf32>
      %58 = vector.shape_cast %57 : vector<8x1xf32> to vector<8x1xf32>
      %59 = vector.broadcast %58 : vector<8x1xf32> to vector<8x128xf32>
      %c0_36 = arith.constant 0 : index
      %c0_37 = arith.constant 0 : index
      %60 = vector.load %arg9[%c0_36, %c0_37] : memref<8x128xf32, #tpu.memory_space<vmem>>, vector<8x128xf32>
      tpu.vector_store %arg9[%c0_36, %c0_37], %59 {strides = array<i32>} : memref<8x128xf32, #tpu.memory_space<vmem>>, vector<8x128xf32>,
      %61 = arith.cmpf oge, %51, %50 : vector<8x1xf32>
      %62 = arith.extui %61 : vector<8x1xi1> to vector<8x1xi32>
      %63 = vector.shape_cast %62 : vector<8x1xi32> to vector<8x1xi32>
      %64 = vector.broadcast %63 : vector<8x1xi32> to vector<8x128xi32>
      %c0_38 = arith.constant 0 : index
      %c0_39 = arith.constant 0 : index
      %65 = vector.load %arg10[%c0_38, %c0_39] : memref<8x128xi32, #tpu.memory_space<vmem>>, vector<8x128xi32>
      tpu.vector_store %arg10[%c0_38, %c0_39], %64 {strides = array<i32>} : memref<8x128xi32, #tpu.memory_space<vmem>>, vector<8x128xi32>,
    } else {
    }
    return
  }
  func.func @transform_0(%arg0: i32, %arg1: i32) -> (i32, i32) {
    %c0_i32 = arith.constant 0 : i32
    return %arg0, %arg1 : i32, i32
  }
  func.func @transform_1(%arg0: i32, %arg1: i32) -> (i32, i32) {
    %c0_i32 = arith.constant 0 : i32
    return %arg0, %arg1 : i32, i32
  }
  func.func @transform_2(%arg0: i32, %arg1: i32) -> (i32, i32) {
    %c0_i32 = arith.constant 0 : i32
    %c0_i32_0 = arith.constant 0 : i32
    %c0_i32_1 = arith.constant 0 : i32
    return %c0_i32, %c0_i32_0 : i32, i32
  }
  func.func @transform_3(%arg0: i32, %arg1: i32) -> (i32, i32) {
    %c0_i32 = arith.constant 0 : i32
    %c0_i32_0 = arith.constant 0 : i32
    %c0_i32_1 = arith.constant 0 : i32
    return %c0_i32, %c0_i32_0 : i32, i32
  }
  func.func @transform_4(%arg0: i32, %arg1: i32) -> (i32, i32) {
    %c0_i32 = arith.constant 0 : i32
    %c0_i32_0 = arith.constant 0 : i32
    %c0_i32_1 = arith.constant 0 : i32
    return %c0_i32, %c0_i32_0 : i32, i32
  }
  func.func @transform_5(%arg0: i32, %arg1: i32) -> (i32, i32) {
    %c0_i32 = arith.constant 0 : i32
    %c0_i32_0 = arith.constant 0 : i32
    %c0_i32_1 = arith.constant 0 : i32
    return %c0_i32, %c0_i32_0 : i32, i32
  }
  func.func @transform_6(%arg0: i32, %arg1: i32) -> (i32, i32) {
    %c0_i32 = arith.constant 0 : i32
    %c0_i32_0 = arith.constant 0 : i32
    %c0_i32_1 = arith.constant 0 : i32
    return %c0_i32, %c0_i32_0 : i32, i32
  }
  func.func @transform_7(%arg0: i32, %arg1: i32) -> (i32, i32) {
    %c0_i32 = arith.constant 0 : i32
    %c0_i32_0 = arith.constant 0 : i32
    return %arg0, %c0_i32 : i32, i32
  }
  func.func @transform_8(%arg0: i32, %arg1: i32) -> (i32, i32) {
    %c0_i32 = arith.constant 0 : i32
    %c0_i32_0 = arith.constant 0 : i32
    return %arg0, %c0_i32 : i32, i32
  }
}

</mosaic_0001>

<llo_original>
// kernel: tpu_custom_call.1
$region0: #{tpu_custom_call.1}
  #allocation0 [shape = 'u32[]', space=smem, size = 0x4, offset = 0x4, fixed_abs, tag = 'smem constant byte address 0x4 - core index']
  #allocation1 [shape = 'u32[144,128]{1,0:T(1,128)}', space=vmem, size = 0x12000, scoped, tag = 'internal scratch']
  #allocation2 [shape = 'f32[8,128]{1,0:T(8,128)}', space=vmem, size = 0x1000, scoped, tag = 'scratch operand']
  #allocation3 [shape = 'f32[8,1]{1,0:T(8,128)}', space=vmem, size = 0x1000, scoped, tag = 'scratch operand']
  %s0 = inlined_call_operand.hbm [shape: s32[8,128], index: 0, kind: input, shape index: {}]
  %s1 = inlined_call_operand.hbm [shape: s32[8,128], index: 1, kind: input, shape index: {}]
  %s2 = inlined_call_operand.hbm [shape: f32[128,1024], index: 2, kind: input, shape index: {}]
  %s3 = inlined_call_operand.hbm [shape: bf16[1024,1024], index: 3, kind: input, shape index: {}]
  %s4 = inlined_call_operand.hbm [shape: f32[1,1024], index: 4, kind: input, shape index: {}]
  %s5 = inlined_call_operand.hbm [shape: bf16[1024,128], index: 5, kind: input, shape index: {}]
  %s6 = inlined_call_operand.hbm [shape: f32[1,128], index: 6, kind: input, shape index: {}]
  %s7 = inlined_call_operand.hbm [shape: f32[8,128], index: 7, kind: output, shape index: {0}]
  %s8 = inlined_call_operand.hbm [shape: s32[8,128], index: 8, kind: output, shape index: {1}]
  %9 = xla_tuple %s7, %s8
  %s10 = sld [smem:[#allocation0]]
  $region82: #{tpu_custom_call.1} parent=0
    _
  %s12 = ssub.s32 1, %s10
  %s13 = scalar_select 0, %s12, %s10
  $region1: #{tpu_custom_call.1} parent=0
    #allocation4 [shape = 'u8[4096]{0}', space=vmem, size = 0x1000, scoped, tag = 'input window, operand 0, single buffered']
    #allocation5 [shape = 's32[1]{0}', space=sflag, size = 0x4, scoped, tag = 'scoped memory for tpu_custom_call.1']
    #allocation6 [shape = 's32[1]{0}', space=sflag, size = 0x4, scoped, tag = 'scoped memory for tpu_custom_call.1']
    #allocation7 [shape = 'u8[4096]{0}', space=vmem, size = 0x1000, scoped, tag = 'input window, operand 1, single buffered']
    #allocation8 [shape = 's32[1]{0}', space=sflag, size = 0x4, scoped, tag = 'scoped memory for tpu_custom_call.1']
    #allocation9 [shape = 'u8[524288]{0}', space=vmem, size = 0x80000, scoped, tag = 'input window, operand 2, single buffered']
    #allocation10 [shape = 'u8[2097152]{0}', space=vmem, size = 0x200000, scoped, tag = 'input window, operand 3, single buffered']
    #allocation11 [shape = 's32[1]{0}', space=sflag, size = 0x4, scoped, tag = 'scoped memory for tpu_custom_call.1']
    #allocation12 [shape = 'u8[4096]{0}', space=vmem, size = 0x1000, scoped, tag = 'input window, operand 4, single buffered']
    #allocation13 [shape = 'u8[262144]{0}', space=vmem, size = 0x40000, scoped, tag = 'input window, operand 5, single buffered']
    #allocation14 [shape = 's32[1]{0}', space=sflag, size = 0x4, scoped, tag = 'scoped memory for tpu_custom_call.1']
    #allocation15 [shape = 'u8[512]{0}', space=vmem, size = 0x400, scoped, tag = 'input window, operand 6, single buffered']
    #allocation16 [shape = 'u8[4096]{0}', space=vmem, size = 0x1000, scoped, tag = 'output window, operand 0, single buffered']
    #allocation17 [shape = 'u8[4096]{0}', space=vmem, size = 0x1000, scoped, tag = 'output window, operand 1, single buffered']
    #allocation18 [shape = 's32[1]{0}', space=sflag, size = 0x4, scoped, tag = 'scoped memory for tpu_custom_call.1']
    %14 = vsyncpa [#allocation5], 0
    %15 = vsyncpa [#allocation8], 0
    %16 = vsyncpa [#allocation11], 0
    %17 = vsyncpa [#allocation14], 0
    %18 = vsyncpa [#allocation6], 0
    %19 = vsyncpa [#allocation18], 0
    // Predicated region
    $region2: #{tpu_custom_call.1} parent=1 // pred_check
      _
    $region3: #{tpu_custom_call.1} parent=1 // pred_check_branch
      %21 = sbr.rel (0) target = $region5
    $region4: #{tpu_custom_call.1} parent=1 // pred_region
      %s23 = ssub.s32 128, 128
      %24 = vsyncadd [#allocation5], %s23
      %s26 = sshll.u32 [#allocation4], 4
      %s27 = int_to_ptr.vmem [resolvable:$true] %s26
      %29 = dma.hbm_to_vmem [thread:$0]  %s0, 128, %s27, [#allocation5]
    $region5: #{tpu_custom_call.1} parent=1 // pred_fallthru
      _
    // Predicated region
    $region6: #{tpu_custom_call.1} parent=1 // pred_check
      _
    $region7: #{tpu_custom_call.1} parent=1 // pred_check_branch
      %31 = sbr.rel (0) target = $region9
    $region8: #{tpu_custom_call.1} parent=1 // pred_region
      %s33 = ssub.s32 128, 128
      %34 = vsyncadd [#allocation8], %s33
      %s36 = sshll.u32 [#allocation7], 4
      %s37 = int_to_ptr.vmem [resolvable:$true] %s36
      %39 = dma.hbm_to_vmem [thread:$0]  %s1, 128, %s37, [#allocation8]
    $region9: #{tpu_custom_call.1} parent=1 // pred_fallthru
      _
    // Predicated region
    $region10: #{tpu_custom_call.1} parent=1 // pred_check
      _
    $region11: #{tpu_custom_call.1} parent=1 // pred_check_branch
      %41 = sbr.rel (0) target = $region13
    $region12: #{tpu_custom_call.1} parent=1 // pred_region
      %s43 = ssub.s32 16384, 16384
      %44 = vsyncadd [#allocation8], %s43
      %s45 = sshll.u32 [#allocation9], 4
      %s46 = int_to_ptr.vmem [resolvable:$true] %s45
      %51 = dma.hbm_to_vmem [thread:$0]  %s2, 16384, %s46, [#allocation8], 1024, 1024, 64
    $region13: #{tpu_custom_call.1} parent=1 // pred_fallthru
      _
    // Predicated region
    $region14: #{tpu_custom_call.1} parent=1 // pred_check
      _
    $region15: #{tpu_custom_call.1} parent=1 // pred_check_branch
      %53 = sbr.rel (0) target = $region17
    $region16: #{tpu_custom_call.1} parent=1 // pred_region
      %s55 = ssub.s32 65536, 65536
      %56 = vsyncadd [#allocation11], %s55
      %s57 = sshll.u32 [#allocation10], 4
      %s58 = int_to_ptr.vmem [resolvable:$true] %s57
      %63 = dma.hbm_to_vmem [thread:$0]  %s3, 65536, %s58, [#allocation11], 512, 512, 32
    $region17: #{tpu_custom_call.1} parent=1 // pred_fallthru
      _
    // Predicated region
    $region18: #{tpu_custom_call.1} parent=1 // pred_check
      _
    $region19: #{tpu_custom_call.1} parent=1 // pred_check_branch
      %65 = sbr.rel (0) target = $region21
    $region20: #{tpu_custom_call.1} parent=1 // pred_region
      %s67 = ssub.s32 128, 128
      %68 = vsyncadd [#allocation11], %s67
      %s70 = sshll.u32 [#allocation12], 4
      %s71 = int_to_ptr.vmem [resolvable:$true] %s70
      %73 = dma.hbm_to_vmem [thread:$0]  %s4, 128, %s71, [#allocation11]
    $region21: #{tpu_custom_call.1} parent=1 // pred_fallthru
      _
    // Predicated region
    $region22: #{tpu_custom_call.1} parent=1 // pred_check
      _
    $region23: #{tpu_custom_call.1} parent=1 // pred_check_branch
      %75 = sbr.rel (0) target = $region25
    $region24: #{tpu_custom_call.1} parent=1 // pred_region
      %s77 = ssub.s32 8192, 8192
      %78 = vsyncadd [#allocation14], %s77
      %s79 = sshll.u32 [#allocation13], 4
      %s80 = int_to_ptr.vmem [resolvable:$true] %s79
      %85 = dma.hbm_to_vmem [thread:$0]  %s5, 8192, %s80, [#allocation14], 64, 64, 4
    $region25: #{tpu_custom_call.1} parent=1 // pred_fallthru
      _
    // Predicated region
    $region26: #{tpu_custom_call.1} parent=1 // pred_check
      _
    $region27: #{tpu_custom_call.1} parent=1 // pred_check_branch
      %87 = sbr.rel (0) target = $region29
    $region28: #{tpu_custom_call.1} parent=1 // pred_region
      %s89 = ssub.s32 16, 16
      %90 = vsyncadd [#allocation14], %s89
      %s92 = sshll.u32 [#allocation15], 4
      %s93 = int_to_ptr.vmem [resolvable:$true] %s92
      %95 = dma.hbm_to_vmem [thread:$0]  %s6, 16, %s93, [#allocation14]
    $region29: #{tpu_custom_call.1} parent=1 // pred_fallthru
      _
    // Predicated region
    $region30: #{tpu_custom_call.1} parent=1 // pred_check
      _
    $region31: #{tpu_custom_call.1} parent=1 // pred_check_branch
      %97 = sbr.rel (0) target = $region33
    $region32: #{tpu_custom_call.1} parent=1 // pred_region
      %98 = dma.done [#allocation5], 128
    $region33: #{tpu_custom_call.1} parent=1 // pred_fallthru
      _
    // Predicated region
    $region34: #{tpu_custom_call.1} parent=1 // pred_check
      _
    $region35: #{tpu_custom_call.1} parent=1 // pred_check_branch
      %100 = sbr.rel (0) target = $region37
    $region36: #{tpu_custom_call.1} parent=1 // pred_region
      %101 = dma.done [#allocation8], 128
    $region37: #{tpu_custom_call.1} parent=1 // pred_fallthru
      _
    // Predicated region
    $region38: #{tpu_custom_call.1} parent=1 // pred_check
      _
    $region39: #{tpu_custom_call.1} parent=1 // pred_check_branch
      %103 = sbr.rel (0) target = $region41
    $region40: #{tpu_custom_call.1} parent=1 // pred_region
      %104 = dma.done [#allocation8], 16384
    $region41: #{tpu_custom_call.1} parent=1 // pred_fallthru
      _
    // Predicated region
    $region42: #{tpu_custom_call.1} parent=1 // pred_check
      _
    $region43: #{tpu_custom_call.1} parent=1 // pred_check_branch
      %106 = sbr.rel (0) target = $region45
    $region44: #{tpu_custom_call.1} parent=1 // pred_region
      %107 = dma.done [#allocation11], 65536
    $region45: #{tpu_custom_call.1} parent=1 // pred_fallthru
      _
    // Predicated region
    $region46: #{tpu_custom_call.1} parent=1 // pred_check
      _
    $region47: #{tpu_custom_call.1} parent=1 // pred_check_branch
      %109 = sbr.rel (0) target = $region49
    $region48: #{tpu_custom_call.1} parent=1 // pred_region
      %110 = dma.done [#allocation11], 128
    $region49: #{tpu_custom_call.1} parent=1 // pred_fallthru
      _
    // Predicated region
    $region50: #{tpu_custom_call.1} parent=1 // pred_check
      _
    $region51: #{tpu_custom_call.1} parent=1 // pred_check_branch
      %112 = sbr.rel (0) target = $region53
    $region52: #{tpu_custom_call.1} parent=1 // pred_region
      %113 = dma.done [#allocation14], 8192
    $region53: #{tpu_custom_call.1} parent=1 // pred_fallthru
      _
    // Predicated region
    $region54: #{tpu_custom_call.1} parent=1 // pred_check
      _
    $region55: #{tpu_custom_call.1} parent=1 // pred_check_branch
      %115 = sbr.rel (0) target = $region57
    $region56: #{tpu_custom_call.1} parent=1 // pred_region
      %116 = dma.done [#allocation14], 16
    $region57: #{tpu_custom_call.1} parent=1 // pred_fallthru
      _
    %p118 = scmp.eq.s32.totalorder 0, 0
    // Predicated region
    $region58: #{tpu_custom_call.1} parent=1 // pred_check
      %p119 = pneg %p118
    $region59: #{tpu_custom_call.1} parent=1 // pred_check_branch
      %121 = sbr.rel (%p119) target = $region61
    $region60: #{tpu_custom_call.1} parent=1 // pred_region
      %122 = vst [vmem:[#allocation2] sm:$0xff] 0.0
      %vm123 = vcmask 7168
      %124 = vst.msk [vmem:[#allocation3] sm:$0xff] %vm123, 0.0
    $region61: #{tpu_custom_call.1} parent=1 // pred_fallthru
      _
    %v125 = vld [vmem:[#allocation4] sm:$0xff]
    %v126 = vld [vmem:[#allocation7] sm:$0xff]
    %v127 = vcvt.s32.f32 %v126
    %v128 = vlaneseq
    %v129 = vand.u32 %v128, 127
    %v130 = vlaneseq
    %v131 = vshrl.u32 %v130, 7
    %v132 = vsub.s32 0, %v131
    %v133 = vrot.slane %v125, %v132
    %135 = vbcast.lane.b32.xlu0 %v133, 256
    %v136 = vpop.permute.xlu0 %135
    %s138 = sor.u32 256, 8
    %139 = vbcast.lane.b32.xlu0 %v133, %s138
    %v140 = vpop.permute.xlu0 %139
    %s142 = sor.u32 256, 16
    %143 = vbcast.lane.b32.xlu0 %v133, %s142
    %v144 = vpop.permute.xlu0 %143
    %s146 = sor.u32 256, 24
    %147 = vbcast.lane.b32.xlu0 %v133, %s146
    %v148 = vpop.permute.xlu0 %147
    %s150 = sor.u32 256, 32
    %151 = vbcast.lane.b32.xlu0 %v133, %s150
    %v152 = vpop.permute.xlu0 %151
    %s154 = sor.u32 256, 40
    %155 = vbcast.lane.b32.xlu0 %v133, %s154
    %v156 = vpop.permute.xlu0 %155
    %s158 = sor.u32 256, 48
    %159 = vbcast.lane.b32.xlu0 %v133, %s158
    %v160 = vpop.permute.xlu0 %159
    %s162 = sor.u32 256, 56
    %163 = vbcast.lane.b32.xlu0 %v133, %s162
    %v164 = vpop.permute.xlu0 %163
    %s166 = sor.u32 256, 64
    %167 = vbcast.lane.b32.xlu0 %v133, %s166
    %v168 = vpop.permute.xlu0 %167
    %s170 = sor.u32 256, 72
    %171 = vbcast.lane.b32.xlu0 %v133, %s170
    %v172 = vpop.permute.xlu0 %171
    %s174 = sor.u32 256, 80
    %175 = vbcast.lane.b32.xlu0 %v133, %s174
    %v176 = vpop.permute.xlu0 %175
    %s178 = sor.u32 256, 88
    %179 = vbcast.lane.b32.xlu0 %v133, %s178
    %v180 = vpop.permute.xlu0 %179
    %s182 = sor.u32 256, 96
    %183 = vbcast.lane.b32.xlu0 %v133, %s182
    %v184 = vpop.permute.xlu0 %183
    %s186 = sor.u32 256, 104
    %187 = vbcast.lane.b32.xlu0 %v133, %s186
    %v188 = vpop.permute.xlu0 %187
    %s190 = sor.u32 256, 112
    %191 = vbcast.lane.b32.xlu0 %v133, %s190
    %v192 = vpop.permute.xlu0 %191
    %s194 = sor.u32 256, 120
    %195 = vbcast.lane.b32.xlu0 %v133, %s194
    %v196 = vpop.permute.xlu0 %195
    %v197 = vlaneseq
    %v198 = vshrl.u32 %v197, 7
    %v199 = vsub.s32 1, %v198
    %v200 = vrot.slane %v125, %v199
    %202 = vbcast.lane.b32.xlu0 %v200, 256
    %v203 = vpop.permute.xlu0 %202
    %s205 = sor.u32 256, 8
    %206 = vbcast.lane.b32.xlu0 %v200, %s205
    %v207 = vpop.permute.xlu0 %206
    %s209 = sor.u32 256, 16
    %210 = vbcast.lane.b32.xlu0 %v200, %s209
    %v211 = vpop.permute.xlu0 %210
    %s213 = sor.u32 256, 24
    %214 = vbcast.lane.b32.xlu0 %v200, %s213
    %v215 = vpop.permute.xlu0 %214
    %s217 = sor.u32 256, 32
    %218 = vbcast.lane.b32.xlu0 %v200, %s217
    %v219 = vpop.permute.xlu0 %218
    %s221 = sor.u32 256, 40
    %222 = vbcast.lane.b32.xlu0 %v200, %s221
    %v223 = vpop.permute.xlu0 %222
    %s225 = sor.u32 256, 48
    %226 = vbcast.lane.b32.xlu0 %v200, %s225
    %v227 = vpop.permute.xlu0 %226
    %s229 = sor.u32 256, 56
    %230 = vbcast.lane.b32.xlu0 %v200, %s229
    %v231 = vpop.permute.xlu0 %230
    %s233 = sor.u32 256, 64
    %234 = vbcast.lane.b32.xlu0 %v200, %s233
    %v235 = vpop.permute.xlu0 %234
    %s237 = sor.u32 256, 72
    %238 = vbcast.lane.b32.xlu0 %v200, %s237
    %v239 = vpop.permute.xlu0 %238
    %s241 = sor.u32 256, 80
    %242 = vbcast.lane.b32.xlu0 %v200, %s241
    %v243 = vpop.permute.xlu0 %242
    %s245 = sor.u32 256, 88
    %246 = vbcast.lane.b32.xlu0 %v200, %s245
    %v247 = vpop.permute.xlu0 %246
    %s249 = sor.u32 256, 96
    %250 = vbcast.lane.b32.xlu0 %v200, %s249
    %v251 = vpop.permute.xlu0 %250
    %s253 = sor.u32 256, 104
    %254 = vbcast.lane.b32.xlu0 %v200, %s253
    %v255 = vpop.permute.xlu0 %254
    %s257 = sor.u32 256, 112
    %258 = vbcast.lane.b32.xlu0 %v200, %s257
    %v259 = vpop.permute.xlu0 %258
    %s261 = sor.u32 256, 120
    %262 = vbcast.lane.b32.xlu0 %v200, %s261
    %v263 = vpop.permute.xlu0 %262
    %v264 = vlaneseq
    %v265 = vshrl.u32 %v264, 7
    %v266 = vsub.s32 2, %v265
    %v267 = vrot.slane %v125, %v266
    %269 = vbcast.lane.b32.xlu0 %v267, 256
    %v270 = vpop.permute.xlu0 %269
    %s272 = sor.u32 256, 8
    %273 = vbcast.lane.b32.xlu0 %v267, %s272
    %v274 = vpop.permute.xlu0 %273
    %s276 = sor.u32 256, 16
    %277 = vbcast.lane.b32.xlu0 %v267, %s276
    %v278 = vpop.permute.xlu0 %277
    %s280 = sor.u32 256, 24
    %281 = vbcast.lane.b32.xlu0 %v267, %s280
    %v282 = vpop.permute.xlu0 %281
    %s284 = sor.u32 256, 32
    %285 = vbcast.lane.b32.xlu0 %v267, %s284
    %v286 = vpop.permute.xlu0 %285
    %s288 = sor.u32 256, 40
    %289 = vbcast.lane.b32.xlu0 %v267, %s288
    %v290 = vpop.permute.xlu0 %289
    %s292 = sor.u32 256, 48
    %293 = vbcast.lane.b32.xlu0 %v267, %s292
    %v294 = vpop.permute.xlu0 %293
    %s296 = sor.u32 256, 56
    %297 = vbcast.lane.b32.xlu0 %v267, %s296
    %v298 = vpop.permute.xlu0 %297
    %s300 = sor.u32 256, 64
    %301 = vbcast.lane.b32.xlu0 %v267, %s300
    %v302 = vpop.permute.xlu0 %301
    %s304 = sor.u32 256, 72
    %305 = vbcast.lane.b32.xlu0 %v267, %s304
    %v306 = vpop.permute.xlu0 %305
    %s308 = sor.u32 256, 80
    %309 = vbcast.lane.b32.xlu0 %v267, %s308
    %v310 = vpop.permute.xlu0 %309
    %s312 = sor.u32 256, 88
    %313 = vbcast.lane.b32.xlu0 %v267, %s312
    %v314 = vpop.permute.xlu0 %313
    %s316 = sor.u32 256, 96
    %317 = vbcast.lane.b32.xlu0 %v267, %s316
    %v318 = vpop.permute.xlu0 %317
    %s320 = sor.u32 256, 104
    %321 = vbcast.lane.b32.xlu0 %v267, %s320
    %v322 = vpop.permute.xlu0 %321
    %s324 = sor.u32 256, 112
    %325 = vbcast.lane.b32.xlu0 %v267, %s324
    %v326 = vpop.permute.xlu0 %325
    %s328 = sor.u32 256, 120
    %329 = vbcast.lane.b32.xlu0 %v267, %s328
    %v330 = vpop.permute.xlu0 %329
    %v331 = vlaneseq
    %v332 = vshrl.u32 %v331, 7
    %v333 = vsub.s32 3, %v332
    %v334 = vrot.slane %v125, %v333
    %336 = vbcast.lane.b32.xlu0 %v334, 256
    %v337 = vpop.permute.xlu0 %336
    %s339 = sor.u32 256, 8
    %340 = vbcast.lane.b32.xlu0 %v334, %s339
    %v341 = vpop.permute.xlu0 %340
    %s343 = sor.u32 256, 16
    %344 = vbcast.lane.b32.xlu0 %v334, %s343
    %v345 = vpop.permute.xlu0 %344
    %s347 = sor.u32 256, 24
    %348 = vbcast.lane.b32.xlu0 %v334, %s347
    %v349 = vpop.permute.xlu0 %348
    %s351 = sor.u32 256, 32
    %352 = vbcast.lane.b32.xlu0 %v334, %s351
    %v353 = vpop.permute.xlu0 %352
    %s355 = sor.u32 256, 40
    %356 = vbcast.lane.b32.xlu0 %v334, %s355
    %v357 = vpop.permute.xlu0 %356
    %s359 = sor.u32 256, 48
    %360 = vbcast.lane.b32.xlu0 %v334, %s359
    %v361 = vpop.permute.xlu0 %360
    %s363 = sor.u32 256, 56
    %364 = vbcast.lane.b32.xlu0 %v334, %s363
    %v365 = vpop.permute.xlu0 %364
    %s367 = sor.u32 256, 64
    %368 = vbcast.lane.b32.xlu0 %v334, %s367
    %v369 = vpop.permute.xlu0 %368
    %s371 = sor.u32 256, 72
    %372 = vbcast.lane.b32.xlu0 %v334, %s371
    %v373 = vpop.permute.xlu0 %372
    %s375 = sor.u32 256, 80
    %376 = vbcast.lane.b32.xlu0 %v334, %s375
    %v377 = vpop.permute.xlu0 %376
    %s379 = sor.u32 256, 88
    %380 = vbcast.lane.b32.xlu0 %v334, %s379
    %v381 = vpop.permute.xlu0 %380
    %s383 = sor.u32 256, 96
    %384 = vbcast.lane.b32.xlu0 %v334, %s383
    %v385 = vpop.permute.xlu0 %384
    %s387 = sor.u32 256, 104
    %388 = vbcast.lane.b32.xlu0 %v334, %s387
    %v389 = vpop.permute.xlu0 %388
    %s391 = sor.u32 256, 112
    %392 = vbcast.lane.b32.xlu0 %v334, %s391
    %v393 = vpop.permute.xlu0 %392
    %s395 = sor.u32 256, 120
    %396 = vbcast.lane.b32.xlu0 %v334, %s395
    %v397 = vpop.permute.xlu0 %396
    %v398 = vlaneseq
    %v399 = vshrl.u32 %v398, 7
    %v400 = vsub.s32 4, %v399
    %v401 = vrot.slane %v125, %v400
    %403 = vbcast.lane.b32.xlu0 %v401, 256
    %v404 = vpop.permute.xlu0 %403
    %s406 = sor.u32 256, 8
    %407 = vbcast.lane.b32.xlu0 %v401, %s406
    %v408 = vpop.permute.xlu0 %407
    %s410 = sor.u32 256, 16
    %411 = vbcast.lane.b32.xlu0 %v401, %s410
    %v412 = vpop.permute.xlu0 %411
    %s414 = sor.u32 256, 24
    %415 = vbcast.lane.b32.xlu0 %v401, %s414
    %v416 = vpop.permute.xlu0 %415
    %s418 = sor.u32 256, 32
    %419 = vbcast.lane.b32.xlu0 %v401, %s418
    %v420 = vpop.permute.xlu0 %419
    %s422 = sor.u32 256, 40
    %423 = vbcast.lane.b32.xlu0 %v401, %s422
    %v424 = vpop.permute.xlu0 %423
    %s426 = sor.u32 256, 48
    %427 = vbcast.lane.b32.xlu0 %v401, %s426
    %v428 = vpop.permute.xlu0 %427
    %s430 = sor.u32 256, 56
    %431 = vbcast.lane.b32.xlu0 %v401, %s430
    %v432 = vpop.permute.xlu0 %431
    %s434 = sor.u32 256, 64
    %435 = vbcast.lane.b32.xlu0 %v401, %s434
    %v436 = vpop.permute.xlu0 %435
    %s438 = sor.u32 256, 72
    %439 = vbcast.lane.b32.xlu0 %v401, %s438
    %v440 = vpop.permute.xlu0 %439
    %s442 = sor.u32 256, 80
    %443 = vbcast.lane.b32.xlu0 %v401, %s442
    %v444 = vpop.permute.xlu0 %443
    %s446 = sor.u32 256, 88
    %447 = vbcast.lane.b32.xlu0 %v401, %s446
    %v448 = vpop.permute.xlu0 %447
    %s450 = sor.u32 256, 96
    %451 = vbcast.lane.b32.xlu0 %v401, %s450
    %v452 = vpop.permute.xlu0 %451
    %s454 = sor.u32 256, 104
    %455 = vbcast.lane.b32.xlu0 %v401, %s454
    %v456 = vpop.permute.xlu0 %455
    %s458 = sor.u32 256, 112
    %459 = vbcast.lane.b32.xlu0 %v401, %s458
    %v460 = vpop.permute.xlu0 %459
    %s462 = sor.u32 256, 120
    %463 = vbcast.lane.b32.xlu0 %v401, %s462
    %v464 = vpop.permute.xlu0 %463
    %v465 = vlaneseq
    %v466 = vshrl.u32 %v465, 7
    %v467 = vsub.s32 5, %v466
    %v468 = vrot.slane %v125, %v467
    %470 = vbcast.lane.b32.xlu0 %v468, 256
    %v471 = vpop.permute.xlu0 %470
    %s473 = sor.u32 256, 8
    %474 = vbcast.lane.b32.xlu0 %v468, %s473
    %v475 = vpop.permute.xlu0 %474
    %s477 = sor.u32 256, 16
    %478 = vbcast.lane.b32.xlu0 %v468, %s477
    %v479 = vpop.permute.xlu0 %478
    %s481 = sor.u32 256, 24
    %482 = vbcast.lane.b32.xlu0 %v468, %s481
    %v483 = vpop.permute.xlu0 %482
    %s485 = sor.u32 256, 32
    %486 = vbcast.lane.b32.xlu0 %v468, %s485
    %v487 = vpop.permute.xlu0 %486
    %s489 = sor.u32 256, 40
    %490 = vbcast.lane.b32.xlu0 %v468, %s489
    %v491 = vpop.permute.xlu0 %490
    %s493 = sor.u32 256, 48
    %494 = vbcast.lane.b32.xlu0 %v468, %s493
    %v495 = vpop.permute.xlu0 %494
    %s497 = sor.u32 256, 56
    %498 = vbcast.lane.b32.xlu0 %v468, %s497
    %v499 = vpop.permute.xlu0 %498
    %s501 = sor.u32 256, 64
    %502 = vbcast.lane.b32.xlu0 %v468, %s501
    %v503 = vpop.permute.xlu0 %502
    %s505 = sor.u32 256, 72
    %506 = vbcast.lane.b32.xlu0 %v468, %s505
    %v507 = vpop.permute.xlu0 %506
    %s509 = sor.u32 256, 80
    %510 = vbcast.lane.b32.xlu0 %v468, %s509
    %v511 = vpop.permute.xlu0 %510
    %s513 = sor.u32 256, 88
    %514 = vbcast.lane.b32.xlu0 %v468, %s513
    %v515 = vpop.permute.xlu0 %514
    %s517 = sor.u32 256, 96
    %518 = vbcast.lane.b32.xlu0 %v468, %s517
    %v519 = vpop.permute.xlu0 %518
    %s521 = sor.u32 256, 104
    %522 = vbcast.lane.b32.xlu0 %v468, %s521
    %v523 = vpop.permute.xlu0 %522
    %s525 = sor.u32 256, 112
    %526 = vbcast.lane.b32.xlu0 %v468, %s525
    %v527 = vpop.permute.xlu0 %526
    %s529 = sor.u32 256, 120
    %530 = vbcast.lane.b32.xlu0 %v468, %s529
    %v531 = vpop.permute.xlu0 %530
    %v532 = vlaneseq
    %v533 = vshrl.u32 %v532, 7
    %v534 = vsub.s32 6, %v533
    %v535 = vrot.slane %v125, %v534
    %537 = vbcast.lane.b32.xlu0 %v535, 256
    %v538 = vpop.permute.xlu0 %537
    %s540 = sor.u32 256, 8
    %541 = vbcast.lane.b32.xlu0 %v535, %s540
    %v542 = vpop.permute.xlu0 %541
    %s544 = sor.u32 256, 16
    %545 = vbcast.lane.b32.xlu0 %v535, %s544
    %v546 = vpop.permute.xlu0 %545
    %s548 = sor.u32 256, 24
    %549 = vbcast.lane.b32.xlu0 %v535, %s548
    %v550 = vpop.permute.xlu0 %549
    %s552 = sor.u32 256, 32
    %553 = vbcast.lane.b32.xlu0 %v535, %s552
    %v554 = vpop.permute.xlu0 %553
    %s556 = sor.u32 256, 40
    %557 = vbcast.lane.b32.xlu0 %v535, %s556
    %v558 = vpop.permute.xlu0 %557
    %s560 = sor.u32 256, 48
    %561 = vbcast.lane.b32.xlu0 %v535, %s560
    %v562 = vpop.permute.xlu0 %561
    %s564 = sor.u32 256, 56
    %565 = vbcast.lane.b32.xlu0 %v535, %s564
    %v566 = vpop.permute.xlu0 %565
    %s568 = sor.u32 256, 64
    %569 = vbcast.lane.b32.xlu0 %v535, %s568
    %v570 = vpop.permute.xlu0 %569
    %s572 = sor.u32 256, 72
    %573 = vbcast.lane.b32.xlu0 %v535, %s572
    %v574 = vpop.permute.xlu0 %573
    %s576 = sor.u32 256, 80
    %577 = vbcast.lane.b32.xlu0 %v535, %s576
    %v578 = vpop.permute.xlu0 %577
    %s580 = sor.u32 256, 88
    %581 = vbcast.lane.b32.xlu0 %v535, %s580
    %v582 = vpop.permute.xlu0 %581
    %s584 = sor.u32 256, 96
    %585 = vbcast.lane.b32.xlu0 %v535, %s584
    %v586 = vpop.permute.xlu0 %585
    %s588 = sor.u32 256, 104
    %589 = vbcast.lane.b32.xlu0 %v535, %s588
    %v590 = vpop.permute.xlu0 %589
    %s592 = sor.u32 256, 112
    %593 = vbcast.lane.b32.xlu0 %v535, %s592
    %v594 = vpop.permute.xlu0 %593
    %s596 = sor.u32 256, 120
    %597 = vbcast.lane.b32.xlu0 %v535, %s596
    %v598 = vpop.permute.xlu0 %597
    %v599 = vlaneseq
    %v600 = vshrl.u32 %v599, 7
    %v601 = vsub.s32 7, %v600
    %v602 = vrot.slane %v125, %v601
    %604 = vbcast.lane.b32.xlu0 %v602, 256
    %v605 = vpop.permute.xlu0 %604
    %s607 = sor.u32 256, 8
    %608 = vbcast.lane.b32.xlu0 %v602, %s607
    %v609 = vpop.permute.xlu0 %608
    %s611 = sor.u32 256, 16
    %612 = vbcast.lane.b32.xlu0 %v602, %s611
    %v613 = vpop.permute.xlu0 %612
    %s615 = sor.u32 256, 24
    %616 = vbcast.lane.b32.xlu0 %v602, %s615
    %v617 = vpop.permute.xlu0 %616
    %s619 = sor.u32 256, 32
    %620 = vbcast.lane.b32.xlu0 %v602, %s619
    %v621 = vpop.permute.xlu0 %620
    %s623 = sor.u32 256, 40
    %624 = vbcast.lane.b32.xlu0 %v602, %s623
    %v625 = vpop.permute.xlu0 %624
    %s627 = sor.u32 256, 48
    %628 = vbcast.lane.b32.xlu0 %v602, %s627
    %v629 = vpop.permute.xlu0 %628
    %s631 = sor.u32 256, 56
    %632 = vbcast.lane.b32.xlu0 %v602, %s631
    %v633 = vpop.permute.xlu0 %632
    %s635 = sor.u32 256, 64
    %636 = vbcast.lane.b32.xlu0 %v602, %s635
    %v637 = vpop.permute.xlu0 %636
    %s639 = sor.u32 256, 72
    %640 = vbcast.lane.b32.xlu0 %v602, %s639
    %v641 = vpop.permute.xlu0 %640
    %s643 = sor.u32 256, 80
    %644 = vbcast.lane.b32.xlu0 %v602, %s643
    %v645 = vpop.permute.xlu0 %644
    %s647 = sor.u32 256, 88
    %648 = vbcast.lane.b32.xlu0 %v602, %s647
    %v649 = vpop.permute.xlu0 %648
    %s651 = sor.u32 256, 96
    %652 = vbcast.lane.b32.xlu0 %v602, %s651
    %v653 = vpop.permute.xlu0 %652
    %s655 = sor.u32 256, 104
    %656 = vbcast.lane.b32.xlu0 %v602, %s655
    %v657 = vpop.permute.xlu0 %656
    %s659 = sor.u32 256, 112
    %660 = vbcast.lane.b32.xlu0 %v602, %s659
    %v661 = vpop.permute.xlu0 %660
    %s663 = sor.u32 256, 120
    %664 = vbcast.lane.b32.xlu0 %v602, %s663
    %v665 = vpop.permute.xlu0 %664
    %vm666 = vcmp.eq.s32.totalorder %v136, %v129
    %vm667 = vcmp.eq.s32.totalorder %v140, %v129
    %vm668 = vcmp.eq.s32.totalorder %v144, %v129
    %vm669 = vcmp.eq.s32.totalorder %v148, %v129
    %vm670 = vcmp.eq.s32.totalorder %v152, %v129
    %vm671 = vcmp.eq.s32.totalorder %v156, %v129
    %vm672 = vcmp.eq.s32.totalorder %v160, %v129
    %vm673 = vcmp.eq.s32.totalorder %v164, %v129
    %vm674 = vcmp.eq.s32.totalorder %v168, %v129
    %vm675 = vcmp.eq.s32.totalorder %v172, %v129
    %vm676 = vcmp.eq.s32.totalorder %v176, %v129
    %vm677 = vcmp.eq.s32.totalorder %v180, %v129
    %vm678 = vcmp.eq.s32.totalorder %v184, %v129
    %vm679 = vcmp.eq.s32.totalorder %v188, %v129
    %vm680 = vcmp.eq.s32.totalorder %v192, %v129
    %vm681 = vcmp.eq.s32.totalorder %v196, %v129
    %vm682 = vcmp.eq.s32.totalorder %v203, %v129
    %vm683 = vcmp.eq.s32.totalorder %v207, %v129
    %vm684 = vcmp.eq.s32.totalorder %v211, %v129
    %vm685 = vcmp.eq.s32.totalorder %v215, %v129
    %vm686 = vcmp.eq.s32.totalorder %v219, %v129
    %vm687 = vcmp.eq.s32.totalorder %v223, %v129
    %vm688 = vcmp.eq.s32.totalorder %v227, %v129
    %vm689 = vcmp.eq.s32.totalorder %v231, %v129
    %vm690 = vcmp.eq.s32.totalorder %v235, %v129
    %vm691 = vcmp.eq.s32.totalorder %v239, %v129
    %vm692 = vcmp.eq.s32.totalorder %v243, %v129
    %vm693 = vcmp.eq.s32.totalorder %v247, %v129
    %vm694 = vcmp.eq.s32.totalorder %v251, %v129
    %vm695 = vcmp.eq.s32.totalorder %v255, %v129
    %vm696 = vcmp.eq.s32.totalorder %v259, %v129
    %vm697 = vcmp.eq.s32.totalorder %v263, %v129
    %vm698 = vcmp.eq.s32.totalorder %v270, %v129
    %vm699 = vcmp.eq.s32.totalorder %v274, %v129
    %vm700 = vcmp.eq.s32.totalorder %v278, %v129
    %vm701 = vcmp.eq.s32.totalorder %v282, %v129
    %vm702 = vcmp.eq.s32.totalorder %v286, %v129
    %vm703 = vcmp.eq.s32.totalorder %v290, %v129
    %vm704 = vcmp.eq.s32.totalorder %v294, %v129
    %vm705 = vcmp.eq.s32.totalorder %v298, %v129
    %vm706 = vcmp.eq.s32.totalorder %v302, %v129
    %vm707 = vcmp.eq.s32.totalorder %v306, %v129
    %vm708 = vcmp.eq.s32.totalorder %v310, %v129
    %vm709 = vcmp.eq.s32.totalorder %v314, %v129
    %vm710 = vcmp.eq.s32.totalorder %v318, %v129
    %vm711 = vcmp.eq.s32.totalorder %v322, %v129
    %vm712 = vcmp.eq.s32.totalorder %v326, %v129
    %vm713 = vcmp.eq.s32.totalorder %v330, %v129
    %vm714 = vcmp.eq.s32.totalorder %v337, %v129
    %vm715 = vcmp.eq.s32.totalorder %v341, %v129
    %vm716 = vcmp.eq.s32.totalorder %v345, %v129
    %vm717 = vcmp.eq.s32.totalorder %v349, %v129
    %vm718 = vcmp.eq.s32.totalorder %v353, %v129
    %vm719 = vcmp.eq.s32.totalorder %v357, %v129
    %vm720 = vcmp.eq.s32.totalorder %v361, %v129
    %vm721 = vcmp.eq.s32.totalorder %v365, %v129
    %vm722 = vcmp.eq.s32.totalorder %v369, %v129
    %vm723 = vcmp.eq.s32.totalorder %v373, %v129
    %vm724 = vcmp.eq.s32.totalorder %v377, %v129
    %vm725 = vcmp.eq.s32.totalorder %v381, %v129
    %vm726 = vcmp.eq.s32.totalorder %v385, %v129
    %vm727 = vcmp.eq.s32.totalorder %v389, %v129
    %vm728 = vcmp.eq.s32.totalorder %v393, %v129
    %vm729 = vcmp.eq.s32.totalorder %v397, %v129
    %vm730 = vcmp.eq.s32.totalorder %v404, %v129
    %vm731 = vcmp.eq.s32.totalorder %v408, %v129
    %vm732 = vcmp.eq.s32.totalorder %v412, %v129
    %vm733 = vcmp.eq.s32.totalorder %v416, %v129
    %vm734 = vcmp.eq.s32.totalorder %v420, %v129
    %vm735 = vcmp.eq.s32.totalorder %v424, %v129
    %vm736 = vcmp.eq.s32.totalorder %v428, %v129
    %vm737 = vcmp.eq.s32.totalorder %v432, %v129
    %vm738 = vcmp.eq.s32.totalorder %v436, %v129
    %vm739 = vcmp.eq.s32.totalorder %v440, %v129
    %vm740 = vcmp.eq.s32.totalorder %v444, %v129
    %vm741 = vcmp.eq.s32.totalorder %v448, %v129
    %vm742 = vcmp.eq.s32.totalorder %v452, %v129
    %vm743 = vcmp.eq.s32.totalorder %v456, %v129
    %vm744 = vcmp.eq.s32.totalorder %v460, %v129
    %vm745 = vcmp.eq.s32.totalorder %v464, %v129
    %vm746 = vcmp.eq.s32.totalorder %v471, %v129
    %vm747 = vcmp.eq.s32.totalorder %v475, %v129
    %vm748 = vcmp.eq.s32.totalorder %v479, %v129
    %vm749 = vcmp.eq.s32.totalorder %v483, %v129
    %vm750 = vcmp.eq.s32.totalorder %v487, %v129
    %vm751 = vcmp.eq.s32.totalorder %v491, %v129
    %vm752 = vcmp.eq.s32.totalorder %v495, %v129
    %vm753 = vcmp.eq.s32.totalorder %v499, %v129
    %vm754 = vcmp.eq.s32.totalorder %v503, %v129
    %vm755 = vcmp.eq.s32.totalorder %v507, %v129
    %vm756 = vcmp.eq.s32.totalorder %v511, %v129
    %vm757 = vcmp.eq.s32.totalorder %v515, %v129
    %vm758 = vcmp.eq.s32.totalorder %v519, %v129
    %vm759 = vcmp.eq.s32.totalorder %v523, %v129
    %vm760 = vcmp.eq.s32.totalorder %v527, %v129
    %vm761 = vcmp.eq.s32.totalorder %v531, %v129
    %vm762 = vcmp.eq.s32.totalorder %v538, %v129
    %vm763 = vcmp.eq.s32.totalorder %v542, %v129
    %vm764 = vcmp.eq.s32.totalorder %v546, %v129
    %vm765 = vcmp.eq.s32.totalorder %v550, %v129
    %vm766 = vcmp.eq.s32.totalorder %v554, %v129
    %vm767 = vcmp.eq.s32.totalorder %v558, %v129
    %vm768 = vcmp.eq.s32.totalorder %v562, %v129
    %vm769 = vcmp.eq.s32.totalorder %v566, %v129
    %vm770 = vcmp.eq.s32.totalorder %v570, %v129
    %vm771 = vcmp.eq.s32.totalorder %v574, %v129
    %vm772 = vcmp.eq.s32.totalorder %v578, %v129
    %vm773 = vcmp.eq.s32.totalorder %v582, %v129
    %vm774 = vcmp.eq.s32.totalorder %v586, %v129
    %vm775 = vcmp.eq.s32.totalorder %v590, %v129
    %vm776 = vcmp.eq.s32.totalorder %v594, %v129
    %vm777 = vcmp.eq.s32.totalorder %v598, %v129
    %vm778 = vcmp.eq.s32.totalorder %v605, %v129
    %vm779 = vcmp.eq.s32.totalorder %v609, %v129
    %vm780 = vcmp.eq.s32.totalorder %v613, %v129
    %vm781 = vcmp.eq.s32.totalorder %v617, %v129
    %vm782 = vcmp.eq.s32.totalorder %v621, %v129
    %vm783 = vcmp.eq.s32.totalorder %v625, %v129
    %vm784 = vcmp.eq.s32.totalorder %v629, %v129
    %vm785 = vcmp.eq.s32.totalorder %v633, %v129
    %vm786 = vcmp.eq.s32.totalorder %v637, %v129
    %vm787 = vcmp.eq.s32.totalorder %v641, %v129
    %vm788 = vcmp.eq.s32.totalorder %v645, %v129
    %vm789 = vcmp.eq.s32.totalorder %v649, %v129
    %vm790 = vcmp.eq.s32.totalorder %v653, %v129
    %vm791 = vcmp.eq.s32.totalorder %v657, %v129
    %vm792 = vcmp.eq.s32.totalorder %v661, %v129
    %vm793 = vcmp.eq.s32.totalorder %v665, %v129
    %v794 = vsel %vm666, 1, 0
    %v795 = vsel %vm667, 1, 0
    %v796 = vsel %vm668, 1, 0
    %v797 = vsel %vm669, 1, 0
    %v798 = vsel %vm670, 1, 0
    %v799 = vsel %vm671, 1, 0
    %v800 = vsel %vm672, 1, 0
    %v801 = vsel %vm673, 1, 0
    %v802 = vsel %vm674, 1, 0
    %v803 = vsel %vm675, 1, 0
    %v804 = vsel %vm676, 1, 0
    %v805 = vsel %vm677, 1, 0
    %v806 = vsel %vm678, 1, 0
    %v807 = vsel %vm679, 1, 0
    %v808 = vsel %vm680, 1, 0
    %v809 = vsel %vm681, 1, 0
    %v810 = vsel %vm682, 1, 0
    %v811 = vsel %vm683, 1, 0
    %v812 = vsel %vm684, 1, 0
    %v813 = vsel %vm685, 1, 0
    %v814 = vsel %vm686, 1, 0
    %v815 = vsel %vm687, 1, 0
    %v816 = vsel %vm688, 1, 0
    %v817 = vsel %vm689, 1, 0
    %v818 = vsel %vm690, 1, 0
    %v819 = vsel %vm691, 1, 0
    %v820 = vsel %vm692, 1, 0
    %v821 = vsel %vm693, 1, 0
    %v822 = vsel %vm694, 1, 0
    %v823 = vsel %vm695, 1, 0
    %v824 = vsel %vm696, 1, 0
    %v825 = vsel %vm697, 1, 0
    %v826 = vsel %vm698, 1, 0
    %v827 = vsel %vm699, 1, 0
    %v828 = vsel %vm700, 1, 0
    %v829 = vsel %vm701, 1, 0
    %v830 = vsel %vm702, 1, 0
    %v831 = vsel %vm703, 1, 0
    %v832 = vsel %vm704, 1, 0
    %v833 = vsel %vm705, 1, 0
    %v834 = vsel %vm706, 1, 0
    %v835 = vsel %vm707, 1, 0
    %v836 = vsel %vm708, 1, 0
    %v837 = vsel %vm709, 1, 0
    %v838 = vsel %vm710, 1, 0
    %v839 = vsel %vm711, 1, 0
    %v840 = vsel %vm712, 1, 0
    %v841 = vsel %vm713, 1, 0
    %v842 = vsel %vm714, 1, 0
    %v843 = vsel %vm715, 1, 0
    %v844 = vsel %vm716, 1, 0
    %v845 = vsel %vm717, 1, 0
    %v846 = vsel %vm718, 1, 0
    %v847 = vsel %vm719, 1, 0
    %v848 = vsel %vm720, 1, 0
    %v849 = vsel %vm721, 1, 0
    %v850 = vsel %vm722, 1, 0
    %v851 = vsel %vm723, 1, 0
    %v852 = vsel %vm724, 1, 0
    %v853 = vsel %vm725, 1, 0
    %v854 = vsel %vm726, 1, 0
    %v855 = vsel %vm727, 1, 0
    %v856 = vsel %vm728, 1, 0
    %v857 = vsel %vm729, 1, 0
    %v858 = vsel %vm730, 1, 0
    %v859 = vsel %vm731, 1, 0
    %v860 = vsel %vm732, 1, 0
    %v861 = vsel %vm733, 1, 0
    %v862 = vsel %vm734, 1, 0
    %v863 = vsel %vm735, 1, 0
    %v864 = vsel %vm736, 1, 0
    %v865 = vsel %vm737, 1, 0
    %v866 = vsel %vm738, 1, 0
    %v867 = vsel %vm739, 1, 0
    %v868 = vsel %vm740, 1, 0
    %v869 = vsel %vm741, 1, 0
    %v870 = vsel %vm742, 1, 0
    %v871 = vsel %vm743, 1, 0
    %v872 = vsel %vm744, 1, 0
    %v873 = vsel %vm745, 1, 0
    %v874 = vsel %vm746, 1, 0
    %v875 = vsel %vm747, 1, 0
    %v876 = vsel %vm748, 1, 0
    %v877 = vsel %vm749, 1, 0
    %v878 = vsel %vm750, 1, 0
    %v879 = vsel %vm751, 1, 0
    %v880 = vsel %vm752, 1, 0
    %v881 = vsel %vm753, 1, 0
    %v882 = vsel %vm754, 1, 0
    %v883 = vsel %vm755, 1, 0
    %v884 = vsel %vm756, 1, 0
    %v885 = vsel %vm757, 1, 0
    %v886 = vsel %vm758, 1, 0
    %v887 = vsel %vm759, 1, 0
    %v888 = vsel %vm760, 1, 0
    %v889 = vsel %vm761, 1, 0
    %v890 = vsel %vm762, 1, 0
    %v891 = vsel %vm763, 1, 0
    %v892 = vsel %vm764, 1, 0
    %v893 = vsel %vm765, 1, 0
    %v894 = vsel %vm766, 1, 0
    %v895 = vsel %vm767, 1, 0
    %v896 = vsel %vm768, 1, 0
    %v897 = vsel %vm769, 1, 0
    %v898 = vsel %vm770, 1, 0
    %v899 = vsel %vm771, 1, 0
    %v900 = vsel %vm772, 1, 0
    %v901 = vsel %vm773, 1, 0
    %v902 = vsel %vm774, 1, 0
    %v903 = vsel %vm775, 1, 0
    %v904 = vsel %vm776, 1, 0
    %v905 = vsel %vm777, 1, 0
    %v906 = vsel %vm778, 1, 0
    %v907 = vsel %vm779, 1, 0
    %v908 = vsel %vm780, 1, 0
    %v909 = vsel %vm781, 1, 0
    %v910 = vsel %vm782, 1, 0
    %v911 = vsel %vm783, 1, 0
    %v912 = vsel %vm784, 1, 0
    %v913 = vsel %vm785, 1, 0
    %v914 = vsel %vm786, 1, 0
    %v915 = vsel %vm787, 1, 0
    %v916 = vsel %vm788, 1, 0
    %v917 = vsel %vm789, 1, 0
    %v918 = vsel %vm790, 1, 0
    %v919 = vsel %vm791, 1, 0
    %v920 = vsel %vm792, 1, 0
    %v921 = vsel %vm793, 1, 0
    %v922 = vcvt.s32.f32 %v794
    %v923 = vcvt.s32.f32 %v795
    %v924 = vcvt.s32.f32 %v796
    %v925 = vcvt.s32.f32 %v797
    %v926 = vcvt.s32.f32 %v798
    %v927 = vcvt.s32.f32 %v799
    %v928 = vcvt.s32.f32 %v800
    %v929 = vcvt.s32.f32 %v801
    %v930 = vcvt.s32.f32 %v802
    %v931 = vcvt.s32.f32 %v803
    %v932 = vcvt.s32.f32 %v804
    %v933 = vcvt.s32.f32 %v805
    %v934 = vcvt.s32.f32 %v806
    %v935 = vcvt.s32.f32 %v807
    %v936 = vcvt.s32.f32 %v808
    %v937 = vcvt.s32.f32 %v809
    %v938 = vcvt.s32.f32 %v810
    %v939 = vcvt.s32.f32 %v811
    %v940 = vcvt.s32.f32 %v812
    %v941 = vcvt.s32.f32 %v813
    %v942 = vcvt.s32.f32 %v814
    %v943 = vcvt.s32.f32 %v815
    %v944 = vcvt.s32.f32 %v816
    %v945 = vcvt.s32.f32 %v817
    %v946 = vcvt.s32.f32 %v818
    %v947 = vcvt.s32.f32 %v819
    %v948 = vcvt.s32.f32 %v820
    %v949 = vcvt.s32.f32 %v821
    %v950 = vcvt.s32.f32 %v822
    %v951 = vcvt.s32.f32 %v823
    %v952 = vcvt.s32.f32 %v824
    %v953 = vcvt.s32.f32 %v825
    %v954 = vcvt.s32.f32 %v826
    %v955 = vcvt.s32.f32 %v827
    %v956 = vcvt.s32.f32 %v828
    %v957 = vcvt.s32.f32 %v829
    %v958 = vcvt.s32.f32 %v830
    %v959 = vcvt.s32.f32 %v831
    %v960 = vcvt.s32.f32 %v832
    %v961 = vcvt.s32.f32 %v833
    %v962 = vcvt.s32.f32 %v834
    %v963 = vcvt.s32.f32 %v835
    %v964 = vcvt.s32.f32 %v836
    %v965 = vcvt.s32.f32 %v837
    %v966 = vcvt.s32.f32 %v838
    %v967 = vcvt.s32.f32 %v839
    %v968 = vcvt.s32.f32 %v840
    %v969 = vcvt.s32.f32 %v841
    %v970 = vcvt.s32.f32 %v842
    %v971 = vcvt.s32.f32 %v843
    %v972 = vcvt.s32.f32 %v844
    %v973 = vcvt.s32.f32 %v845
    %v974 = vcvt.s32.f32 %v846
    %v975 = vcvt.s32.f32 %v847
    %v976 = vcvt.s32.f32 %v848
    %v977 = vcvt.s32.f32 %v849
    %v978 = vcvt.s32.f32 %v850
    %v979 = vcvt.s32.f32 %v851
    %v980 = vcvt.s32.f32 %v852
    %v981 = vcvt.s32.f32 %v853
    %v982 = vcvt.s32.f32 %v854
    %v983 = vcvt.s32.f32 %v855
    %v984 = vcvt.s32.f32 %v856
    %v985 = vcvt.s32.f32 %v857
    %v986 = vcvt.s32.f32 %v858
    %v987 = vcvt.s32.f32 %v859
    %v988 = vcvt.s32.f32 %v860
    %v989 = vcvt.s32.f32 %v861
    %v990 = vcvt.s32.f32 %v862
    %v991 = vcvt.s32.f32 %v863
    %v992 = vcvt.s32.f32 %v864
    %v993 = vcvt.s32.f32 %v865
    %v994 = vcvt.s32.f32 %v866
    %v995 = vcvt.s32.f32 %v867
    %v996 = vcvt.s32.f32 %v868
    %v997 = vcvt.s32.f32 %v869
    %v998 = vcvt.s32.f32 %v870
    %v999 = vcvt.s32.f32 %v871
    %v1000 = vcvt.s32.f32 %v872
    %v1001 = vcvt.s32.f32 %v873
    %v1002 = vcvt.s32.f32 %v874
    %v1003 = vcvt.s32.f32 %v875
    %v1004 = vcvt.s32.f32 %v876
    %v1005 = vcvt.s32.f32 %v877
    %v1006 = vcvt.s32.f32 %v878
    %v1007 = vcvt.s32.f32 %v879
    %v1008 = vcvt.s32.f32 %v880
    %v1009 = vcvt.s32.f32 %v881
    %v1010 = vcvt.s32.f32 %v882
    %v1011 = vcvt.s32.f32 %v883
    %v1012 = vcvt.s32.f32 %v884
    %v1013 = vcvt.s32.f32 %v885
    %v1014 = vcvt.s32.f32 %v886
    %v1015 = vcvt.s32.f32 %v887
    %v1016 = vcvt.s32.f32 %v888
    %v1017 = vcvt.s32.f32 %v889
    %v1018 = vcvt.s32.f32 %v890
    %v1019 = vcvt.s32.f32 %v891
    %v1020 = vcvt.s32.f32 %v892
    %v1021 = vcvt.s32.f32 %v893
    %v1022 = vcvt.s32.f32 %v894
    %v1023 = vcvt.s32.f32 %v895
    %v1024 = vcvt.s32.f32 %v896
    %v1025 = vcvt.s32.f32 %v897
    %v1026 = vcvt.s32.f32 %v898
    %v1027 = vcvt.s32.f32 %v899
    %v1028 = vcvt.s32.f32 %v900
    %v1029 = vcvt.s32.f32 %v901
    %v1030 = vcvt.s32.f32 %v902
    %v1031 = vcvt.s32.f32 %v903
    %v1032 = vcvt.s32.f32 %v904
    %v1033 = vcvt.s32.f32 %v905
    %v1034 = vcvt.s32.f32 %v906
    %v1035 = vcvt.s32.f32 %v907
    %v1036 = vcvt.s32.f32 %v908
    %v1037 = vcvt.s32.f32 %v909
    %v1038 = vcvt.s32.f32 %v910
    %v1039 = vcvt.s32.f32 %v911
    %v1040 = vcvt.s32.f32 %v912
    %v1041 = vcvt.s32.f32 %v913
    %v1042 = vcvt.s32.f32 %v914
    %v1043 = vcvt.s32.f32 %v915
    %v1044 = vcvt.s32.f32 %v916
    %v1045 = vcvt.s32.f32 %v917
    %v1046 = vcvt.s32.f32 %v918
    %v1047 = vcvt.s32.f32 %v919
    %v1048 = vcvt.s32.f32 %v920
    %v1049 = vcvt.s32.f32 %v921
    %v1050 = vld [vmem:[#allocation2] sm:$0xff]
    %v1051 = vlaneseq
    %v1052 = vshrl.u32 %v1051, 7
    %v1053 = vsub.s32 0, %v1052
    %v1054 = vrot.slane %v127, %v1053
    %1056 = vbcast.lane.b32.xlu0 %v1054, 256
    %v1057 = vpop.permute.xlu0 %1056
    %s1059 = sor.u32 256, 8
    %1060 = vbcast.lane.b32.xlu0 %v1054, %s1059
    %v1061 = vpop.permute.xlu0 %1060
    %s1063 = sor.u32 256, 16
    %1064 = vbcast.lane.b32.xlu0 %v1054, %s1063
    %v1065 = vpop.permute.xlu0 %1064
    %s1067 = sor.u32 256, 24
    %1068 = vbcast.lane.b32.xlu0 %v1054, %s1067
    %v1069 = vpop.permute.xlu0 %1068
    %s1071 = sor.u32 256, 32
    %1072 = vbcast.lane.b32.xlu0 %v1054, %s1071
    %v1073 = vpop.permute.xlu0 %1072
    %s1075 = sor.u32 256, 40
    %1076 = vbcast.lane.b32.xlu0 %v1054, %s1075
    %v1077 = vpop.permute.xlu0 %1076
    %s1079 = sor.u32 256, 48
    %1080 = vbcast.lane.b32.xlu0 %v1054, %s1079
    %v1081 = vpop.permute.xlu0 %1080
    %s1083 = sor.u32 256, 56
    %1084 = vbcast.lane.b32.xlu0 %v1054, %s1083
    %v1085 = vpop.permute.xlu0 %1084
    %s1087 = sor.u32 256, 64
    %1088 = vbcast.lane.b32.xlu0 %v1054, %s1087
    %v1089 = vpop.permute.xlu0 %1088
    %s1091 = sor.u32 256, 72
    %1092 = vbcast.lane.b32.xlu0 %v1054, %s1091
    %v1093 = vpop.permute.xlu0 %1092
    %s1095 = sor.u32 256, 80
    %1096 = vbcast.lane.b32.xlu0 %v1054, %s1095
    %v1097 = vpop.permute.xlu0 %1096
    %s1099 = sor.u32 256, 88
    %1100 = vbcast.lane.b32.xlu0 %v1054, %s1099
    %v1101 = vpop.permute.xlu0 %1100
    %s1103 = sor.u32 256, 96
    %1104 = vbcast.lane.b32.xlu0 %v1054, %s1103
    %v1105 = vpop.permute.xlu0 %1104
    %s1107 = sor.u32 256, 104
    %1108 = vbcast.lane.b32.xlu0 %v1054, %s1107
    %v1109 = vpop.permute.xlu0 %1108
    %s1111 = sor.u32 256, 112
    %1112 = vbcast.lane.b32.xlu0 %v1054, %s1111
    %v1113 = vpop.permute.xlu0 %1112
    %s1115 = sor.u32 256, 120
    %1116 = vbcast.lane.b32.xlu0 %v1054, %s1115
    %v1117 = vpop.permute.xlu0 %1116
    %v1118 = vlaneseq
    %v1119 = vshrl.u32 %v1118, 7
    %v1120 = vsub.s32 1, %v1119
    %v1121 = vrot.slane %v127, %v1120
    %1123 = vbcast.lane.b32.xlu0 %v1121, 256
    %v1124 = vpop.permute.xlu0 %1123
    %s1126 = sor.u32 256, 8
    %1127 = vbcast.lane.b32.xlu0 %v1121, %s1126
    %v1128 = vpop.permute.xlu0 %1127
    %s1130 = sor.u32 256, 16
    %1131 = vbcast.lane.b32.xlu0 %v1121, %s1130
    %v1132 = vpop.permute.xlu0 %1131
    %s1134 = sor.u32 256, 24
    %1135 = vbcast.lane.b32.xlu0 %v1121, %s1134
    %v1136 = vpop.permute.xlu0 %1135
    %s1138 = sor.u32 256, 32
    %1139 = vbcast.lane.b32.xlu0 %v1121, %s1138
    %v1140 = vpop.permute.xlu0 %1139
    %s1142 = sor.u32 256, 40
    %1143 = vbcast.lane.b32.xlu0 %v1121, %s1142
    %v1144 = vpop.permute.xlu0 %1143
    %s1146 = sor.u32 256, 48
    %1147 = vbcast.lane.b32.xlu0 %v1121, %s1146
    %v1148 = vpop.permute.xlu0 %1147
    %s1150 = sor.u32 256, 56
    %1151 = vbcast.lane.b32.xlu0 %v1121, %s1150
    %v1152 = vpop.permute.xlu0 %1151
    %s1154 = sor.u32 256, 64
    %1155 = vbcast.lane.b32.xlu0 %v1121, %s1154
    %v1156 = vpop.permute.xlu0 %1155
    %s1158 = sor.u32 256, 72
    %1159 = vbcast.lane.b32.xlu0 %v1121, %s1158
    %v1160 = vpop.permute.xlu0 %1159
    %s1162 = sor.u32 256, 80
    %1163 = vbcast.lane.b32.xlu0 %v1121, %s1162
    %v1164 = vpop.permute.xlu0 %1163
    %s1166 = sor.u32 256, 88
    %1167 = vbcast.lane.b32.xlu0 %v1121, %s1166
    %v1168 = vpop.permute.xlu0 %1167
    %s1170 = sor.u32 256, 96
    %1171 = vbcast.lane.b32.xlu0 %v1121, %s1170
    %v1172 = vpop.permute.xlu0 %1171
    %s1174 = sor.u32 256, 104
    %1175 = vbcast.lane.b32.xlu0 %v1121, %s1174
    %v1176 = vpop.permute.xlu0 %1175
    %s1178 = sor.u32 256, 112
    %1179 = vbcast.lane.b32.xlu0 %v1121, %s1178
    %v1180 = vpop.permute.xlu0 %1179
    %s1182 = sor.u32 256, 120
    %1183 = vbcast.lane.b32.xlu0 %v1121, %s1182
    %v1184 = vpop.permute.xlu0 %1183
    %v1185 = vlaneseq
    %v1186 = vshrl.u32 %v1185, 7
    %v1187 = vsub.s32 2, %v1186
    %v1188 = vrot.slane %v127, %v1187
    %1190 = vbcast.lane.b32.xlu0 %v1188, 256
    %v1191 = vpop.permute.xlu0 %1190
    %s1193 = sor.u32 256, 8
    %1194 = vbcast.lane.b32.xlu0 %v1188, %s1193
    %v1195 = vpop.permute.xlu0 %1194
    %s1197 = sor.u32 256, 16
    %1198 = vbcast.lane.b32.xlu0 %v1188, %s1197
    %v1199 = vpop.permute.xlu0 %1198
    %s1201 = sor.u32 256, 24
    %1202 = vbcast.lane.b32.xlu0 %v1188, %s1201
    %v1203 = vpop.permute.xlu0 %1202
    %s1205 = sor.u32 256, 32
    %1206 = vbcast.lane.b32.xlu0 %v1188, %s1205
    %v1207 = vpop.permute.xlu0 %1206
    %s1209 = sor.u32 256, 40
    %1210 = vbcast.lane.b32.xlu0 %v1188, %s1209
    %v1211 = vpop.permute.xlu0 %1210
    %s1213 = sor.u32 256, 48
    %1214 = vbcast.lane.b32.xlu0 %v1188, %s1213
    %v1215 = vpop.permute.xlu0 %1214
    %s1217 = sor.u32 256, 56
    %1218 = vbcast.lane.b32.xlu0 %v1188, %s1217
    %v1219 = vpop.permute.xlu0 %1218
    %s1221 = sor.u32 256, 64
    %1222 = vbcast.lane.b32.xlu0 %v1188, %s1221
    %v1223 = vpop.permute.xlu0 %1222
    %s1225 = sor.u32 256, 72
    %1226 = vbcast.lane.b32.xlu0 %v1188, %s1225
    %v1227 = vpop.permute.xlu0 %1226
    %s1229 = sor.u32 256, 80
    %1230 = vbcast.lane.b32.xlu0 %v1188, %s1229
    %v1231 = vpop.permute.xlu0 %1230
    %s1233 = sor.u32 256, 88
    %1234 = vbcast.lane.b32.xlu0 %v1188, %s1233
    %v1235 = vpop.permute.xlu0 %1234
    %s1237 = sor.u32 256, 96
    %1238 = vbcast.lane.b32.xlu0 %v1188, %s1237
    %v1239 = vpop.permute.xlu0 %1238
    %s1241 = sor.u32 256, 104
    %1242 = vbcast.lane.b32.xlu0 %v1188, %s1241
    %v1243 = vpop.permute.xlu0 %1242
    %s1245 = sor.u32 256, 112
    %1246 = vbcast.lane.b32.xlu0 %v1188, %s1245
    %v1247 = vpop.permute.xlu0 %1246
    %s1249 = sor.u32 256, 120
    %1250 = vbcast.lane.b32.xlu0 %v1188, %s1249
    %v1251 = vpop.permute.xlu0 %1250
    %v1252 = vlaneseq
    %v1253 = vshrl.u32 %v1252, 7
    %v1254 = vsub.s32 3, %v1253
    %v1255 = vrot.slane %v127, %v1254
    %1257 = vbcast.lane.b32.xlu0 %v1255, 256
    %v1258 = vpop.permute.xlu0 %1257
    %s1260 = sor.u32 256, 8
    %1261 = vbcast.lane.b32.xlu0 %v1255, %s1260
    %v1262 = vpop.permute.xlu0 %1261
    %s1264 = sor.u32 256, 16
    %1265 = vbcast.lane.b32.xlu0 %v1255, %s1264
    %v1266 = vpop.permute.xlu0 %1265
    %s1268 = sor.u32 256, 24
    %1269 = vbcast.lane.b32.xlu0 %v1255, %s1268
    %v1270 = vpop.permute.xlu0 %1269
    %s1272 = sor.u32 256, 32
    %1273 = vbcast.lane.b32.xlu0 %v1255, %s1272
    %v1274 = vpop.permute.xlu0 %1273
    %s1276 = sor.u32 256, 40
    %1277 = vbcast.lane.b32.xlu0 %v1255, %s1276
    %v1278 = vpop.permute.xlu0 %1277
    %s1280 = sor.u32 256, 48
    %1281 = vbcast.lane.b32.xlu0 %v1255, %s1280
    %v1282 = vpop.permute.xlu0 %1281
    %s1284 = sor.u32 256, 56
    %1285 = vbcast.lane.b32.xlu0 %v1255, %s1284
    %v1286 = vpop.permute.xlu0 %1285
    %s1288 = sor.u32 256, 64
    %1289 = vbcast.lane.b32.xlu0 %v1255, %s1288
    %v1290 = vpop.permute.xlu0 %1289
    %s1292 = sor.u32 256, 72
    %1293 = vbcast.lane.b32.xlu0 %v1255, %s1292
    %v1294 = vpop.permute.xlu0 %1293
    %s1296 = sor.u32 256, 80
    %1297 = vbcast.lane.b32.xlu0 %v1255, %s1296
    %v1298 = vpop.permute.xlu0 %1297
    %s1300 = sor.u32 256, 88
    %1301 = vbcast.lane.b32.xlu0 %v1255, %s1300
    %v1302 = vpop.permute.xlu0 %1301
    %s1304 = sor.u32 256, 96
    %1305 = vbcast.lane.b32.xlu0 %v1255, %s1304
    %v1306 = vpop.permute.xlu0 %1305
    %s1308 = sor.u32 256, 104
    %1309 = vbcast.lane.b32.xlu0 %v1255, %s1308
    %v1310 = vpop.permute.xlu0 %1309
    %s1312 = sor.u32 256, 112
    %1313 = vbcast.lane.b32.xlu0 %v1255, %s1312
    %v1314 = vpop.permute.xlu0 %1313
    %s1316 = sor.u32 256, 120
    %1317 = vbcast.lane.b32.xlu0 %v1255, %s1316
    %v1318 = vpop.permute.xlu0 %1317
    %v1319 = vlaneseq
    %v1320 = vshrl.u32 %v1319, 7
    %v1321 = vsub.s32 4, %v1320
    %v1322 = vrot.slane %v127, %v1321
    %1324 = vbcast.lane.b32.xlu0 %v1322, 256
    %v1325 = vpop.permute.xlu0 %1324
    %s1327 = sor.u32 256, 8
    %1328 = vbcast.lane.b32.xlu0 %v1322, %s1327
    %v1329 = vpop.permute.xlu0 %1328
    %s1331 = sor.u32 256, 16
    %1332 = vbcast.lane.b32.xlu0 %v1322, %s1331
    %v1333 = vpop.permute.xlu0 %1332
    %s1335 = sor.u32 256, 24
    %1336 = vbcast.lane.b32.xlu0 %v1322, %s1335
    %v1337 = vpop.permute.xlu0 %1336
    %s1339 = sor.u32 256, 32
    %1340 = vbcast.lane.b32.xlu0 %v1322, %s1339
    %v1341 = vpop.permute.xlu0 %1340
    %s1343 = sor.u32 256, 40
    %1344 = vbcast.lane.b32.xlu0 %v1322, %s1343
    %v1345 = vpop.permute.xlu0 %1344
    %s1347 = sor.u32 256, 48
    %1348 = vbcast.lane.b32.xlu0 %v1322, %s1347
    %v1349 = vpop.permute.xlu0 %1348
    %s1351 = sor.u32 256, 56
    %1352 = vbcast.lane.b32.xlu0 %v1322, %s1351
    %v1353 = vpop.permute.xlu0 %1352
    %s1355 = sor.u32 256, 64
    %1356 = vbcast.lane.b32.xlu0 %v1322, %s1355
    %v1357 = vpop.permute.xlu0 %1356
    %s1359 = sor.u32 256, 72
    %1360 = vbcast.lane.b32.xlu0 %v1322, %s1359
    %v1361 = vpop.permute.xlu0 %1360
    %s1363 = sor.u32 256, 80
    %1364 = vbcast.lane.b32.xlu0 %v1322, %s1363
    %v1365 = vpop.permute.xlu0 %1364
    %s1367 = sor.u32 256, 88
    %1368 = vbcast.lane.b32.xlu0 %v1322, %s1367
    %v1369 = vpop.permute.xlu0 %1368
    %s1371 = sor.u32 256, 96
    %1372 = vbcast.lane.b32.xlu0 %v1322, %s1371
    %v1373 = vpop.permute.xlu0 %1372
    %s1375 = sor.u32 256, 104
    %1376 = vbcast.lane.b32.xlu0 %v1322, %s1375
    %v1377 = vpop.permute.xlu0 %1376
    %s1379 = sor.u32 256, 112
    %1380 = vbcast.lane.b32.xlu0 %v1322, %s1379
    %v1381 = vpop.permute.xlu0 %1380
    %s1383 = sor.u32 256, 120
    %1384 = vbcast.lane.b32.xlu0 %v1322, %s1383
    %v1385 = vpop.permute.xlu0 %1384
    %v1386 = vlaneseq
    %v1387 = vshrl.u32 %v1386, 7
    %v1388 = vsub.s32 5, %v1387
    %v1389 = vrot.slane %v127, %v1388
    %1391 = vbcast.lane.b32.xlu0 %v1389, 256
    %v1392 = vpop.permute.xlu0 %1391
    %s1394 = sor.u32 256, 8
    %1395 = vbcast.lane.b32.xlu0 %v1389, %s1394
    %v1396 = vpop.permute.xlu0 %1395
    %s1398 = sor.u32 256, 16
    %1399 = vbcast.lane.b32.xlu0 %v1389, %s1398
    %v1400 = vpop.permute.xlu0 %1399
    %s1402 = sor.u32 256, 24
    %1403 = vbcast.lane.b32.xlu0 %v1389, %s1402
    %v1404 = vpop.permute.xlu0 %1403
    %s1406 = sor.u32 256, 32
    %1407 = vbcast.lane.b32.xlu0 %v1389, %s1406
    %v1408 = vpop.permute.xlu0 %1407
    %s1410 = sor.u32 256, 40
    %1411 = vbcast.lane.b32.xlu0 %v1389, %s1410
    %v1412 = vpop.permute.xlu0 %1411
    %s1414 = sor.u32 256, 48
    %1415 = vbcast.lane.b32.xlu0 %v1389, %s1414
    %v1416 = vpop.permute.xlu0 %1415
    %s1418 = sor.u32 256, 56
    %1419 = vbcast.lane.b32.xlu0 %v1389, %s1418
    %v1420 = vpop.permute.xlu0 %1419
    %s1422 = sor.u32 256, 64
    %1423 = vbcast.lane.b32.xlu0 %v1389, %s1422
    %v1424 = vpop.permute.xlu0 %1423
    %s1426 = sor.u32 256, 72
    %1427 = vbcast.lane.b32.xlu0 %v1389, %s1426
    %v1428 = vpop.permute.xlu0 %1427
    %s1430 = sor.u32 256, 80
    %1431 = vbcast.lane.b32.xlu0 %v1389, %s1430
    %v1432 = vpop.permute.xlu0 %1431
    %s1434 = sor.u32 256, 88
    %1435 = vbcast.lane.b32.xlu0 %v1389, %s1434
    %v1436 = vpop.permute.xlu0 %1435
    %s1438 = sor.u32 256, 96
    %1439 = vbcast.lane.b32.xlu0 %v1389, %s1438
    %v1440 = vpop.permute.xlu0 %1439
    %s1442 = sor.u32 256, 104
    %1443 = vbcast.lane.b32.xlu0 %v1389, %s1442
    %v1444 = vpop.permute.xlu0 %1443
    %s1446 = sor.u32 256, 112
    %1447 = vbcast.lane.b32.xlu0 %v1389, %s1446
    %v1448 = vpop.permute.xlu0 %1447
    %s1450 = sor.u32 256, 120
    %1451 = vbcast.lane.b32.xlu0 %v1389, %s1450
    %v1452 = vpop.permute.xlu0 %1451
    %v1453 = vlaneseq
    %v1454 = vshrl.u32 %v1453, 7
    %v1455 = vsub.s32 6, %v1454
    %v1456 = vrot.slane %v127, %v1455
    %1458 = vbcast.lane.b32.xlu0 %v1456, 256
    %v1459 = vpop.permute.xlu0 %1458
    %s1461 = sor.u32 256, 8
    %1462 = vbcast.lane.b32.xlu0 %v1456, %s1461
    %v1463 = vpop.permute.xlu0 %1462
    %s1465 = sor.u32 256, 16
    %1466 = vbcast.lane.b32.xlu0 %v1456, %s1465
    %v1467 = vpop.permute.xlu0 %1466
    %s1469 = sor.u32 256, 24
    %1470 = vbcast.lane.b32.xlu0 %v1456, %s1469
    %v1471 = vpop.permute.xlu0 %1470
    %s1473 = sor.u32 256, 32
    %1474 = vbcast.lane.b32.xlu0 %v1456, %s1473
    %v1475 = vpop.permute.xlu0 %1474
    %s1477 = sor.u32 256, 40
    %1478 = vbcast.lane.b32.xlu0 %v1456, %s1477
    %v1479 = vpop.permute.xlu0 %1478
    %s1481 = sor.u32 256, 48
    %1482 = vbcast.lane.b32.xlu0 %v1456, %s1481
    %v1483 = vpop.permute.xlu0 %1482
    %s1485 = sor.u32 256, 56
    %1486 = vbcast.lane.b32.xlu0 %v1456, %s1485
    %v1487 = vpop.permute.xlu0 %1486
    %s1489 = sor.u32 256, 64
    %1490 = vbcast.lane.b32.xlu0 %v1456, %s1489
    %v1491 = vpop.permute.xlu0 %1490
    %s1493 = sor.u32 256, 72
    %1494 = vbcast.lane.b32.xlu0 %v1456, %s1493
    %v1495 = vpop.permute.xlu0 %1494
    %s1497 = sor.u32 256, 80
    %1498 = vbcast.lane.b32.xlu0 %v1456, %s1497
    %v1499 = vpop.permute.xlu0 %1498
    %s1501 = sor.u32 256, 88
    %1502 = vbcast.lane.b32.xlu0 %v1456, %s1501
    %v1503 = vpop.permute.xlu0 %1502
    %s1505 = sor.u32 256, 96
    %1506 = vbcast.lane.b32.xlu0 %v1456, %s1505
    %v1507 = vpop.permute.xlu0 %1506
    %s1509 = sor.u32 256, 104
    %1510 = vbcast.lane.b32.xlu0 %v1456, %s1509
    %v1511 = vpop.permute.xlu0 %1510
    %s1513 = sor.u32 256, 112
    %1514 = vbcast.lane.b32.xlu0 %v1456, %s1513
    %v1515 = vpop.permute.xlu0 %1514
    %s1517 = sor.u32 256, 120
    %1518 = vbcast.lane.b32.xlu0 %v1456, %s1517
    %v1519 = vpop.permute.xlu0 %1518
    %v1520 = vlaneseq
    %v1521 = vshrl.u32 %v1520, 7
    %v1522 = vsub.s32 7, %v1521
    %v1523 = vrot.slane %v127, %v1522
    %1525 = vbcast.lane.b32.xlu0 %v1523, 256
    %v1526 = vpop.permute.xlu0 %1525
    %s1528 = sor.u32 256, 8
    %1529 = vbcast.lane.b32.xlu0 %v1523, %s1528
    %v1530 = vpop.permute.xlu0 %1529
    %s1532 = sor.u32 256, 16
    %1533 = vbcast.lane.b32.xlu0 %v1523, %s1532
    %v1534 = vpop.permute.xlu0 %1533
    %s1536 = sor.u32 256, 24
    %1537 = vbcast.lane.b32.xlu0 %v1523, %s1536
    %v1538 = vpop.permute.xlu0 %1537
    %s1540 = sor.u32 256, 32
    %1541 = vbcast.lane.b32.xlu0 %v1523, %s1540
    %v1542 = vpop.permute.xlu0 %1541
    %s1544 = sor.u32 256, 40
    %1545 = vbcast.lane.b32.xlu0 %v1523, %s1544
    %v1546 = vpop.permute.xlu0 %1545
    %s1548 = sor.u32 256, 48
    %1549 = vbcast.lane.b32.xlu0 %v1523, %s1548
    %v1550 = vpop.permute.xlu0 %1549
    %s1552 = sor.u32 256, 56
    %1553 = vbcast.lane.b32.xlu0 %v1523, %s1552
    %v1554 = vpop.permute.xlu0 %1553
    %s1556 = sor.u32 256, 64
    %1557 = vbcast.lane.b32.xlu0 %v1523, %s1556
    %v1558 = vpop.permute.xlu0 %1557
    %s1560 = sor.u32 256, 72
    %1561 = vbcast.lane.b32.xlu0 %v1523, %s1560
    %v1562 = vpop.permute.xlu0 %1561
    %s1564 = sor.u32 256, 80
    %1565 = vbcast.lane.b32.xlu0 %v1523, %s1564
    %v1566 = vpop.permute.xlu0 %1565
    %s1568 = sor.u32 256, 88
    %1569 = vbcast.lane.b32.xlu0 %v1523, %s1568
    %v1570 = vpop.permute.xlu0 %1569
    %s1572 = sor.u32 256, 96
    %1573 = vbcast.lane.b32.xlu0 %v1523, %s1572
    %v1574 = vpop.permute.xlu0 %1573
    %s1576 = sor.u32 256, 104
    %1577 = vbcast.lane.b32.xlu0 %v1523, %s1576
    %v1578 = vpop.permute.xlu0 %1577
    %s1580 = sor.u32 256, 112
    %1581 = vbcast.lane.b32.xlu0 %v1523, %s1580
    %v1582 = vpop.permute.xlu0 %1581
    %s1584 = sor.u32 256, 120
    %1585 = vbcast.lane.b32.xlu0 %v1523, %s1584
    %v1586 = vpop.permute.xlu0 %1585
    %v1587 = vmul.f32 %v922, %v1057
    %v1588 = vmul.f32 %v923, %v1061
    %v1589 = vmul.f32 %v924, %v1065
    %v1590 = vmul.f32 %v925, %v1069
    %v1591 = vmul.f32 %v926, %v1073
    %v1592 = vmul.f32 %v927, %v1077
    %v1593 = vmul.f32 %v928, %v1081
    %v1594 = vmul.f32 %v929, %v1085
    %v1595 = vmul.f32 %v930, %v1089
    %v1596 = vmul.f32 %v931, %v1093
    %v1597 = vmul.f32 %v932, %v1097
    %v1598 = vmul.f32 %v933, %v1101
    %v1599 = vmul.f32 %v934, %v1105
    %v1600 = vmul.f32 %v935, %v1109
    %v1601 = vmul.f32 %v936, %v1113
    %v1602 = vmul.f32 %v937, %v1117
    %v1603 = vmul.f32 %v938, %v1124
    %v1604 = vmul.f32 %v939, %v1128
    %v1605 = vmul.f32 %v940, %v1132
    %v1606 = vmul.f32 %v941, %v1136
    %v1607 = vmul.f32 %v942, %v1140
    %v1608 = vmul.f32 %v943, %v1144
    %v1609 = vmul.f32 %v944, %v1148
    %v1610 = vmul.f32 %v945, %v1152
    %v1611 = vmul.f32 %v946, %v1156
    %v1612 = vmul.f32 %v947, %v1160
    %v1613 = vmul.f32 %v948, %v1164
    %v1614 = vmul.f32 %v949, %v1168
    %v1615 = vmul.f32 %v950, %v1172
    %v1616 = vmul.f32 %v951, %v1176
    %v1617 = vmul.f32 %v952, %v1180
    %v1618 = vmul.f32 %v953, %v1184
    %v1619 = vmul.f32 %v954, %v1191
    %v1620 = vmul.f32 %v955, %v1195
    %v1621 = vmul.f32 %v956, %v1199
    %v1622 = vmul.f32 %v957, %v1203
    %v1623 = vmul.f32 %v958, %v1207
    %v1624 = vmul.f32 %v959, %v1211
    %v1625 = vmul.f32 %v960, %v1215
    %v1626 = vmul.f32 %v961, %v1219
    %v1627 = vmul.f32 %v962, %v1223
    %v1628 = vmul.f32 %v963, %v1227
    %v1629 = vmul.f32 %v964, %v1231
    %v1630 = vmul.f32 %v965, %v1235
    %v1631 = vmul.f32 %v966, %v1239
    %v1632 = vmul.f32 %v967, %v1243
    %v1633 = vmul.f32 %v968, %v1247
    %v1634 = vmul.f32 %v969, %v1251
    %v1635 = vmul.f32 %v970, %v1258
    %v1636 = vmul.f32 %v971, %v1262
    %v1637 = vmul.f32 %v972, %v1266
    %v1638 = vmul.f32 %v973, %v1270
    %v1639 = vmul.f32 %v974, %v1274
    %v1640 = vmul.f32 %v975, %v1278
    %v1641 = vmul.f32 %v976, %v1282
    %v1642 = vmul.f32 %v977, %v1286
    %v1643 = vmul.f32 %v978, %v1290
    %v1644 = vmul.f32 %v979, %v1294
    %v1645 = vmul.f32 %v980, %v1298
    %v1646 = vmul.f32 %v981, %v1302
    %v1647 = vmul.f32 %v982, %v1306
    %v1648 = vmul.f32 %v983, %v1310
    %v1649 = vmul.f32 %v984, %v1314
    %v1650 = vmul.f32 %v985, %v1318
    %v1651 = vmul.f32 %v986, %v1325
    %v1652 = vmul.f32 %v987, %v1329
    %v1653 = vmul.f32 %v988, %v1333
    %v1654 = vmul.f32 %v989, %v1337
    %v1655 = vmul.f32 %v990, %v1341
    %v1656 = vmul.f32 %v991, %v1345
    %v1657 = vmul.f32 %v992, %v1349
    %v1658 = vmul.f32 %v993, %v1353
    %v1659 = vmul.f32 %v994, %v1357
    %v1660 = vmul.f32 %v995, %v1361
    %v1661 = vmul.f32 %v996, %v1365
    %v1662 = vmul.f32 %v997, %v1369
    %v1663 = vmul.f32 %v998, %v1373
    %v1664 = vmul.f32 %v999, %v1377
    %v1665 = vmul.f32 %v1000, %v1381
    %v1666 = vmul.f32 %v1001, %v1385
    %v1667 = vmul.f32 %v1002, %v1392
    %v1668 = vmul.f32 %v1003, %v1396
    %v1669 = vmul.f32 %v1004, %v1400
    %v1670 = vmul.f32 %v1005, %v1404
    %v1671 = vmul.f32 %v1006, %v1408
    %v1672 = vmul.f32 %v1007, %v1412
    %v1673 = vmul.f32 %v1008, %v1416
    %v1674 = vmul.f32 %v1009, %v1420
    %v1675 = vmul.f32 %v1010, %v1424
    %v1676 = vmul.f32 %v1011, %v1428
    %v1677 = vmul.f32 %v1012, %v1432
    %v1678 = vmul.f32 %v1013, %v1436
    %v1679 = vmul.f32 %v1014, %v1440
    %v1680 = vmul.f32 %v1015, %v1444
    %v1681 = vmul.f32 %v1016, %v1448
    %v1682 = vmul.f32 %v1017, %v1452
    %v1683 = vmul.f32 %v1018, %v1459
    %v1684 = vmul.f32 %v1019, %v1463
    %v1685 = vmul.f32 %v1020, %v1467
    %v1686 = vmul.f32 %v1021, %v1471
    %v1687 = vmul.f32 %v1022, %v1475
    %v1688 = vmul.f32 %v1023, %v1479
    %v1689 = vmul.f32 %v1024, %v1483
    %v1690 = vmul.f32 %v1025, %v1487
    %v1691 = vmul.f32 %v1026, %v1491
    %v1692 = vmul.f32 %v1027, %v1495
    %v1693 = vmul.f32 %v1028, %v1499
    %v1694 = vmul.f32 %v1029, %v1503
    %v1695 = vmul.f32 %v1030, %v1507
    %v1696 = vmul.f32 %v1031, %v1511
    %v1697 = vmul.f32 %v1032, %v1515
    %v1698 = vmul.f32 %v1033, %v1519
    %v1699 = vmul.f32 %v1034, %v1526
    %v1700 = vmul.f32 %v1035, %v1530
    %v1701 = vmul.f32 %v1036, %v1534
    %v1702 = vmul.f32 %v1037, %v1538
    %v1703 = vmul.f32 %v1038, %v1542
    %v1704 = vmul.f32 %v1039, %v1546
    %v1705 = vmul.f32 %v1040, %v1550
    %v1706 = vmul.f32 %v1041, %v1554
    %v1707 = vmul.f32 %v1042, %v1558
    %v1708 = vmul.f32 %v1043, %v1562
    %v1709 = vmul.f32 %v1044, %v1566
    %v1710 = vmul.f32 %v1045, %v1570
    %v1711 = vmul.f32 %v1046, %v1574
    %v1712 = vmul.f32 %v1047, %v1578
    %v1713 = vmul.f32 %v1048, %v1582
    %v1714 = vmul.f32 %v1049, %v1586
    %v1715 = vadd.f32 %v1587, %v1588
    %v1716 = vadd.f32 %v1715, %v1589
    %v1717 = vadd.f32 %v1716, %v1590
    %v1718 = vadd.f32 %v1717, %v1591
    %v1719 = vadd.f32 %v1718, %v1592
    %v1720 = vadd.f32 %v1719, %v1593
    %v1721 = vadd.f32 %v1720, %v1594
    %v1722 = vadd.f32 %v1721, %v1595
    %v1723 = vadd.f32 %v1722, %v1596
    %v1724 = vadd.f32 %v1723, %v1597
    %v1725 = vadd.f32 %v1724, %v1598
    %v1726 = vadd.f32 %v1725, %v1599
    %v1727 = vadd.f32 %v1726, %v1600
    %v1728 = vadd.f32 %v1727, %v1601
    %v1729 = vadd.f32 %v1728, %v1602
    %v1730 = vrot.slane %v1729, 4
    %v1731 = vadd.f32 %v1729, %v1730
    %v1732 = vrot.slane %v1731, 2
    %v1733 = vadd.f32 %v1731, %v1732
    %v1734 = vrot.slane %v1733, 1
    %v1735 = vadd.f32 %v1733, %v1734
    %v1736 = vadd.f32 %v1603, %v1604
    %v1737 = vadd.f32 %v1736, %v1605
    %v1738 = vadd.f32 %v1737, %v1606
    %v1739 = vadd.f32 %v1738, %v1607
    %v1740 = vadd.f32 %v1739, %v1608
    %v1741 = vadd.f32 %v1740, %v1609
    %v1742 = vadd.f32 %v1741, %v1610
    %v1743 = vadd.f32 %v1742, %v1611
    %v1744 = vadd.f32 %v1743, %v1612
    %v1745 = vadd.f32 %v1744, %v1613
    %v1746 = vadd.f32 %v1745, %v1614
    %v1747 = vadd.f32 %v1746, %v1615
    %v1748 = vadd.f32 %v1747, %v1616
    %v1749 = vadd.f32 %v1748, %v1617
    %v1750 = vadd.f32 %v1749, %v1618
    %v1751 = vrot.slane %v1750, 4
    %v1752 = vadd.f32 %v1750, %v1751
    %v1753 = vrot.slane %v1752, 2
    %v1754 = vadd.f32 %v1752, %v1753
    %v1755 = vrot.slane %v1754, 1
    %v1756 = vadd.f32 %v1754, %v1755
    %v1757 = vadd.f32 %v1619, %v1620
    %v1758 = vadd.f32 %v1757, %v1621
    %v1759 = vadd.f32 %v1758, %v1622
    %v1760 = vadd.f32 %v1759, %v1623
    %v1761 = vadd.f32 %v1760, %v1624
    %v1762 = vadd.f32 %v1761, %v1625
    %v1763 = vadd.f32 %v1762, %v1626
    %v1764 = vadd.f32 %v1763, %v1627
    %v1765 = vadd.f32 %v1764, %v1628
    %v1766 = vadd.f32 %v1765, %v1629
    %v1767 = vadd.f32 %v1766, %v1630
    %v1768 = vadd.f32 %v1767, %v1631
    %v1769 = vadd.f32 %v1768, %v1632
    %v1770 = vadd.f32 %v1769, %v1633
    %v1771 = vadd.f32 %v1770, %v1634
    %v1772 = vrot.slane %v1771, 4
    %v1773 = vadd.f32 %v1771, %v1772
    %v1774 = vrot.slane %v1773, 2
    %v1775 = vadd.f32 %v1773, %v1774
    %v1776 = vrot.slane %v1775, 1
    %v1777 = vadd.f32 %v1775, %v1776
    %v1778 = vadd.f32 %v1635, %v1636
    %v1779 = vadd.f32 %v1778, %v1637
    %v1780 = vadd.f32 %v1779, %v1638
    %v1781 = vadd.f32 %v1780, %v1639
    %v1782 = vadd.f32 %v1781, %v1640
    %v1783 = vadd.f32 %v1782, %v1641
    %v1784 = vadd.f32 %v1783, %v1642
    %v1785 = vadd.f32 %v1784, %v1643
    %v1786 = vadd.f32 %v1785, %v1644
    %v1787 = vadd.f32 %v1786, %v1645
    %v1788 = vadd.f32 %v1787, %v1646
    %v1789 = vadd.f32 %v1788, %v1647
    %v1790 = vadd.f32 %v1789, %v1648
    %v1791 = vadd.f32 %v1790, %v1649
    %v1792 = vadd.f32 %v1791, %v1650
    %v1793 = vrot.slane %v1792, 4
    %v1794 = vadd.f32 %v1792, %v1793
    %v1795 = vrot.slane %v1794, 2
    %v1796 = vadd.f32 %v1794, %v1795
    %v1797 = vrot.slane %v1796, 1
    %v1798 = vadd.f32 %v1796, %v1797
    %v1799 = vadd.f32 %v1651, %v1652
    %v1800 = vadd.f32 %v1799, %v1653
    %v1801 = vadd.f32 %v1800, %v1654
    %v1802 = vadd.f32 %v1801, %v1655
    %v1803 = vadd.f32 %v1802, %v1656
    %v1804 = vadd.f32 %v1803, %v1657
    %v1805 = vadd.f32 %v1804, %v1658
    %v1806 = vadd.f32 %v1805, %v1659
    %v1807 = vadd.f32 %v1806, %v1660
    %v1808 = vadd.f32 %v1807, %v1661
    %v1809 = vadd.f32 %v1808, %v1662
    %v1810 = vadd.f32 %v1809, %v1663
    %v1811 = vadd.f32 %v1810, %v1664
    %v1812 = vadd.f32 %v1811, %v1665
    %v1813 = vadd.f32 %v1812, %v1666
    %v1814 = vrot.slane %v1813, 4
    %v1815 = vadd.f32 %v1813, %v1814
    %v1816 = vrot.slane %v1815, 2
    %v1817 = vadd.f32 %v1815, %v1816
    %v1818 = vrot.slane %v1817, 1
    %v1819 = vadd.f32 %v1817, %v1818
    %v1820 = vadd.f32 %v1667, %v1668
    %v1821 = vadd.f32 %v1820, %v1669
    %v1822 = vadd.f32 %v1821, %v1670
    %v1823 = vadd.f32 %v1822, %v1671
    %v1824 = vadd.f32 %v1823, %v1672
    %v1825 = vadd.f32 %v1824, %v1673
    %v1826 = vadd.f32 %v1825, %v1674
    %v1827 = vadd.f32 %v1826, %v1675
    %v1828 = vadd.f32 %v1827, %v1676
    %v1829 = vadd.f32 %v1828, %v1677
    %v1830 = vadd.f32 %v1829, %v1678
    %v1831 = vadd.f32 %v1830, %v1679
    %v1832 = vadd.f32 %v1831, %v1680
    %v1833 = vadd.f32 %v1832, %v1681
    %v1834 = vadd.f32 %v1833, %v1682
    %v1835 = vrot.slane %v1834, 4
    %v1836 = vadd.f32 %v1834, %v1835
    %v1837 = vrot.slane %v1836, 2
    %v1838 = vadd.f32 %v1836, %v1837
    %v1839 = vrot.slane %v1838, 1
    %v1840 = vadd.f32 %v1838, %v1839
    %v1841 = vadd.f32 %v1683, %v1684
    %v1842 = vadd.f32 %v1841, %v1685
    %v1843 = vadd.f32 %v1842, %v1686
    %v1844 = vadd.f32 %v1843, %v1687
    %v1845 = vadd.f32 %v1844, %v1688
    %v1846 = vadd.f32 %v1845, %v1689
    %v1847 = vadd.f32 %v1846, %v1690
    %v1848 = vadd.f32 %v1847, %v1691
    %v1849 = vadd.f32 %v1848, %v1692
    %v1850 = vadd.f32 %v1849, %v1693
    %v1851 = vadd.f32 %v1850, %v1694
    %v1852 = vadd.f32 %v1851, %v1695
    %v1853 = vadd.f32 %v1852, %v1696
    %v1854 = vadd.f32 %v1853, %v1697
    %v1855 = vadd.f32 %v1854, %v1698
    %v1856 = vrot.slane %v1855, 4
    %v1857 = vadd.f32 %v1855, %v1856
    %v1858 = vrot.slane %v1857, 2
    %v1859 = vadd.f32 %v1857, %v1858
    %v1860 = vrot.slane %v1859, 1
    %v1861 = vadd.f32 %v1859, %v1860
    %v1862 = vadd.f32 %v1699, %v1700
    %v1863 = vadd.f32 %v1862, %v1701
    %v1864 = vadd.f32 %v1863, %v1702
    %v1865 = vadd.f32 %v1864, %v1703
    %v1866 = vadd.f32 %v1865, %v1704
    %v1867 = vadd.f32 %v1866, %v1705
    %v1868 = vadd.f32 %v1867, %v1706
    %v1869 = vadd.f32 %v1868, %v1707
    %v1870 = vadd.f32 %v1869, %v1708
    %v1871 = vadd.f32 %v1870, %v1709
    %v1872 = vadd.f32 %v1871, %v1710
    %v1873 = vadd.f32 %v1872, %v1711
    %v1874 = vadd.f32 %v1873, %v1712
    %v1875 = vadd.f32 %v1874, %v1713
    %v1876 = vadd.f32 %v1875, %v1714
    %v1877 = vrot.slane %v1876, 4
    %v1878 = vadd.f32 %v1876, %v1877
    %v1879 = vrot.slane %v1878, 2
    %v1880 = vadd.f32 %v1878, %v1879
    %v1881 = vrot.slane %v1880, 1
    %v1882 = vadd.f32 %v1880, %v1881
    %vm1891 = vcmask 1041409
    %v1892 = vsel %vm1891, %v1756, %v1735
    %vm1893 = vcmask 1042434
    %v1894 = vsel %vm1893, %v1777, %v1892
    %vm1895 = vcmask 1043459
    %v1896 = vsel %vm1895, %v1798, %v1894
    %vm1897 = vcmask 1044484
    %v1898 = vsel %vm1897, %v1819, %v1896
    %vm1899 = vcmask 1045509
    %v1900 = vsel %vm1899, %v1840, %v1898
    %vm1901 = vcmask 1046534
    %v1902 = vsel %vm1901, %v1861, %v1900
    %vm1903 = vcmask 1047559
    %v1904 = vsel %vm1903, %v1882, %v1902
    %v1906 = vadd.f32 %v1050, %v1904
    %1907 = vst [vmem:[#allocation2] sm:$0xff] %v1906
    %v1908 = vld [vmem:[#allocation3] sm:$0xff]
    %1909 = vadd.xlane.f32.xlu0 %v127
    %v1910 = vpop.xlane.xlu0 %1909
    %v1911 = vadd.f32 %v1908, %v1910
    %vm1912 = vcmask 7168
    %1913 = vst.msk [vmem:[#allocation3] sm:$0xff] %vm1912, %v1911
    // Predicated region
    $region62: #{tpu_custom_call.1} parent=1 // pred_check
      %p1914 = pneg %p118
    $region63: #{tpu_custom_call.1} parent=1 // pred_check_branch
      %1916 = sbr.rel (%p1914) target = $region65
    $region64: #{tpu_custom_call.1} parent=1 // pred_region
      %v1917 = vld [vmem:[#allocation3] sm:$0xff]
      %v1918 = vmax.f32 %v1917, 1.0
      %v1919 = vld [vmem:[#allocation2] sm:$0xff]
      %v1920 = vld [vmem:[#allocation9] sm:$0xff]
      %v1921 = vld [vmem:[#allocation9 + $0x8] sm:$0xff]
      %v1922 = vld [vmem:[#allocation9 + $0x10] sm:$0xff]
      %v1923 = vld [vmem:[#allocation9 + $0x18] sm:$0xff]
      %v1924 = vld [vmem:[#allocation9 + $0x20] sm:$0xff]
      %v1925 = vld [vmem:[#allocation9 + $0x28] sm:$0xff]
      %v1926 = vld [vmem:[#allocation9 + $0x30] sm:$0xff]
      %v1927 = vld [vmem:[#allocation9 + $0x38] sm:$0xff]
      %v1928 = vld [vmem:[#allocation9 + $0x40] sm:$0xff]
      %v1929 = vld [vmem:[#allocation9 + $0x48] sm:$0xff]
      %v1930 = vld [vmem:[#allocation9 + $0x50] sm:$0xff]
      %v1931 = vld [vmem:[#allocation9 + $0x58] sm:$0xff]
      %v1932 = vld [vmem:[#allocation9 + $0x60] sm:$0xff]
      %v1933 = vld [vmem:[#allocation9 + $0x68] sm:$0xff]
      %v1934 = vld [vmem:[#allocation9 + $0x70] sm:$0xff]
      %v1935 = vld [vmem:[#allocation9 + $0x78] sm:$0xff]
      %v1936 = vld [vmem:[#allocation9 + $0x80] sm:$0xff]
      %v1937 = vld [vmem:[#allocation9 + $0x88] sm:$0xff]
      %v1938 = vld [vmem:[#allocation9 + $0x90] sm:$0xff]
      %v1939 = vld [vmem:[#allocation9 + $0x98] sm:$0xff]
      %v1940 = vld [vmem:[#allocation9 + $0xa0] sm:$0xff]
      %v1941 = vld [vmem:[#allocation9 + $0xa8] sm:$0xff]
      %v1942 = vld [vmem:[#allocation9 + $0xb0] sm:$0xff]
      %v1943 = vld [vmem:[#allocation9 + $0xb8] sm:$0xff]
      %v1944 = vld [vmem:[#allocation9 + $0xc0] sm:$0xff]
      %v1945 = vld [vmem:[#allocation9 + $0xc8] sm:$0xff]
      %v1946 = vld [vmem:[#allocation9 + $0xd0] sm:$0xff]
      %v1947 = vld [vmem:[#allocation9 + $0xd8] sm:$0xff]
      %v1948 = vld [vmem:[#allocation9 + $0xe0] sm:$0xff]
      %v1949 = vld [vmem:[#allocation9 + $0xe8] sm:$0xff]
      %v1950 = vld [vmem:[#allocation9 + $0xf0] sm:$0xff]
      %v1951 = vld [vmem:[#allocation9 + $0xf8] sm:$0xff]
      %v1952 = vld [vmem:[#allocation9 + $0x100] sm:$0xff]
      %v1953 = vld [vmem:[#allocation9 + $0x108] sm:$0xff]
      %v1954 = vld [vmem:[#allocation9 + $0x110] sm:$0xff]
      %v1955 = vld [vmem:[#allocation9 + $0x118] sm:$0xff]
      %v1956 = vld [vmem:[#allocation9 + $0x120] sm:$0xff]
      %v1957 = vld [vmem:[#allocation9 + $0x128] sm:$0xff]
      %v1958 = vld [vmem:[#allocation9 + $0x130] sm:$0xff]
      %v1959 = vld [vmem:[#allocation9 + $0x138] sm:$0xff]
      %v1960 = vld [vmem:[#allocation9 + $0x140] sm:$0xff]
      %v1961 = vld [vmem:[#allocation9 + $0x148] sm:$0xff]
      %v1962 = vld [vmem:[#allocation9 + $0x150] sm:$0xff]
      %v1963 = vld [vmem:[#allocation9 + $0x158] sm:$0xff]
      %v1964 = vld [vmem:[#allocation9 + $0x160] sm:$0xff]
      %v1965 = vld [vmem:[#allocation9 + $0x168] sm:$0xff]
      %v1966 = vld [vmem:[#allocation9 + $0x170] sm:$0xff]
      %v1967 = vld [vmem:[#allocation9 + $0x178] sm:$0xff]
      %v1968 = vld [vmem:[#allocation9 + $0x180] sm:$0xff]
      %v1969 = vld [vmem:[#allocation9 + $0x188] sm:$0xff]
      %v1970 = vld [vmem:[#allocation9 + $0x190] sm:$0xff]
      %v1971 = vld [vmem:[#allocation9 + $0x198] sm:$0xff]
      %v1972 = vld [vmem:[#allocation9 + $0x1a0] sm:$0xff]
      %v1973 = vld [vmem:[#allocation9 + $0x1a8] sm:$0xff]
      %v1974 = vld [vmem:[#allocation9 + $0x1b0] sm:$0xff]
      %v1975 = vld [vmem:[#allocation9 + $0x1b8] sm:$0xff]
      %v1976 = vld [vmem:[#allocation9 + $0x1c0] sm:$0xff]
      %v1977 = vld [vmem:[#allocation9 + $0x1c8] sm:$0xff]
      %v1978 = vld [vmem:[#allocation9 + $0x1d0] sm:$0xff]
      %v1979 = vld [vmem:[#allocation9 + $0x1d8] sm:$0xff]
      %v1980 = vld [vmem:[#allocation9 + $0x1e0] sm:$0xff]
      %v1981 = vld [vmem:[#allocation9 + $0x1e8] sm:$0xff]
      %v1982 = vld [vmem:[#allocation9 + $0x1f0] sm:$0xff]
      %v1983 = vld [vmem:[#allocation9 + $0x1f8] sm:$0xff]
      %v1984 = vld [vmem:[#allocation9 + $0x200] sm:$0xff]
      %v1985 = vld [vmem:[#allocation9 + $0x208] sm:$0xff]
      %v1986 = vld [vmem:[#allocation9 + $0x210] sm:$0xff]
      %v1987 = vld [vmem:[#allocation9 + $0x218] sm:$0xff]
      %v1988 = vld [vmem:[#allocation9 + $0x220] sm:$0xff]
      %v1989 = vld [vmem:[#allocation9 + $0x228] sm:$0xff]
      %v1990 = vld [vmem:[#allocation9 + $0x230] sm:$0xff]
      %v1991 = vld [vmem:[#allocation9 + $0x238] sm:$0xff]
      %v1992 = vld [vmem:[#allocation9 + $0x240] sm:$0xff]
      %v1993 = vld [vmem:[#allocation9 + $0x248] sm:$0xff]
      %v1994 = vld [vmem:[#allocation9 + $0x250] sm:$0xff]
      %v1995 = vld [vmem:[#allocation9 + $0x258] sm:$0xff]
      %v1996 = vld [vmem:[#allocation9 + $0x260] sm:$0xff]
      %v1997 = vld [vmem:[#allocation9 + $0x268] sm:$0xff]
      %v1998 = vld [vmem:[#allocation9 + $0x270] sm:$0xff]
      %v1999 = vld [vmem:[#allocation9 + $0x278] sm:$0xff]
      %v2000 = vld [vmem:[#allocation9 + $0x280] sm:$0xff]
      %v2001 = vld [vmem:[#allocation9 + $0x288] sm:$0xff]
      %v2002 = vld [vmem:[#allocation9 + $0x290] sm:$0xff]
      %v2003 = vld [vmem:[#allocation9 + $0x298] sm:$0xff]
      %v2004 = vld [vmem:[#allocation9 + $0x2a0] sm:$0xff]
      %v2005 = vld [vmem:[#allocation9 + $0x2a8] sm:$0xff]
      %v2006 = vld [vmem:[#allocation9 + $0x2b0] sm:$0xff]
      %v2007 = vld [vmem:[#allocation9 + $0x2b8] sm:$0xff]
      %v2008 = vld [vmem:[#allocation9 + $0x2c0] sm:$0xff]
      %v2009 = vld [vmem:[#allocation9 + $0x2c8] sm:$0xff]
      %v2010 = vld [vmem:[#allocation9 + $0x2d0] sm:$0xff]
      %v2011 = vld [vmem:[#allocation9 + $0x2d8] sm:$0xff]
      %v2012 = vld [vmem:[#allocation9 + $0x2e0] sm:$0xff]
      %v2013 = vld [vmem:[#allocation9 + $0x2e8] sm:$0xff]
      %v2014 = vld [vmem:[#allocation9 + $0x2f0] sm:$0xff]
      %v2015 = vld [vmem:[#allocation9 + $0x2f8] sm:$0xff]
      %v2016 = vld [vmem:[#allocation9 + $0x300] sm:$0xff]
      %v2017 = vld [vmem:[#allocation9 + $0x308] sm:$0xff]
      %v2018 = vld [vmem:[#allocation9 + $0x310] sm:$0xff]
      %v2019 = vld [vmem:[#allocation9 + $0x318] sm:$0xff]
      %v2020 = vld [vmem:[#allocation9 + $0x320] sm:$0xff]
      %v2021 = vld [vmem:[#allocation9 + $0x328] sm:$0xff]
      %v2022 = vld [vmem:[#allocation9 + $0x330] sm:$0xff]
      %v2023 = vld [vmem:[#allocation9 + $0x338] sm:$0xff]
      %v2024 = vld [vmem:[#allocation9 + $0x340] sm:$0xff]
      %v2025 = vld [vmem:[#allocation9 + $0x348] sm:$0xff]
      %v2026 = vld [vmem:[#allocation9 + $0x350] sm:$0xff]
      %v2027 = vld [vmem:[#allocation9 + $0x358] sm:$0xff]
      %v2028 = vld [vmem:[#allocation9 + $0x360] sm:$0xff]
      %v2029 = vld [vmem:[#allocation9 + $0x368] sm:$0xff]
      %v2030 = vld [vmem:[#allocation9 + $0x370] sm:$0xff]
      %v2031 = vld [vmem:[#allocation9 + $0x378] sm:$0xff]
      %v2032 = vld [vmem:[#allocation9 + $0x380] sm:$0xff]
      %v2033 = vld [vmem:[#allocation9 + $0x388] sm:$0xff]
      %v2034 = vld [vmem:[#allocation9 + $0x390] sm:$0xff]
      %v2035 = vld [vmem:[#allocation9 + $0x398] sm:$0xff]
      %v2036 = vld [vmem:[#allocation9 + $0x3a0] sm:$0xff]
      %v2037 = vld [vmem:[#allocation9 + $0x3a8] sm:$0xff]
      %v2038 = vld [vmem:[#allocation9 + $0x3b0] sm:$0xff]
      %v2039 = vld [vmem:[#allocation9 + $0x3b8] sm:$0xff]
      %v2040 = vld [vmem:[#allocation9 + $0x3c0] sm:$0xff]
      %v2041 = vld [vmem:[#allocation9 + $0x3c8] sm:$0xff]
      %v2042 = vld [vmem:[#allocation9 + $0x3d0] sm:$0xff]
      %v2043 = vld [vmem:[#allocation9 + $0x3d8] sm:$0xff]
      %v2044 = vld [vmem:[#allocation9 + $0x3e0] sm:$0xff]
      %v2045 = vld [vmem:[#allocation9 + $0x3e8] sm:$0xff]
      %v2046 = vld [vmem:[#allocation9 + $0x3f0] sm:$0xff]
      %v2047 = vld [vmem:[#allocation9 + $0x3f8] sm:$0xff]
      %2048 = vmatprep.subr.mxu0 %v1921
      %2049 = vmatpush1.msra.mxu0 %v1920
      %2050 = vmatprep.subr.mxu0 %v1929
      %2051 = vmatpush1.msra.mxu0 %v1928
      %2052 = vmatprep.subr.mxu0 %v1937
      %2053 = vmatpush1.msra.mxu0 %v1936
      %2054 = vmatprep.subr.mxu0 %v1945
      %2055 = vmatpush1.msra.mxu0 %v1944
      %2056 = vmatprep.subr.mxu0 %v1953
      %2057 = vmatpush1.msra.mxu0 %v1952
      %2058 = vmatprep.subr.mxu0 %v1961
      %2059 = vmatpush1.msra.mxu0 %v1960
      %2060 = vmatprep.subr.mxu0 %v1969
      %2061 = vmatpush1.msra.mxu0 %v1968
      %2062 = vmatprep.subr.mxu0 %v1977
      %2063 = vmatpush1.msra.mxu0 %v1976
      %2064 = vmatprep.subr.mxu0 %v1985
      %2065 = vmatpush1.msra.mxu0 %v1984
      %2066 = vmatprep.subr.mxu0 %v1993
      %2067 = vmatpush1.msra.mxu0 %v1992
      %2068 = vmatprep.subr.mxu0 %v2001
      %2069 = vmatpush1.msra.mxu0 %v2000
      %2070 = vmatprep.subr.mxu0 %v2009
      %2071 = vmatpush1.msra.mxu0 %v2008
      %2072 = vmatprep.subr.mxu0 %v2017
      %2073 = vmatpush1.msra.mxu0 %v2016
      %2074 = vmatprep.subr.mxu0 %v2025
      %2075 = vmatpush1.msra.mxu0 %v2024
      %2076 = vmatprep.subr.mxu0 %v2033
      %2077 = vmatpush1.msra.mxu0 %v2032
      %2078 = vmatprep.subr.mxu0 %v2041
      %2079 = vmatpush1.msra.mxu0 %v2040
      %2080 = vmatprep.subr.mxu0 0.0
      %2081 = vmatpush1.msra.mxu0 0.0
      %2082 = vmatprep.subr.mxu0 0.0
      %2083 = vmatpush1.msra.mxu0 0.0
      %2084 = vmatprep.subr.mxu0 0.0
      %2085 = vmatpush1.msra.mxu0 0.0
      %2086 = vmatprep.subr.mxu0 0.0
      %2087 = vmatpush1.msra.mxu0 0.0
      %2088 = vmatprep.subr.mxu0 0.0
      %2089 = vmatpush1.msra.mxu0 0.0
      %2090 = vmatprep.subr.mxu0 0.0
      %2091 = vmatpush1.msra.mxu0 0.0
      %2092 = vmatprep.subr.mxu0 0.0
      %2093 = vmatpush1.msra.mxu0 0.0
      %2094 = vmatprep.subr.mxu0 0.0
      %2095 = vmatpush1.msra.mxu0 0.0
      %2096 = vmatprep.subr.mxu0 0.0
      %2097 = vmatpush1.msra.mxu0 0.0
      %2098 = vmatprep.subr.mxu0 0.0
      %2099 = vmatpush1.msra.mxu0 0.0
      %2100 = vmatprep.subr.mxu0 0.0
      %2101 = vmatpush1.msra.mxu0 0.0
      %2102 = vmatprep.subr.mxu0 0.0
      %2103 = vmatpush1.msra.mxu0 0.0
      %2104 = vmatprep.subr.mxu0 0.0
      %2105 = vmatpush1.msra.mxu0 0.0
      %2106 = vmatprep.subr.mxu0 0.0
      %2107 = vmatpush1.msra.mxu0 0.0
      %2108 = vmatprep.subr.mxu0 0.0
      %2109 = vmatpush1.msra.mxu0 0.0
      %2110 = vmatprep.subr.mxu0 0.0
      %2111 = vmatpush1.msra.mxu0 0.0
      %2112 = vmatprep.mubr.f32.mxu0 0.0
      %2113 = vmatmul.mubr.f32.gmra.mrb[0].mxu0 %v1919
      %v2114 = vpop.f32.mrb[0].mxu0
      %v2115 = vadd.f32 0.0, %v2114
      %v2116 = vpop.f32.mrb[0].mxu0
      %v2117 = vadd.f32 0.0, %v2116
      %2118 = vdwg.mxu0
      %2119 = vmatprep.subr.mxu0 %v1923
      %2120 = vmatpush1.msra.mxu0 %v1922
      %2121 = vmatprep.subr.mxu0 %v1931
      %2122 = vmatpush1.msra.mxu0 %v1930
      %2123 = vmatprep.subr.mxu0 %v1939
      %2124 = vmatpush1.msra.mxu0 %v1938
      %2125 = vmatprep.subr.mxu0 %v1947
      %2126 = vmatpush1.msra.mxu0 %v1946
      %2127 = vmatprep.subr.mxu0 %v1955
      %2128 = vmatpush1.msra.mxu0 %v1954
      %2129 = vmatprep.subr.mxu0 %v1963
      %2130 = vmatpush1.msra.mxu0 %v1962
      %2131 = vmatprep.subr.mxu0 %v1971
      %2132 = vmatpush1.msra.mxu0 %v1970
      %2133 = vmatprep.subr.mxu0 %v1979
      %2134 = vmatpush1.msra.mxu0 %v1978
      %2135 = vmatprep.subr.mxu0 %v1987
      %2136 = vmatpush1.msra.mxu0 %v1986
      %2137 = vmatprep.subr.mxu0 %v1995
      %2138 = vmatpush1.msra.mxu0 %v1994
      %2139 = vmatprep.subr.mxu0 %v2003
      %2140 = vmatpush1.msra.mxu0 %v2002
      %2141 = vmatprep.subr.mxu0 %v2011
      %2142 = vmatpush1.msra.mxu0 %v2010
      %2143 = vmatprep.subr.mxu0 %v2019
      %2144 = vmatpush1.msra.mxu0 %v2018
      %2145 = vmatprep.subr.mxu0 %v2027
      %2146 = vmatpush1.msra.mxu0 %v2026
      %2147 = vmatprep.subr.mxu0 %v2035
      %2148 = vmatpush1.msra.mxu0 %v2034
      %2149 = vmatprep.subr.mxu0 %v2043
      %2150 = vmatpush1.msra.mxu0 %v2042
      %2151 = vmatprep.subr.mxu0 0.0
      %2152 = vmatpush1.msra.mxu0 0.0
      %2153 = vmatprep.subr.mxu0 0.0
      %2154 = vmatpush1.msra.mxu0 0.0
      %2155 = vmatprep.subr.mxu0 0.0
      %2156 = vmatpush1.msra.mxu0 0.0
      %2157 = vmatprep.subr.mxu0 0.0
      %2158 = vmatpush1.msra.mxu0 0.0
      %2159 = vmatprep.subr.mxu0 0.0
      %2160 = vmatpush1.msra.mxu0 0.0
      %2161 = vmatprep.subr.mxu0 0.0
      %2162 = vmatpush1.msra.mxu0 0.0
      %2163 = vmatprep.subr.mxu0 0.0
      %2164 = vmatpush1.msra.mxu0 0.0
      %2165 = vmatprep.subr.mxu0 0.0
      %2166 = vmatpush1.msra.mxu0 0.0
      %2167 = vmatprep.subr.mxu0 0.0
      %2168 = vmatpush1.msra.mxu0 0.0
      %2169 = vmatprep.subr.mxu0 0.0
      %2170 = vmatpush1.msra.mxu0 0.0
      %2171 = vmatprep.subr.mxu0 0.0
      %2172 = vmatpush1.msra.mxu0 0.0
      %2173 = vmatprep.subr.mxu0 0.0
      %2174 = vmatpush1.msra.mxu0 0.0
      %2175 = vmatprep.subr.mxu0 0.0
      %2176 = vmatpush1.msra.mxu0 0.0
      %2177 = vmatprep.subr.mxu0 0.0
      %2178 = vmatpush1.msra.mxu0 0.0
      %2179 = vmatprep.subr.mxu0 0.0
      %2180 = vmatpush1.msra.mxu0 0.0
      %2181 = vmatprep.subr.mxu0 0.0
      %2182 = vmatpush1.msra.mxu0 0.0
      %2183 = vmatprep.mubr.f32.mxu0 0.0
      %2184 = vmatmul.mubr.f32.gmra.mrb[0].mxu0 %v1919
      %v2185 = vpop.f32.mrb[0].mxu0
      %v2186 = vadd.f32 0.0, %v2185
      %v2187 = vpop.f32.mrb[0].mxu0
      %v2188 = vadd.f32 0.0, %v2187
      %2189 = vdwg.mxu0
      %2190 = vmatprep.subr.mxu0 %v1925
      %2191 = vmatpush1.msra.mxu0 %v1924
      %2192 = vmatprep.subr.mxu0 %v1933
      %2193 = vmatpush1.msra.mxu0 %v1932
      %2194 = vmatprep.subr.mxu0 %v1941
      %2195 = vmatpush1.msra.mxu0 %v1940
      %2196 = vmatprep.subr.mxu0 %v1949
      %2197 = vmatpush1.msra.mxu0 %v1948
      %2198 = vmatprep.subr.mxu0 %v1957
      %2199 = vmatpush1.msra.mxu0 %v1956
      %2200 = vmatprep.subr.mxu0 %v1965
      %2201 = vmatpush1.msra.mxu0 %v1964
      %2202 = vmatprep.subr.mxu0 %v1973
      %2203 = vmatpush1.msra.mxu0 %v1972
      %2204 = vmatprep.subr.mxu0 %v1981
      %2205 = vmatpush1.msra.mxu0 %v1980
      %2206 = vmatprep.subr.mxu0 %v1989
      %2207 = vmatpush1.msra.mxu0 %v1988
      %2208 = vmatprep.subr.mxu0 %v1997
      %2209 = vmatpush1.msra.mxu0 %v1996
      %2210 = vmatprep.subr.mxu0 %v2005
      %2211 = vmatpush1.msra.mxu0 %v2004
      %2212 = vmatprep.subr.mxu0 %v2013
      %2213 = vmatpush1.msra.mxu0 %v2012
      %2214 = vmatprep.subr.mxu0 %v2021
      %2215 = vmatpush1.msra.mxu0 %v2020
      %2216 = vmatprep.subr.mxu0 %v2029
      %2217 = vmatpush1.msra.mxu0 %v2028
      %2218 = vmatprep.subr.mxu0 %v2037
      %2219 = vmatpush1.msra.mxu0 %v2036
      %2220 = vmatprep.subr.mxu0 %v2045
      %2221 = vmatpush1.msra.mxu0 %v2044
      %2222 = vmatprep.subr.mxu0 0.0
      %2223 = vmatpush1.msra.mxu0 0.0
      %2224 = vmatprep.subr.mxu0 0.0
      %2225 = vmatpush1.msra.mxu0 0.0
      %2226 = vmatprep.subr.mxu0 0.0
      %2227 = vmatpush1.msra.mxu0 0.0
      %2228 = vmatprep.subr.mxu0 0.0
      %2229 = vmatpush1.msra.mxu0 0.0
      %2230 = vmatprep.subr.mxu0 0.0
      %2231 = vmatpush1.msra.mxu0 0.0
      %2232 = vmatprep.subr.mxu0 0.0
      %2233 = vmatpush1.msra.mxu0 0.0
      %2234 = vmatprep.subr.mxu0 0.0
      %2235 = vmatpush1.msra.mxu0 0.0
      %2236 = vmatprep.subr.mxu0 0.0
      %2237 = vmatpush1.msra.mxu0 0.0
      %2238 = vmatprep.subr.mxu0 0.0
      %2239 = vmatpush1.msra.mxu0 0.0
      %2240 = vmatprep.subr.mxu0 0.0
      %2241 = vmatpush1.msra.mxu0 0.0
      %2242 = vmatprep.subr.mxu0 0.0
      %2243 = vmatpush1.msra.mxu0 0.0
      %2244 = vmatprep.subr.mxu0 0.0
      %2245 = vmatpush1.msra.mxu0 0.0
      %2246 = vmatprep.subr.mxu0 0.0
      %2247 = vmatpush1.msra.mxu0 0.0
      %2248 = vmatprep.subr.mxu0 0.0
      %2249 = vmatpush1.msra.mxu0 0.0
      %2250 = vmatprep.subr.mxu0 0.0
      %2251 = vmatpush1.msra.mxu0 0.0
      %2252 = vmatprep.subr.mxu0 0.0
      %2253 = vmatpush1.msra.mxu0 0.0
      %2254 = vmatprep.mubr.f32.mxu0 0.0
      %2255 = vmatmul.mubr.f32.gmra.mrb[0].mxu0 %v1919
      %v2256 = vpop.f32.mrb[0].mxu0
      %v2257 = vadd.f32 0.0, %v2256
      %v2258 = vpop.f32.mrb[0].mxu0
      %v2259 = vadd.f32 0.0, %v2258
      %2260 = vdwg.mxu0
      %2261 = vmatprep.subr.mxu0 %v1927
      %2262 = vmatpush1.msra.mxu0 %v1926
      %2263 = vmatprep.subr.mxu0 %v1935
      %2264 = vmatpush1.msra.mxu0 %v1934
      %2265 = vmatprep.subr.mxu0 %v1943
      %2266 = vmatpush1.msra.mxu0 %v1942
      %2267 = vmatprep.subr.mxu0 %v1951
      %2268 = vmatpush1.msra.mxu0 %v1950
      %2269 = vmatprep.subr.mxu0 %v1959
      %2270 = vmatpush1.msra.mxu0 %v1958
      %2271 = vmatprep.subr.mxu0 %v1967
      %2272 = vmatpush1.msra.mxu0 %v1966
      %2273 = vmatprep.subr.mxu0 %v1975
      %2274 = vmatpush1.msra.mxu0 %v1974
      %2275 = vmatprep.subr.mxu0 %v1983
      %2276 = vmatpush1.msra.mxu0 %v1982
      %2277 = vmatprep.subr.mxu0 %v1991
      %2278 = vmatpush1.msra.mxu0 %v1990
      %2279 = vmatprep.subr.mxu0 %v1999
      %2280 = vmatpush1.msra.mxu0 %v1998
      %2281 = vmatprep.subr.mxu0 %v2007
      %2282 = vmatpush1.msra.mxu0 %v2006
      %2283 = vmatprep.subr.mxu0 %v2015
      %2284 = vmatpush1.msra.mxu0 %v2014
      %2285 = vmatprep.subr.mxu0 %v2023
      %2286 = vmatpush1.msra.mxu0 %v2022
      %2287 = vmatprep.subr.mxu0 %v2031
      %2288 = vmatpush1.msra.mxu0 %v2030
      %2289 = vmatprep.subr.mxu0 %v2039
      %2290 = vmatpush1.msra.mxu0 %v2038
      %2291 = vmatprep.subr.mxu0 %v2047
      %2292 = vmatpush1.msra.mxu0 %v2046
      %2293 = vmatprep.subr.mxu0 0.0
      %2294 = vmatpush1.msra.mxu0 0.0
      %2295 = vmatprep.subr.mxu0 0.0
      %2296 = vmatpush1.msra.mxu0 0.0
      %2297 = vmatprep.subr.mxu0 0.0
      %2298 = vmatpush1.msra.mxu0 0.0
      %2299 = vmatprep.subr.mxu0 0.0
      %2300 = vmatpush1.msra.mxu0 0.0
      %2301 = vmatprep.subr.mxu0 0.0
      %2302 = vmatpush1.msra.mxu0 0.0
      %2303 = vmatprep.subr.mxu0 0.0
      %2304 = vmatpush1.msra.mxu0 0.0
      %2305 = vmatprep.subr.mxu0 0.0
      %2306 = vmatpush1.msra.mxu0 0.0
      %2307 = vmatprep.subr.mxu0 0.0
      %2308 = vmatpush1.msra.mxu0 0.0
      %2309 = vmatprep.subr.mxu0 0.0
      %2310 = vmatpush1.msra.mxu0 0.0
      %2311 = vmatprep.subr.mxu0 0.0
      %2312 = vmatpush1.msra.mxu0 0.0
      %2313 = vmatprep.subr.mxu0 0.0
      %2314 = vmatpush1.msra.mxu0 0.0
      %2315 = vmatprep.subr.mxu0 0.0
      %2316 = vmatpush1.msra.mxu0 0.0
      %2317 = vmatprep.subr.mxu0 0.0
      %2318 = vmatpush1.msra.mxu0 0.0
      %2319 = vmatprep.subr.mxu0 0.0
      %2320 = vmatpush1.msra.mxu0 0.0
      %2321 = vmatprep.subr.mxu0 0.0
      %2322 = vmatpush1.msra.mxu0 0.0
      %2323 = vmatprep.subr.mxu0 0.0
      %2324 = vmatpush1.msra.mxu0 0.0
      %2325 = vmatprep.mubr.f32.mxu0 0.0
      %2326 = vmatmul.mubr.f32.gmra.mrb[0].mxu0 %v1919
      %v2327 = vpop.f32.mrb[0].mxu0
      %v2328 = vadd.f32 0.0, %v2327
      %v2329 = vpop.f32.mrb[0].mxu0
      %v2330 = vadd.f32 0.0, %v2329
      %2331 = vdwg.mxu0
      %2333 = vset.pattern.permute.xlu0 0
      %2334 = vperm.xlu0 %2333, %v1918
      %v2335 = vpop.permute.xlu0 %2334
      %v2337 = vrcp.pop %v2335
      %v2338 = vmul.f32 %v2115, %v2337
      %v2339 = vmul.f32 %v2117, %v2337
      %v2340 = vmul.f32 %v2186, %v2337
      %v2341 = vmul.f32 %v2188, %v2337
      %v2342 = vmul.f32 %v2257, %v2337
      %v2343 = vmul.f32 %v2259, %v2337
      %v2344 = vmul.f32 %v2328, %v2337
      %v2345 = vmul.f32 %v2330, %v2337
      %v2346 = vpack.c.bf16 %v2338, %v2338
      %v2347 = vpack.c.bf16 %v2339, %v2339
      %v2348 = vpack.c.bf16 %v2340, %v2340
      %v2349 = vpack.c.bf16 %v2341, %v2341
      %v2350 = vpack.c.bf16 %v2342, %v2342
      %v2351 = vpack.c.bf16 %v2343, %v2343
      %v2352 = vpack.c.bf16 %v2344, %v2344
      %v2353 = vpack.c.bf16 %v2345, %v2345
      %v2354 = vld [vmem:[#allocation10] sm:$0xff]
      %v2355 = vld [vmem:[#allocation10 + $0x8] sm:$0xff]
      %v2356 = vld [vmem:[#allocation10 + $0x10] sm:$0xff]
      %v2357 = vld [vmem:[#allocation10 + $0x18] sm:$0xff]
      %v2358 = vld [vmem:[#allocation10 + $0x20] sm:$0xff]
      %v2359 = vld [vmem:[#allocation10 + $0x28] sm:$0xff]
      %v2360 = vld [vmem:[#allocation10 + $0x30] sm:$0xff]
      %v2361 = vld [vmem:[#allocation10 + $0x38] sm:$0xff]
      %v2362 = vld [vmem:[#allocation10 + $0x40] sm:$0xff]
      %v2363 = vld [vmem:[#allocation10 + $0x48] sm:$0xff]
      %v2364 = vld [vmem:[#allocation10 + $0x50] sm:$0xff]
      %v2365 = vld [vmem:[#allocation10 + $0x58] sm:$0xff]
      %v2366 = vld [vmem:[#allocation10 + $0x60] sm:$0xff]
      %v2367 = vld [vmem:[#allocation10 + $0x68] sm:$0xff]
      %v2368 = vld [vmem:[#allocation10 + $0x70] sm:$0xff]
      %v2369 = vld [vmem:[#allocation10 + $0x78] sm:$0xff]
      %v2370 = vld [vmem:[#allocation10 + $0x80] sm:$0xff]
      %v2371 = vld [vmem:[#allocation10 + $0x88] sm:$0xff]
      %v2372 = vld [vmem:[#allocation10 + $0x90] sm:$0xff]
      %v2373 = vld [vmem:[#allocation10 + $0x98] sm:$0xff]
      %v2374 = vld [vmem:[#allocation10 + $0xa0] sm:$0xff]
      %v2375 = vld [vmem:[#allocation10 + $0xa8] sm:$0xff]
      %v2376 = vld [vmem:[#allocation10 + $0xb0] sm:$0xff]
      %v2377 = vld [vmem:[#allocation10 + $0xb8] sm:$0xff]
      %v2378 = vld [vmem:[#allocation10 + $0xc0] sm:$0xff]
      %v2379 = vld [vmem:[#allocation10 + $0xc8] sm:$0xff]
      %v2380 = vld [vmem:[#allocation10 + $0xd0] sm:$0xff]
      %v2381 = vld [vmem:[#allocation10 + $0xd8] sm:$0xff]
      %v2382 = vld [vmem:[#allocation10 + $0xe0] sm:$0xff]
      %v2383 = vld [vmem:[#allocation10 + $0xe8] sm:$0xff]
      %v2384 = vld [vmem:[#allocation10 + $0xf0] sm:$0xff]
      %v2385 = vld [vmem:[#allocation10 + $0xf8] sm:$0xff]
      %v2386 = vld [vmem:[#allocation10 + $0x100] sm:$0xff]
      %v2387 = vld [vmem:[#allocation10 + $0x108] sm:$0xff]
      %v2388 = vld [vmem:[#allocation10 + $0x110] sm:$0xff]
      %v2389 = vld [vmem:[#allocation10 + $0x118] sm:$0xff]
      %v2390 = vld [vmem:[#allocation10 + $0x120] sm:$0xff]
      %v2391 = vld [vmem:[#allocation10 + $0x128] sm:$0xff]
      %v2392 = vld [vmem:[#allocation10 + $0x130] sm:$0xff]
      %v2393 = vld [vmem:[#allocation10 + $0x138] sm:$0xff]
      %v2394 = vld [vmem:[#allocation10 + $0x140] sm:$0xff]
      %v2395 = vld [vmem:[#allocation10 + $0x148] sm:$0xff]
      %v2396 = vld [vmem:[#allocation10 + $0x150] sm:$0xff]
      %v2397 = vld [vmem:[#allocation10 + $0x158] sm:$0xff]
      %v2398 = vld [vmem:[#allocation10 + $0x160] sm:$0xff]
      %v2399 = vld [vmem:[#allocation10 + $0x168] sm:$0xff]
      %v2400 = vld [vmem:[#allocation10 + $0x170] sm:$0xff]
      %v2401 = vld [vmem:[#allocation10 + $0x178] sm:$0xff]
      %v2402 = vld [vmem:[#allocation10 + $0x180] sm:$0xff]
      %v2403 = vld [vmem:[#allocation10 + $0x188] sm:$0xff]
      %v2404 = vld [vmem:[#allocation10 + $0x190] sm:$0xff]
      %v2405 = vld [vmem:[#allocation10 + $0x198] sm:$0xff]
      %v2406 = vld [vmem:[#allocation10 + $0x1a0] sm:$0xff]
      %v2407 = vld [vmem:[#allocation10 + $0x1a8] sm:$0xff]
      %v2408 = vld [vmem:[#allocation10 + $0x1b0] sm:$0xff]
      %v2409 = vld [vmem:[#allocation10 + $0x1b8] sm:$0xff]
      %v2410 = vld [vmem:[#allocation10 + $0x1c0] sm:$0xff]
      %v2411 = vld [vmem:[#allocation10 + $0x1c8] sm:$0xff]
      %v2412 = vld [vmem:[#allocation10 + $0x1d0] sm:$0xff]
      %v2413 = vld [vmem:[#allocation10 + $0x1d8] sm:$0xff]
      %v2414 = vld [vmem:[#allocation10 + $0x1e0] sm:$0xff]
      %v2415 = vld [vmem:[#allocation10 + $0x1e8] sm:$0xff]
      %v2416 = vld [vmem:[#allocation10 + $0x1f0] sm:$0xff]
      %v2417 = vld [vmem:[#allocation10 + $0x1f8] sm:$0xff]
      %v2418 = vld [vmem:[#allocation10 + $0x200] sm:$0xff]
      %v2419 = vld [vmem:[#allocation10 + $0x208] sm:$0xff]
      %v2420 = vld [vmem:[#allocation10 + $0x210] sm:$0xff]
      %v2421 = vld [vmem:[#allocation10 + $0x218] sm:$0xff]
      %v2422 = vld [vmem:[#allocation10 + $0x220] sm:$0xff]
      %v2423 = vld [vmem:[#allocation10 + $0x228] sm:$0xff]
      %v2424 = vld [vmem:[#allocation10 + $0x230] sm:$0xff]
      %v2425 = vld [vmem:[#allocation10 + $0x238] sm:$0xff]
      %v2426 = vld [vmem:[#allocation10 + $0x240] sm:$0xff]
      %v2427 = vld [vmem:[#allocation10 + $0x248] sm:$0xff]
      %v2428 = vld [vmem:[#allocation10 + $0x250] sm:$0xff]
      %v2429 = vld [vmem:[#allocation10 + $0x258] sm:$0xff]
      %v2430 = vld [vmem:[#allocation10 + $0x260] sm:$0xff]
      %v2431 = vld [vmem:[#allocation10 + $0x268] sm:$0xff]
      %v2432 = vld [vmem:[#allocation10 + $0x270] sm:$0xff]
      %v2433 = vld [vmem:[#allocation10 + $0x278] sm:$0xff]
      %v2434 = vld [vmem:[#allocation10 + $0x280] sm:$0xff]
      %v2435 = vld [vmem:[#allocation10 + $0x288] sm:$0xff]
      %v2436 = vld [vmem:[#allocation10 + $0x290] sm:$0xff]
      %v2437 = vld [vmem:[#allocation10 + $0x298] sm:$0xff]
      %v2438 = vld [vmem:[#allocation10 + $0x2a0] sm:$0xff]
      %v2439 = vld [vmem:[#allocation10 + $0x2a8] sm:$0xff]
      %v2440 = vld [vmem:[#allocation10 + $0x2b0] sm:$0xff]
      %v2441 = vld [vmem:[#allocation10 + $0x2b8] sm:$0xff]
      %v2442 = vld [vmem:[#allocation10 + $0x2c0] sm:$0xff]
      %v2443 = vld [vmem:[#allocation10 + $0x2c8] sm:$0xff]
      %v2444 = vld [vmem:[#allocation10 + $0x2d0] sm:$0xff]
      %v2445 = vld [vmem:[#allocation10 + $0x2d8] sm:$0xff]
      %v2446 = vld [vmem:[#allocation10 + $0x2e0] sm:$0xff]
      %v2447 = vld [vmem:[#allocation10 + $0x2e8] sm:$0xff]
      %v2448 = vld [vmem:[#allocation10 + $0x2f0] sm:$0xff]
      %v2449 = vld [vmem:[#allocation10 + $0x2f8] sm:$0xff]
      %v2450 = vld [vmem:[#allocation10 + $0x300] sm:$0xff]
      %v2451 = vld [vmem:[#allocation10 + $0x308] sm:$0xff]
      %v2452 = vld [vmem:[#allocation10 + $0x310] sm:$0xff]
      %v2453 = vld [vmem:[#allocation10 + $0x318] sm:$0xff]
      %v2454 = vld [vmem:[#allocation10 + $0x320] sm:$0xff]
      %v2455 = vld [vmem:[#allocation10 + $0x328] sm:$0xff]
      %v2456 = vld [vmem:[#allocation10 + $0x330] sm:$0xff]
      %v2457 = vld [vmem:[#allocation10 + $0x338] sm:$0xff]
      %v2458 = vld [vmem:[#allocation10 + $0x340] sm:$0xff]
      %v2459 = vld [vmem:[#allocation10 + $0x348] sm:$0xff]
      %v2460 = vld [vmem:[#allocation10 + $0x350] sm:$0xff]
      %v2461 = vld [vmem:[#allocation10 + $0x358] sm:$0xff]
      %v2462 = vld [vmem:[#allocation10 + $0x360] sm:$0xff]
      %v2463 = vld [vmem:[#allocation10 + $0x368] sm:$0xff]
      %v2464 = vld [vmem:[#allocation10 + $0x370] sm:$0xff]
      %v2465 = vld [vmem:[#allocation10 + $0x378] sm:$0xff]
      %v2466 = vld [vmem:[#allocation10 + $0x380] sm:$0xff]
      %v2467 = vld [vmem:[#allocation10 + $0x388] sm:$0xff]
      %v2468 = vld [vmem:[#allocation10 + $0x390] sm:$0xff]
      %v2469 = vld [vmem:[#allocation10 + $0x398] sm:$0xff]
      %v2470 = vld [vmem:[#allocation10 + $0x3a0] sm:$0xff]
      %v2471 = vld [vmem:[#allocation10 + $0x3a8] sm:$0xff]
      %v2472 = vld [vmem:[#allocation10 + $0x3b0] sm:$0xff]
      %v2473 = vld [vmem:[#allocation10 + $0x3b8] sm:$0xff]
      %v2474 = vld [vmem:[#allocation10 + $0x3c0] sm:$0xff]
      %v2475 = vld [vmem:[#allocation10 + $0x3c8] sm:$0xff]
      %v2476 = vld [vmem:[#allocation10 + $0x3d0] sm:$0xff]
      %v2477 = vld [vmem:[#allocation10 + $0x3d8] sm:$0xff]
      %v2478 = vld [vmem:[#allocation10 + $0x3e0] sm:$0xff]
      %v2479 = vld [vmem:[#allocation10 + $0x3e8] sm:$0xff]
      %v2480 = vld [vmem:[#allocation10 + $0x3f0] sm:$0xff]
      %v2481 = vld [vmem:[#allocation10 + $0x3f8] sm:$0xff]
      %v2482 = vld [vmem:[#allocation10 + $0x400] sm:$0xff]
      %v2483 = vld [vmem:[#allocation10 + $0x408] sm:$0xff]
      %v2484 = vld [vmem:[#allocation10 + $0x410] sm:$0xff]
      %v2485 = vld [vmem:[#allocation10 + $0x418] sm:$0xff]
      %v2486 = vld [vmem:[#allocation10 + $0x420] sm:$0xff]
      %v2487 = vld [vmem:[#allocation10 + $0x428] sm:$0xff]
      %v2488 = vld [vmem:[#allocation10 + $0x430] sm:$0xff]
      %v2489 = vld [vmem:[#allocation10 + $0x438] sm:$0xff]
      %v2490 = vld [vmem:[#allocation10 + $0x440] sm:$0xff]
      %v2491 = vld [vmem:[#allocation10 + $0x448] sm:$0xff]
      %v2492 = vld [vmem:[#allocation10 + $0x450] sm:$0xff]
      %v2493 = vld [vmem:[#allocation10 + $0x458] sm:$0xff]
      %v2494 = vld [vmem:[#allocation10 + $0x460] sm:$0xff]
      %v2495 = vld [vmem:[#allocation10 + $0x468] sm:$0xff]
      %v2496 = vld [vmem:[#allocation10 + $0x470] sm:$0xff]
      %v2497 = vld [vmem:[#allocation10 + $0x478] sm:$0xff]
      %v2498 = vld [vmem:[#allocation10 + $0x480] sm:$0xff]
      %v2499 = vld [vmem:[#allocation10 + $0x488] sm:$0xff]
      %v2500 = vld [vmem:[#allocation10 + $0x490] sm:$0xff]
      %v2501 = vld [vmem:[#allocation10 + $0x498] sm:$0xff]
      %v2502 = vld [vmem:[#allocation10 + $0x4a0] sm:$0xff]
      %v2503 = vld [vmem:[#allocation10 + $0x4a8] sm:$0xff]
      %v2504 = vld [vmem:[#allocation10 + $0x4b0] sm:$0xff]
      %v2505 = vld [vmem:[#allocation10 + $0x4b8] sm:$0xff]
      %v2506 = vld [vmem:[#allocation10 + $0x4c0] sm:$0xff]
      %v2507 = vld [vmem:[#allocation10 + $0x4c8] sm:$0xff]
      %v2508 = vld [vmem:[#allocation10 + $0x4d0] sm:$0xff]
      %v2509 = vld [vmem:[#allocation10 + $0x4d8] sm:$0xff]
      %v2510 = vld [vmem:[#allocation10 + $0x4e0] sm:$0xff]
      %v2511 = vld [vmem:[#allocation10 + $0x4e8] sm:$0xff]
      %v2512 = vld [vmem:[#allocation10 + $0x4f0] sm:$0xff]
      %v2513 = vld [vmem:[#allocation10 + $0x4f8] sm:$0xff]
      %v2514 = vld [vmem:[#allocation10 + $0x500] sm:$0xff]
      %v2515 = vld [vmem:[#allocation10 + $0x508] sm:$0xff]
      %v2516 = vld [vmem:[#allocation10 + $0x510] sm:$0xff]
      %v2517 = vld [vmem:[#allocation10 + $0x518] sm:$0xff]
      %v2518 = vld [vmem:[#allocation10 + $0x520] sm:$0xff]
      %v2519 = vld [vmem:[#allocation10 + $0x528] sm:$0xff]
      %v2520 = vld [vmem:[#allocation10 + $0x530] sm:$0xff]
      %v2521 = vld [vmem:[#allocation10 + $0x538] sm:$0xff]
      %v2522 = vld [vmem:[#allocation10 + $0x540] sm:$0xff]
      %v2523 = vld [vmem:[#allocation10 + $0x548] sm:$0xff]
      %v2524 = vld [vmem:[#allocation10 + $0x550] sm:$0xff]
      %v2525 = vld [vmem:[#allocation10 + $0x558] sm:$0xff]
      %v2526 = vld [vmem:[#allocation10 + $0x560] sm:$0xff]
      %v2527 = vld [vmem:[#allocation10 + $0x568] sm:$0xff]
      %v2528 = vld [vmem:[#allocation10 + $0x570] sm:$0xff]
      %v2529 = vld [vmem:[#allocation10 + $0x578] sm:$0xff]
      %v2530 = vld [vmem:[#allocation10 + $0x580] sm:$0xff]
      %v2531 = vld [vmem:[#allocation10 + $0x588] sm:$0xff]
      %v2532 = vld [vmem:[#allocation10 + $0x590] sm:$0xff]
      %v2533 = vld [vmem:[#allocation10 + $0x598] sm:$0xff]
      %v2534 = vld [vmem:[#allocation10 + $0x5a0] sm:$0xff]
      %v2535 = vld [vmem:[#allocation10 + $0x5a8] sm:$0xff]
      %v2536 = vld [vmem:[#allocation10 + $0x5b0] sm:$0xff]
      %v2537 = vld [vmem:[#allocation10 + $0x5b8] sm:$0xff]
      %v2538 = vld [vmem:[#allocation10 + $0x5c0] sm:$0xff]
      %v2539 = vld [vmem:[#allocation10 + $0x5c8] sm:$0xff]
      %v2540 = vld [vmem:[#allocation10 + $0x5d0] sm:$0xff]
      %v2541 = vld [vmem:[#allocation10 + $0x5d8] sm:$0xff]
      %v2542 = vld [vmem:[#allocation10 + $0x5e0] sm:$0xff]
      %v2543 = vld [vmem:[#allocation10 + $0x5e8] sm:$0xff]
      %v2544 = vld [vmem:[#allocation10 + $0x5f0] sm:$0xff]
      %v2545 = vld [vmem:[#allocation10 + $0x5f8] sm:$0xff]
      %v2546 = vld [vmem:[#allocation10 + $0x600] sm:$0xff]
      %v2547 = vld [vmem:[#allocation10 + $0x608] sm:$0xff]
      %v2548 = vld [vmem:[#allocation10 + $0x610] sm:$0xff]
      %v2549 = vld [vmem:[#allocation10 + $0x618] sm:$0xff]
      %v2550 = vld [vmem:[#allocation10 + $0x620] sm:$0xff]
      %v2551 = vld [vmem:[#allocation10 + $0x628] sm:$0xff]
      %v2552 = vld [vmem:[#allocation10 + $0x630] sm:$0xff]
      %v2553 = vld [vmem:[#allocation10 + $0x638] sm:$0xff]
      %v2554 = vld [vmem:[#allocation10 + $0x640] sm:$0xff]
      %v2555 = vld [vmem:[#allocation10 + $0x648] sm:$0xff]
      %v2556 = vld [vmem:[#allocation10 + $0x650] sm:$0xff]
      %v2557 = vld [vmem:[#allocation10 + $0x658] sm:$0xff]
      %v2558 = vld [vmem:[#allocation10 + $0x660] sm:$0xff]
      %v2559 = vld [vmem:[#allocation10 + $0x668] sm:$0xff]
      %v2560 = vld [vmem:[#allocation10 + $0x670] sm:$0xff]
      %v2561 = vld [vmem:[#allocation10 + $0x678] sm:$0xff]
      %v2562 = vld [vmem:[#allocation10 + $0x680] sm:$0xff]
      %v2563 = vld [vmem:[#allocation10 + $0x688] sm:$0xff]
      %v2564 = vld [vmem:[#allocation10 + $0x690] sm:$0xff]
      %v2565 = vld [vmem:[#allocation10 + $0x698] sm:$0xff]
      %v2566 = vld [vmem:[#allocation10 + $0x6a0] sm:$0xff]
      %v2567 = vld [vmem:[#allocation10 + $0x6a8] sm:$0xff]
      %v2568 = vld [vmem:[#allocation10 + $0x6b0] sm:$0xff]
      %v2569 = vld [vmem:[#allocation10 + $0x6b8] sm:$0xff]
      %v2570 = vld [vmem:[#allocation10 + $0x6c0] sm:$0xff]
      %v2571 = vld [vmem:[#allocation10 + $0x6c8] sm:$0xff]
      %v2572 = vld [vmem:[#allocation10 + $0x6d0] sm:$0xff]
      %v2573 = vld [vmem:[#allocation10 + $0x6d8] sm:$0xff]
      %v2574 = vld [vmem:[#allocation10 + $0x6e0] sm:$0xff]
      %v2575 = vld [vmem:[#allocation10 + $0x6e8] sm:$0xff]
      %v2576 = vld [vmem:[#allocation10 + $0x6f0] sm:$0xff]
      %v2577 = vld [vmem:[#allocation10 + $0x6f8] sm:$0xff]
      %v2578 = vld [vmem:[#allocation10 + $0x700] sm:$0xff]
      %v2579 = vld [vmem:[#allocation10 + $0x708] sm:$0xff]
      %v2580 = vld [vmem:[#allocation10 + $0x710] sm:$0xff]
      %v2581 = vld [vmem:[#allocation10 + $0x718] sm:$0xff]
      %v2582 = vld [vmem:[#allocation10 + $0x720] sm:$0xff]
      %v2583 = vld [vmem:[#allocation10 + $0x728] sm:$0xff]
      %v2584 = vld [vmem:[#allocation10 + $0x730] sm:$0xff]
      %v2585 = vld [vmem:[#allocation10 + $0x738] sm:$0xff]
      %v2586 = vld [vmem:[#allocation10 + $0x740] sm:$0xff]
      %v2587 = vld [vmem:[#allocation10 + $0x748] sm:$0xff]
      %v2588 = vld [vmem:[#allocation10 + $0x750] sm:$0xff]
      %v2589 = vld [vmem:[#allocation10 + $0x758] sm:$0xff]
      %v2590 = vld [vmem:[#allocation10 + $0x760] sm:$0xff]
      %v2591 = vld [vmem:[#allocation10 + $0x768] sm:$0xff]
      %v2592 = vld [vmem:[#allocation10 + $0x770] sm:$0xff]
      %v2593 = vld [vmem:[#allocation10 + $0x778] sm:$0xff]
      %v2594 = vld [vmem:[#allocation10 + $0x780] sm:$0xff]
      %v2595 = vld [vmem:[#allocation10 + $0x788] sm:$0xff]
      %v2596 = vld [vmem:[#allocation10 + $0x790] sm:$0xff]
      %v2597 = vld [vmem:[#allocation10 + $0x798] sm:$0xff]
      %v2598 = vld [vmem:[#allocation10 + $0x7a0] sm:$0xff]
      %v2599 = vld [vmem:[#allocation10 + $0x7a8] sm:$0xff]
      %v2600 = vld [vmem:[#allocation10 + $0x7b0] sm:$0xff]
      %v2601 = vld [vmem:[#allocation10 + $0x7b8] sm:$0xff]
      %v2602 = vld [vmem:[#allocation10 + $0x7c0] sm:$0xff]
      %v2603 = vld [vmem:[#allocation10 + $0x7c8] sm:$0xff]
      %v2604 = vld [vmem:[#allocation10 + $0x7d0] sm:$0xff]
      %v2605 = vld [vmem:[#allocation10 + $0x7d8] sm:$0xff]
      %v2606 = vld [vmem:[#allocation10 + $0x7e0] sm:$0xff]
      %v2607 = vld [vmem:[#allocation10 + $0x7e8] sm:$0xff]
      %v2608 = vld [vmem:[#allocation10 + $0x7f0] sm:$0xff]
      %v2609 = vld [vmem:[#allocation10 + $0x7f8] sm:$0xff]
      %v2610 = vld [vmem:[#allocation10 + $0x800] sm:$0xff]
      %v2611 = vld [vmem:[#allocation10 + $0x808] sm:$0xff]
      %v2612 = vld [vmem:[#allocation10 + $0x810] sm:$0xff]
      %v2613 = vld [vmem:[#allocation10 + $0x818] sm:$0xff]
      %v2614 = vld [vmem:[#allocation10 + $0x820] sm:$0xff]
      %v2615 = vld [vmem:[#allocation10 + $0x828] sm:$0xff]
      %v2616 = vld [vmem:[#allocation10 + $0x830] sm:$0xff]
      %v2617 = vld [vmem:[#allocation10 + $0x838] sm:$0xff]
      %v2618 = vld [vmem:[#allocation10 + $0x840] sm:$0xff]
      %v2619 = vld [vmem:[#allocation10 + $0x848] sm:$0xff]
      %v2620 = vld [vmem:[#allocation10 + $0x850] sm:$0xff]
      %v2621 = vld [vmem:[#allocation10 + $0x858] sm:$0xff]
      %v2622 = vld [vmem:[#allocation10 + $0x860] sm:$0xff]
      %v2623 = vld [vmem:[#allocation10 + $0x868] sm:$0xff]
      %v2624 = vld [vmem:[#allocation10 + $0x870] sm:$0xff]
      %v2625 = vld [vmem:[#allocation10 + $0x878] sm:$0xff]
      %v2626 = vld [vmem:[#allocation10 + $0x880] sm:$0xff]
      %v2627 = vld [vmem:[#allocation10 + $0x888] sm:$0xff]
      %v2628 = vld [vmem:[#allocation10 + $0x890] sm:$0xff]
      %v2629 = vld [vmem:[#allocation10 + $0x898] sm:$0xff]
      %v2630 = vld [vmem:[#allocation10 + $0x8a0] sm:$0xff]
      %v2631 = vld [vmem:[#allocation10 + $0x8a8] sm:$0xff]
      %v2632 = vld [vmem:[#allocation10 + $0x8b0] sm:$0xff]
      %v2633 = vld [vmem:[#allocation10 + $0x8b8] sm:$0xff]
      %v2634 = vld [vmem:[#allocation10 + $0x8c0] sm:$0xff]
      %v2635 = vld [vmem:[#allocation10 + $0x8c8] sm:$0xff]
      %v2636 = vld [vmem:[#allocation10 + $0x8d0] sm:$0xff]
      %v2637 = vld [vmem:[#allocation10 + $0x8d8] sm:$0xff]
      %v2638 = vld [vmem:[#allocation10 + $0x8e0] sm:$0xff]
      %v2639 = vld [vmem:[#allocation10 + $0x8e8] sm:$0xff]
      %v2640 = vld [vmem:[#allocation10 + $0x8f0] sm:$0xff]
      %v2641 = vld [vmem:[#allocation10 + $0x8f8] sm:$0xff]
      %v2642 = vld [vmem:[#allocation10 + $0x900] sm:$0xff]
      %v2643 = vld [vmem:[#allocation10 + $0x908] sm:$0xff]
      %v2644 = vld [vmem:[#allocation10 + $0x910] sm:$0xff]
      %v2645 = vld [vmem:[#allocation10 + $0x918] sm:$0xff]
      %v2646 = vld [vmem:[#allocation10 + $0x920] sm:$0xff]
      %v2647 = vld [vmem:[#allocation10 + $0x928] sm:$0xff]
      %v2648 = vld [vmem:[#allocation10 + $0x930] sm:$0xff]
      %v2649 = vld [vmem:[#allocation10 + $0x938] sm:$0xff]
      %v2650 = vld [vmem:[#allocation10 + $0x940] sm:$0xff]
      %v2651 = vld [vmem:[#allocation10 + $0x948] sm:$0xff]
      %v2652 = vld [vmem:[#allocation10 + $0x950] sm:$0xff]
      %v2653 = vld [vmem:[#allocation10 + $0x958] sm:$0xff]
      %v2654 = vld [vmem:[#allocation10 + $0x960] sm:$0xff]
      %v2655 = vld [vmem:[#allocation10 + $0x968] sm:$0xff]
      %v2656 = vld [vmem:[#allocation10 + $0x970] sm:$0xff]
      %v2657 = vld [vmem:[#allocation10 + $0x978] sm:$0xff]
      %v2658 = vld [vmem:[#allocation10 + $0x980] sm:$0xff]
      %v2659 = vld [vmem:[#allocation10 + $0x988] sm:$0xff]
      %v2660 = vld [vmem:[#allocation10 + $0x990] sm:$0xff]
      %v2661 = vld [vmem:[#allocation10 + $0x998] sm:$0xff]
      %v2662 = vld [vmem:[#allocation10 + $0x9a0] sm:$0xff]
      %v2663 = vld [vmem:[#allocation10 + $0x9a8] sm:$0xff]
      %v2664 = vld [vmem:[#allocation10 + $0x9b0] sm:$0xff]
      %v2665 = vld [vmem:[#allocation10 + $0x9b8] sm:$0xff]
      %v2666 = vld [vmem:[#allocation10 + $0x9c0] sm:$0xff]
      %v2667 = vld [vmem:[#allocation10 + $0x9c8] sm:$0xff]
      %v2668 = vld [vmem:[#allocation10 + $0x9d0] sm:$0xff]
      %v2669 = vld [vmem:[#allocation10 + $0x9d8] sm:$0xff]
      %v2670 = vld [vmem:[#allocation10 + $0x9e0] sm:$0xff]
      %v2671 = vld [vmem:[#allocation10 + $0x9e8] sm:$0xff]
      %v2672 = vld [vmem:[#allocation10 + $0x9f0] sm:$0xff]
      %v2673 = vld [vmem:[#allocation10 + $0x9f8] sm:$0xff]
      %v2674 = vld [vmem:[#allocation10 + $0xa00] sm:$0xff]
      %v2675 = vld [vmem:[#allocation10 + $0xa08] sm:$0xff]
      %v2676 = vld [vmem:[#allocation10 + $0xa10] sm:$0xff]
      %v2677 = vld [vmem:[#allocation10 + $0xa18] sm:$0xff]
      %v2678 = vld [vmem:[#allocation10 + $0xa20] sm:$0xff]
      %v2679 = vld [vmem:[#allocation10 + $0xa28] sm:$0xff]
      %v2680 = vld [vmem:[#allocation10 + $0xa30] sm:$0xff]
      %v2681 = vld [vmem:[#allocation10 + $0xa38] sm:$0xff]
      %v2682 = vld [vmem:[#allocation10 + $0xa40] sm:$0xff]
      %v2683 = vld [vmem:[#allocation10 + $0xa48] sm:$0xff]
      %v2684 = vld [vmem:[#allocation10 + $0xa50] sm:$0xff]
      %v2685 = vld [vmem:[#allocation10 + $0xa58] sm:$0xff]
      %v2686 = vld [vmem:[#allocation10 + $0xa60] sm:$0xff]
      %v2687 = vld [vmem:[#allocation10 + $0xa68] sm:$0xff]
      %v2688 = vld [vmem:[#allocation10 + $0xa70] sm:$0xff]
      %v2689 = vld [vmem:[#allocation10 + $0xa78] sm:$0xff]
      %v2690 = vld [vmem:[#allocation10 + $0xa80] sm:$0xff]
      %v2691 = vld [vmem:[#allocation10 + $0xa88] sm:$0xff]
      %v2692 = vld [vmem:[#allocation10 + $0xa90] sm:$0xff]
      %v2693 = vld [vmem:[#allocation10 + $0xa98] sm:$0xff]
      %v2694 = vld [vmem:[#allocation10 + $0xaa0] sm:$0xff]
      %v2695 = vld [vmem:[#allocation10 + $0xaa8] sm:$0xff]
      %v2696 = vld [vmem:[#allocation10 + $0xab0] sm:$0xff]
      %v2697 = vld [vmem:[#allocation10 + $0xab8] sm:$0xff]
      %v2698 = vld [vmem:[#allocation10 + $0xac0] sm:$0xff]
      %v2699 = vld [vmem:[#allocation10 + $0xac8] sm:$0xff]
      %v2700 = vld [vmem:[#allocation10 + $0xad0] sm:$0xff]
      %v2701 = vld [vmem:[#allocation10 + $0xad8] sm:$0xff]
      %v2702 = vld [vmem:[#allocation10 + $0xae0] sm:$0xff]
      %v2703 = vld [vmem:[#allocation10 + $0xae8] sm:$0xff]
      %v2704 = vld [vmem:[#allocation10 + $0xaf0] sm:$0xff]
      %v2705 = vld [vmem:[#allocation10 + $0xaf8] sm:$0xff]
      %v2706 = vld [vmem:[#allocation10 + $0xb00] sm:$0xff]
      %v2707 = vld [vmem:[#allocation10 + $0xb08] sm:$0xff]
      %v2708 = vld [vmem:[#allocation10 + $0xb10] sm:$0xff]
      %v2709 = vld [vmem:[#allocation10 + $0xb18] sm:$0xff]
      %v2710 = vld [vmem:[#allocation10 + $0xb20] sm:$0xff]
      %v2711 = vld [vmem:[#allocation10 + $0xb28] sm:$0xff]
      %v2712 = vld [vmem:[#allocation10 + $0xb30] sm:$0xff]
      %v2713 = vld [vmem:[#allocation10 + $0xb38] sm:$0xff]
      %v2714 = vld [vmem:[#allocation10 + $0xb40] sm:$0xff]
      %v2715 = vld [vmem:[#allocation10 + $0xb48] sm:$0xff]
      %v2716 = vld [vmem:[#allocation10 + $0xb50] sm:$0xff]
      %v2717 = vld [vmem:[#allocation10 + $0xb58] sm:$0xff]
      %v2718 = vld [vmem:[#allocation10 + $0xb60] sm:$0xff]
      %v2719 = vld [vmem:[#allocation10 + $0xb68] sm:$0xff]
      %v2720 = vld [vmem:[#allocation10 + $0xb70] sm:$0xff]
      %v2721 = vld [vmem:[#allocation10 + $0xb78] sm:$0xff]
      %v2722 = vld [vmem:[#allocation10 + $0xb80] sm:$0xff]
      %v2723 = vld [vmem:[#allocation10 + $0xb88] sm:$0xff]
      %v2724 = vld [vmem:[#allocation10 + $0xb90] sm:$0xff]
      %v2725 = vld [vmem:[#allocation10 + $0xb98] sm:$0xff]
      %v2726 = vld [vmem:[#allocation10 + $0xba0] sm:$0xff]
      %v2727 = vld [vmem:[#allocation10 + $0xba8] sm:$0xff]
      %v2728 = vld [vmem:[#allocation10 + $0xbb0] sm:$0xff]
      %v2729 = vld [vmem:[#allocation10 + $0xbb8] sm:$0xff]
      %v2730 = vld [vmem:[#allocation10 + $0xbc0] sm:$0xff]
      %v2731 = vld [vmem:[#allocation10 + $0xbc8] sm:$0xff]
      %v2732 = vld [vmem:[#allocation10 + $0xbd0] sm:$0xff]
      %v2733 = vld [vmem:[#allocation10 + $0xbd8] sm:$0xff]
      %v2734 = vld [vmem:[#allocation10 + $0xbe0] sm:$0xff]
      %v2735 = vld [vmem:[#allocation10 + $0xbe8] sm:$0xff]
      %v2736 = vld [vmem:[#allocation10 + $0xbf0] sm:$0xff]
      %v2737 = vld [vmem:[#allocation10 + $0xbf8] sm:$0xff]
      %v2738 = vld [vmem:[#allocation10 + $0xc00] sm:$0xff]
      %v2739 = vld [vmem:[#allocation10 + $0xc08] sm:$0xff]
      %v2740 = vld [vmem:[#allocation10 + $0xc10] sm:$0xff]
      %v2741 = vld [vmem:[#allocation10 + $0xc18] sm:$0xff]
      %v2742 = vld [vmem:[#allocation10 + $0xc20] sm:$0xff]
      %v2743 = vld [vmem:[#allocation10 + $0xc28] sm:$0xff]
      %v2744 = vld [vmem:[#allocation10 + $0xc30] sm:$0xff]
      %v2745 = vld [vmem:[#allocation10 + $0xc38] sm:$0xff]
      %v2746 = vld [vmem:[#allocation10 + $0xc40] sm:$0xff]
      %v2747 = vld [vmem:[#allocation10 + $0xc48] sm:$0xff]
      %v2748 = vld [vmem:[#allocation10 + $0xc50] sm:$0xff]
      %v2749 = vld [vmem:[#allocation10 + $0xc58] sm:$0xff]
      %v2750 = vld [vmem:[#allocation10 + $0xc60] sm:$0xff]
      %v2751 = vld [vmem:[#allocation10 + $0xc68] sm:$0xff]
      %v2752 = vld [vmem:[#allocation10 + $0xc70] sm:$0xff]
      %v2753 = vld [vmem:[#allocation10 + $0xc78] sm:$0xff]
      %v2754 = vld [vmem:[#allocation10 + $0xc80] sm:$0xff]
      %v2755 = vld [vmem:[#allocation10 + $0xc88] sm:$0xff]
      %v2756 = vld [vmem:[#allocation10 + $0xc90] sm:$0xff]
      %v2757 = vld [vmem:[#allocation10 + $0xc98] sm:$0xff]
      %v2758 = vld [vmem:[#allocation10 + $0xca0] sm:$0xff]
      %v2759 = vld [vmem:[#allocation10 + $0xca8] sm:$0xff]
      %v2760 = vld [vmem:[#allocation10 + $0xcb0] sm:$0xff]
      %v2761 = vld [vmem:[#allocation10 + $0xcb8] sm:$0xff]
      %v2762 = vld [vmem:[#allocation10 + $0xcc0] sm:$0xff]
      %v2763 = vld [vmem:[#allocation10 + $0xcc8] sm:$0xff]
      %v2764 = vld [vmem:[#allocation10 + $0xcd0] sm:$0xff]
      %v2765 = vld [vmem:[#allocation10 + $0xcd8] sm:$0xff]
      %v2766 = vld [vmem:[#allocation10 + $0xce0] sm:$0xff]
      %v2767 = vld [vmem:[#allocation10 + $0xce8] sm:$0xff]
      %v2768 = vld [vmem:[#allocation10 + $0xcf0] sm:$0xff]
      %v2769 = vld [vmem:[#allocation10 + $0xcf8] sm:$0xff]
      %v2770 = vld [vmem:[#allocation10 + $0xd00] sm:$0xff]
      %v2771 = vld [vmem:[#allocation10 + $0xd08] sm:$0xff]
      %v2772 = vld [vmem:[#allocation10 + $0xd10] sm:$0xff]
      %v2773 = vld [vmem:[#allocation10 + $0xd18] sm:$0xff]
      %v2774 = vld [vmem:[#allocation10 + $0xd20] sm:$0xff]
      %v2775 = vld [vmem:[#allocation10 + $0xd28] sm:$0xff]
      %v2776 = vld [vmem:[#allocation10 + $0xd30] sm:$0xff]
      %v2777 = vld [vmem:[#allocation10 + $0xd38] sm:$0xff]
      %v2778 = vld [vmem:[#allocation10 + $0xd40] sm:$0xff]
      %v2779 = vld [vmem:[#allocation10 + $0xd48] sm:$0xff]
      %v2780 = vld [vmem:[#allocation10 + $0xd50] sm:$0xff]
      %v2781 = vld [vmem:[#allocation10 + $0xd58] sm:$0xff]
      %v2782 = vld [vmem:[#allocation10 + $0xd60] sm:$0xff]
      %v2783 = vld [vmem:[#allocation10 + $0xd68] sm:$0xff]
      %v2784 = vld [vmem:[#allocation10 + $0xd70] sm:$0xff]
      %v2785 = vld [vmem:[#allocation10 + $0xd78] sm:$0xff]
      %v2786 = vld [vmem:[#allocation10 + $0xd80] sm:$0xff]
      %v2787 = vld [vmem:[#allocation10 + $0xd88] sm:$0xff]
      %v2788 = vld [vmem:[#allocation10 + $0xd90] sm:$0xff]
      %v2789 = vld [vmem:[#allocation10 + $0xd98] sm:$0xff]
      %v2790 = vld [vmem:[#allocation10 + $0xda0] sm:$0xff]
      %v2791 = vld [vmem:[#allocation10 + $0xda8] sm:$0xff]
      %v2792 = vld [vmem:[#allocation10 + $0xdb0] sm:$0xff]
      %v2793 = vld [vmem:[#allocation10 + $0xdb8] sm:$0xff]
      %v2794 = vld [vmem:[#allocation10 + $0xdc0] sm:$0xff]
      %v2795 = vld [vmem:[#allocation10 + $0xdc8] sm:$0xff]
      %v2796 = vld [vmem:[#allocation10 + $0xdd0] sm:$0xff]
      %v2797 = vld [vmem:[#allocation10 + $0xdd8] sm:$0xff]
      %v2798 = vld [vmem:[#allocation10 + $0xde0] sm:$0xff]
      %v2799 = vld [vmem:[#allocation10 + $0xde8] sm:$0xff]
      %v2800 = vld [vmem:[#allocation10 + $0xdf0] sm:$0xff]
      %v2801 = vld [vmem:[#allocation10 + $0xdf8] sm:$0xff]
      %v2802 = vld [vmem:[#allocation10 + $0xe00] sm:$0xff]
      %v2803 = vld [vmem:[#allocation10 + $0xe08] sm:$0xff]
      %v2804 = vld [vmem:[#allocation10 + $0xe10] sm:$0xff]
      %v2805 = vld [vmem:[#allocation10 + $0xe18] sm:$0xff]
      %v2806 = vld [vmem:[#allocation10 + $0xe20] sm:$0xff]
      %v2807 = vld [vmem:[#allocation10 + $0xe28] sm:$0xff]
      %v2808 = vld [vmem:[#allocation10 + $0xe30] sm:$0xff]
      %v2809 = vld [vmem:[#allocation10 + $0xe38] sm:$0xff]
      %v2810 = vld [vmem:[#allocation10 + $0xe40] sm:$0xff]
      %v2811 = vld [vmem:[#allocation10 + $0xe48] sm:$0xff]
      %v2812 = vld [vmem:[#allocation10 + $0xe50] sm:$0xff]
      %v2813 = vld [vmem:[#allocation10 + $0xe58] sm:$0xff]
      %v2814 = vld [vmem:[#allocation10 + $0xe60] sm:$0xff]
      %v2815 = vld [vmem:[#allocation10 + $0xe68] sm:$0xff]
      %v2816 = vld [vmem:[#allocation10 + $0xe70] sm:$0xff]
      %v2817 = vld [vmem:[#allocation10 + $0xe78] sm:$0xff]
      %v2818 = vld [vmem:[#allocation10 + $0xe80] sm:$0xff]
      %v2819 = vld [vmem:[#allocation10 + $0xe88] sm:$0xff]
      %v2820 = vld [vmem:[#allocation10 + $0xe90] sm:$0xff]
      %v2821 = vld [vmem:[#allocation10 + $0xe98] sm:$0xff]
      %v2822 = vld [vmem:[#allocation10 + $0xea0] sm:$0xff]
      %v2823 = vld [vmem:[#allocation10 + $0xea8] sm:$0xff]
      %v2824 = vld [vmem:[#allocation10 + $0xeb0] sm:$0xff]
      %v2825 = vld [vmem:[#allocation10 + $0xeb8] sm:$0xff]
      %v2826 = vld [vmem:[#allocation10 + $0xec0] sm:$0xff]
      %v2827 = vld [vmem:[#allocation10 + $0xec8] sm:$0xff]
      %v2828 = vld [vmem:[#allocation10 + $0xed0] sm:$0xff]
      %v2829 = vld [vmem:[#allocation10 + $0xed8] sm:$0xff]
      %v2830 = vld [vmem:[#allocation10 + $0xee0] sm:$0xff]
      %v2831 = vld [vmem:[#allocation10 + $0xee8] sm:$0xff]
      %v2832 = vld [vmem:[#allocation10 + $0xef0] sm:$0xff]
      %v2833 = vld [vmem:[#allocation10 + $0xef8] sm:$0xff]
      %v2834 = vld [vmem:[#allocation10 + $0xf00] sm:$0xff]
      %v2835 = vld [vmem:[#allocation10 + $0xf08] sm:$0xff]
      %v2836 = vld [vmem:[#allocation10 + $0xf10] sm:$0xff]
      %v2837 = vld [vmem:[#allocation10 + $0xf18] sm:$0xff]
      %v2838 = vld [vmem:[#allocation10 + $0xf20] sm:$0xff]
      %v2839 = vld [vmem:[#allocation10 + $0xf28] sm:$0xff]
      %v2840 = vld [vmem:[#allocation10 + $0xf30] sm:$0xff]
      %v2841 = vld [vmem:[#allocation10 + $0xf38] sm:$0xff]
      %v2842 = vld [vmem:[#allocation10 + $0xf40] sm:$0xff]
      %v2843 = vld [vmem:[#allocation10 + $0xf48] sm:$0xff]
      %v2844 = vld [vmem:[#allocation10 + $0xf50] sm:$0xff]
      %v2845 = vld [vmem:[#allocation10 + $0xf58] sm:$0xff]
      %v2846 = vld [vmem:[#allocation10 + $0xf60] sm:$0xff]
      %v2847 = vld [vmem:[#allocation10 + $0xf68] sm:$0xff]
      %v2848 = vld [vmem:[#allocation10 + $0xf70] sm:$0xff]
      %v2849 = vld [vmem:[#allocation10 + $0xf78] sm:$0xff]
      %v2850 = vld [vmem:[#allocation10 + $0xf80] sm:$0xff]
      %v2851 = vld [vmem:[#allocation10 + $0xf88] sm:$0xff]
      %v2852 = vld [vmem:[#allocation10 + $0xf90] sm:$0xff]
      %v2853 = vld [vmem:[#allocation10 + $0xf98] sm:$0xff]
      %v2854 = vld [vmem:[#allocation10 + $0xfa0] sm:$0xff]
      %v2855 = vld [vmem:[#allocation10 + $0xfa8] sm:$0xff]
      %v2856 = vld [vmem:[#allocation10 + $0xfb0] sm:$0xff]
      %v2857 = vld [vmem:[#allocation10 + $0xfb8] sm:$0xff]
      %v2858 = vld [vmem:[#allocation10 + $0xfc0] sm:$0xff]
      %v2859 = vld [vmem:[#allocation10 + $0xfc8] sm:$0xff]
      %v2860 = vld [vmem:[#allocation10 + $0xfd0] sm:$0xff]
      %v2861 = vld [vmem:[#allocation10 + $0xfd8] sm:$0xff]
      %v2862 = vld [vmem:[#allocation10 + $0xfe0] sm:$0xff]
      %v2863 = vld [vmem:[#allocation10 + $0xfe8] sm:$0xff]
      %v2864 = vld [vmem:[#allocation10 + $0xff0] sm:$0xff]
      %v2865 = vld [vmem:[#allocation10 + $0xff8] sm:$0xff]
      %v2866 = vld [vmem:[#allocation12] sm:$0xff]
      %v2868 = vlaneseq
      %v2869 = vshrl.u32 %v2868, 7
      %v2870 = vsub.s32 0, %v2869
      %v2871 = vrot.slane %v2866, %v2870
      %v2872 = vlaneseq
      %v2873 = vshrl.u32 %v2872, 7
      %v2874 = vsub.s32 1, %v2873
      %v2875 = vrot.slane %v2866, %v2874
      %v2876 = vlaneseq
      %v2877 = vshrl.u32 %v2876, 7
      %v2878 = vsub.s32 2, %v2877
      %v2879 = vrot.slane %v2866, %v2878
      %v2880 = vlaneseq
      %v2881 = vshrl.u32 %v2880, 7
      %v2882 = vsub.s32 3, %v2881
      %v2883 = vrot.slane %v2866, %v2882
      %v2884 = vlaneseq
      %v2885 = vshrl.u32 %v2884, 7
      %v2886 = vsub.s32 4, %v2885
      %v2887 = vrot.slane %v2866, %v2886
      %v2888 = vlaneseq
      %v2889 = vshrl.u32 %v2888, 7
      %v2890 = vsub.s32 5, %v2889
      %v2891 = vrot.slane %v2866, %v2890
      %v2892 = vlaneseq
      %v2893 = vshrl.u32 %v2892, 7
      %v2894 = vsub.s32 6, %v2893
      %v2895 = vrot.slane %v2866, %v2894
      %v2896 = vlaneseq
      %v2897 = vshrl.u32 %v2896, 7
      %v2898 = vsub.s32 7, %v2897
      %v2899 = vrot.slane %v2866, %v2898
      %v3420 = vunpack.c.l.b16 %v2354
      %v3421 = vunpack.c.h.b16 %v2354
      %v3422 = vunpack.c.l.b16 %v2355
      %v3423 = vunpack.c.h.b16 %v2355
      %v3424 = vunpack.c.l.b16 %v2356
      %v3425 = vunpack.c.h.b16 %v2356
      %v3426 = vunpack.c.l.b16 %v2357
      %v3427 = vunpack.c.h.b16 %v2357
      %v3428 = vunpack.c.l.b16 %v2358
      %v3429 = vunpack.c.h.b16 %v2358
      %v3430 = vunpack.c.l.b16 %v2359
      %v3431 = vunpack.c.h.b16 %v2359
      %v3432 = vunpack.c.l.b16 %v2360
      %v3433 = vunpack.c.h.b16 %v2360
      %v3434 = vunpack.c.l.b16 %v2361
      %v3435 = vunpack.c.h.b16 %v2361
      %v3436 = vunpack.c.l.b16 %v2362
      %v3437 = vunpack.c.h.b16 %v2362
      %v3438 = vunpack.c.l.b16 %v2363
      %v3439 = vunpack.c.h.b16 %v2363
      %v3440 = vunpack.c.l.b16 %v2364
      %v3441 = vunpack.c.h.b16 %v2364
      %v3442 = vunpack.c.l.b16 %v2365
      %v3443 = vunpack.c.h.b16 %v2365
      %v3444 = vunpack.c.l.b16 %v2366
      %v3445 = vunpack.c.h.b16 %v2366
      %v3446 = vunpack.c.l.b16 %v2367
      %v3447 = vunpack.c.h.b16 %v2367
      %v3448 = vunpack.c.l.b16 %v2368
      %v3449 = vunpack.c.h.b16 %v2368
      %v3450 = vunpack.c.l.b16 %v2369
      %v3451 = vunpack.c.h.b16 %v2369
      %v3452 = vunpack.c.l.b16 %v2370
      %v3453 = vunpack.c.h.b16 %v2370
      %v3454 = vunpack.c.l.b16 %v2371
      %v3455 = vunpack.c.h.b16 %v2371
      %v3456 = vunpack.c.l.b16 %v2372
      %v3457 = vunpack.c.h.b16 %v2372
      %v3458 = vunpack.c.l.b16 %v2373
      %v3459 = vunpack.c.h.b16 %v2373
      %v3460 = vunpack.c.l.b16 %v2374
      %v3461 = vunpack.c.h.b16 %v2374
      %v3462 = vunpack.c.l.b16 %v2375
      %v3463 = vunpack.c.h.b16 %v2375
      %v3464 = vunpack.c.l.b16 %v2376
      %v3465 = vunpack.c.h.b16 %v2376
      %v3466 = vunpack.c.l.b16 %v2377
      %v3467 = vunpack.c.h.b16 %v2377
      %v3468 = vunpack.c.l.b16 %v2378
      %v3469 = vunpack.c.h.b16 %v2378
      %v3470 = vunpack.c.l.b16 %v2379
      %v3471 = vunpack.c.h.b16 %v2379
      %v3472 = vunpack.c.l.b16 %v2380
      %v3473 = vunpack.c.h.b16 %v2380
      %v3474 = vunpack.c.l.b16 %v2381
      %v3475 = vunpack.c.h.b16 %v2381
      %v3476 = vunpack.c.l.b16 %v2382
      %v3477 = vunpack.c.h.b16 %v2382
      %v3478 = vunpack.c.l.b16 %v2383
      %v3479 = vunpack.c.h.b16 %v2383
      %v3480 = vunpack.c.l.b16 %v2384
      %v3481 = vunpack.c.h.b16 %v2384
      %v3482 = vunpack.c.l.b16 %v2385
      %v3483 = vunpack.c.h.b16 %v2385
      %v3484 = vunpack.c.l.b16 %v2386
      %v3485 = vunpack.c.h.b16 %v2386
      %v3486 = vunpack.c.l.b16 %v2387
      %v3487 = vunpack.c.h.b16 %v2387
      %v3488 = vunpack.c.l.b16 %v2388
      %v3489 = vunpack.c.h.b16 %v2388
      %v3490 = vunpack.c.l.b16 %v2389
      %v3491 = vunpack.c.h.b16 %v2389
      %v3492 = vunpack.c.l.b16 %v2390
      %v3493 = vunpack.c.h.b16 %v2390
      %v3494 = vunpack.c.l.b16 %v2391
      %v3495 = vunpack.c.h.b16 %v2391
      %v3496 = vunpack.c.l.b16 %v2392
      %v3497 = vunpack.c.h.b16 %v2392
      %v3498 = vunpack.c.l.b16 %v2393
      %v3499 = vunpack.c.h.b16 %v2393
      %v3500 = vunpack.c.l.b16 %v2394
      %v3501 = vunpack.c.h.b16 %v2394
      %v3502 = vunpack.c.l.b16 %v2395
      %v3503 = vunpack.c.h.b16 %v2395
      %v3504 = vunpack.c.l.b16 %v2396
      %v3505 = vunpack.c.h.b16 %v2396
      %v3506 = vunpack.c.l.b16 %v2397
      %v3507 = vunpack.c.h.b16 %v2397
      %v3508 = vunpack.c.l.b16 %v2398
      %v3509 = vunpack.c.h.b16 %v2398
      %v3510 = vunpack.c.l.b16 %v2399
      %v3511 = vunpack.c.h.b16 %v2399
      %v3512 = vunpack.c.l.b16 %v2400
      %v3513 = vunpack.c.h.b16 %v2400
      %v3514 = vunpack.c.l.b16 %v2401
      %v3515 = vunpack.c.h.b16 %v2401
      %v3516 = vunpack.c.l.b16 %v2402
      %v3517 = vunpack.c.h.b16 %v2402
      %v3518 = vunpack.c.l.b16 %v2403
      %v3519 = vunpack.c.h.b16 %v2403
      %v3520 = vunpack.c.l.b16 %v2404
      %v3521 = vunpack.c.h.b16 %v2404
      %v3522 = vunpack.c.l.b16 %v2405
      %v3523 = vunpack.c.h.b16 %v2405
      %v3524 = vunpack.c.l.b16 %v2406
      %v3525 = vunpack.c.h.b16 %v2406
      %v3526 = vunpack.c.l.b16 %v2407
      %v3527 = vunpack.c.h.b16 %v2407
      %v3528 = vunpack.c.l.b16 %v2408
      %v3529 = vunpack.c.h.b16 %v2408
      %v3530 = vunpack.c.l.b16 %v2409
      %v3531 = vunpack.c.h.b16 %v2409
      %v3532 = vunpack.c.l.b16 %v2410
      %v3533 = vunpack.c.h.b16 %v2410
      %v3534 = vunpack.c.l.b16 %v2411
      %v3535 = vunpack.c.h.b16 %v2411
      %v3536 = vunpack.c.l.b16 %v2412
      %v3537 = vunpack.c.h.b16 %v2412
      %v3538 = vunpack.c.l.b16 %v2413
      %v3539 = vunpack.c.h.b16 %v2413
      %v3540 = vunpack.c.l.b16 %v2414
      %v3541 = vunpack.c.h.b16 %v2414
      %v3542 = vunpack.c.l.b16 %v2415
      %v3543 = vunpack.c.h.b16 %v2415
      %v3544 = vunpack.c.l.b16 %v2416
      %v3545 = vunpack.c.h.b16 %v2416
      %v3546 = vunpack.c.l.b16 %v2417
      %v3547 = vunpack.c.h.b16 %v2417
      %v3548 = vunpack.c.l.b16 %v2418
      %v3549 = vunpack.c.h.b16 %v2418
      %v3550 = vunpack.c.l.b16 %v2419
      %v3551 = vunpack.c.h.b16 %v2419
      %v3552 = vunpack.c.l.b16 %v2420
      %v3553 = vunpack.c.h.b16 %v2420
      %v3554 = vunpack.c.l.b16 %v2421
      %v3555 = vunpack.c.h.b16 %v2421
      %v3556 = vunpack.c.l.b16 %v2422
      %v3557 = vunpack.c.h.b16 %v2422
      %v3558 = vunpack.c.l.b16 %v2423
      %v3559 = vunpack.c.h.b16 %v2423
      %v3560 = vunpack.c.l.b16 %v2424
      %v3561 = vunpack.c.h.b16 %v2424
      %v3562 = vunpack.c.l.b16 %v2425
      %v3563 = vunpack.c.h.b16 %v2425
      %v3564 = vunpack.c.l.b16 %v2426
      %v3565 = vunpack.c.h.b16 %v2426
      %v3566 = vunpack.c.l.b16 %v2427
      %v3567 = vunpack.c.h.b16 %v2427
      %v3568 = vunpack.c.l.b16 %v2428
      %v3569 = vunpack.c.h.b16 %v2428
      %v3570 = vunpack.c.l.b16 %v2429
      %v3571 = vunpack.c.h.b16 %v2429
      %v3572 = vunpack.c.l.b16 %v2430
      %v3573 = vunpack.c.h.b16 %v2430
      %v3574 = vunpack.c.l.b16 %v2431
      %v3575 = vunpack.c.h.b16 %v2431
      %v3576 = vunpack.c.l.b16 %v2432
      %v3577 = vunpack.c.h.b16 %v2432
      %v3578 = vunpack.c.l.b16 %v2433
      %v3579 = vunpack.c.h.b16 %v2433
      %v3580 = vunpack.c.l.b16 %v2434
      %v3581 = vunpack.c.h.b16 %v2434
      %v3582 = vunpack.c.l.b16 %v2435
      %v3583 = vunpack.c.h.b16 %v2435
      %v3584 = vunpack.c.l.b16 %v2436
      %v3585 = vunpack.c.h.b16 %v2436
      %v3586 = vunpack.c.l.b16 %v2437
      %v3587 = vunpack.c.h.b16 %v2437
      %v3588 = vunpack.c.l.b16 %v2438
      %v3589 = vunpack.c.h.b16 %v2438
      %v3590 = vunpack.c.l.b16 %v2439
      %v3591 = vunpack.c.h.b16 %v2439
      %v3592 = vunpack.c.l.b16 %v2440
      %v3593 = vunpack.c.h.b16 %v2440
      %v3594 = vunpack.c.l.b16 %v2441
      %v3595 = vunpack.c.h.b16 %v2441
      %v3596 = vunpack.c.l.b16 %v2442
      %v3597 = vunpack.c.h.b16 %v2442
      %v3598 = vunpack.c.l.b16 %v2443
      %v3599 = vunpack.c.h.b16 %v2443
      %v3600 = vunpack.c.l.b16 %v2444
      %v3601 = vunpack.c.h.b16 %v2444
      %v3602 = vunpack.c.l.b16 %v2445
      %v3603 = vunpack.c.h.b16 %v2445
      %v3604 = vunpack.c.l.b16 %v2446
      %v3605 = vunpack.c.h.b16 %v2446
      %v3606 = vunpack.c.l.b16 %v2447
      %v3607 = vunpack.c.h.b16 %v2447
      %v3608 = vunpack.c.l.b16 %v2448
      %v3609 = vunpack.c.h.b16 %v2448
      %v3610 = vunpack.c.l.b16 %v2449
      %v3611 = vunpack.c.h.b16 %v2449
      %v3612 = vunpack.c.l.b16 %v2450
      %v3613 = vunpack.c.h.b16 %v2450
      %v3614 = vunpack.c.l.b16 %v2451
      %v3615 = vunpack.c.h.b16 %v2451
      %v3616 = vunpack.c.l.b16 %v2452
      %v3617 = vunpack.c.h.b16 %v2452
      %v3618 = vunpack.c.l.b16 %v2453
      %v3619 = vunpack.c.h.b16 %v2453
      %v3620 = vunpack.c.l.b16 %v2454
      %v3621 = vunpack.c.h.b16 %v2454
      %v3622 = vunpack.c.l.b16 %v2455
      %v3623 = vunpack.c.h.b16 %v2455
      %v3624 = vunpack.c.l.b16 %v2456
      %v3625 = vunpack.c.h.b16 %v2456
      %v3626 = vunpack.c.l.b16 %v2457
      %v3627 = vunpack.c.h.b16 %v2457
      %v3628 = vunpack.c.l.b16 %v2458
      %v3629 = vunpack.c.h.b16 %v2458
      %v3630 = vunpack.c.l.b16 %v2459
      %v3631 = vunpack.c.h.b16 %v2459
      %v3632 = vunpack.c.l.b16 %v2460
      %v3633 = vunpack.c.h.b16 %v2460
      %v3634 = vunpack.c.l.b16 %v2461
      %v3635 = vunpack.c.h.b16 %v2461
      %v3636 = vunpack.c.l.b16 %v2462
      %v3637 = vunpack.c.h.b16 %v2462
      %v3638 = vunpack.c.l.b16 %v2463
      %v3639 = vunpack.c.h.b16 %v2463
      %v3640 = vunpack.c.l.b16 %v2464
      %v3641 = vunpack.c.h.b16 %v2464
      %v3642 = vunpack.c.l.b16 %v2465
      %v3643 = vunpack.c.h.b16 %v2465
      %v3644 = vunpack.c.l.b16 %v2466
      %v3645 = vunpack.c.h.b16 %v2466
      %v3646 = vunpack.c.l.b16 %v2467
      %v3647 = vunpack.c.h.b16 %v2467
      %v3648 = vunpack.c.l.b16 %v2468
      %v3649 = vunpack.c.h.b16 %v2468
      %v3650 = vunpack.c.l.b16 %v2469
      %v3651 = vunpack.c.h.b16 %v2469
      %v3652 = vunpack.c.l.b16 %v2470
      %v3653 = vunpack.c.h.b16 %v2470
      %v3654 = vunpack.c.l.b16 %v2471
      %v3655 = vunpack.c.h.b16 %v2471
      %v3656 = vunpack.c.l.b16 %v2472
      %v3657 = vunpack.c.h.b16 %v2472
      %v3658 = vunpack.c.l.b16 %v2473
      %v3659 = vunpack.c.h.b16 %v2473
      %v3660 = vunpack.c.l.b16 %v2474
      %v3661 = vunpack.c.h.b16 %v2474
      %v3662 = vunpack.c.l.b16 %v2475
      %v3663 = vunpack.c.h.b16 %v2475
      %v3664 = vunpack.c.l.b16 %v2476
      %v3665 = vunpack.c.h.b16 %v2476
      %v3666 = vunpack.c.l.b16 %v2477
      %v3667 = vunpack.c.h.b16 %v2477
      %v3668 = vunpack.c.l.b16 %v2478
      %v3669 = vunpack.c.h.b16 %v2478
      %v3670 = vunpack.c.l.b16 %v2479
      %v3671 = vunpack.c.h.b16 %v2479
      %v3672 = vunpack.c.l.b16 %v2480
      %v3673 = vunpack.c.h.b16 %v2480
      %v3674 = vunpack.c.l.b16 %v2481
      %v3675 = vunpack.c.h.b16 %v2481
      %v3676 = vunpack.c.l.b16 %v2482
      %v3677 = vunpack.c.h.b16 %v2482
      %v3678 = vunpack.c.l.b16 %v2483
      %v3679 = vunpack.c.h.b16 %v2483
      %v3680 = vunpack.c.l.b16 %v2484
      %v3681 = vunpack.c.h.b16 %v2484
      %v3682 = vunpack.c.l.b16 %v2485
      %v3683 = vunpack.c.h.b16 %v2485
      %v3684 = vunpack.c.l.b16 %v2486
      %v3685 = vunpack.c.h.b16 %v2486
      %v3686 = vunpack.c.l.b16 %v2487
      %v3687 = vunpack.c.h.b16 %v2487
      %v3688 = vunpack.c.l.b16 %v2488
      %v3689 = vunpack.c.h.b16 %v2488
      %v3690 = vunpack.c.l.b16 %v2489
      %v3691 = vunpack.c.h.b16 %v2489
      %v3692 = vunpack.c.l.b16 %v2490
      %v3693 = vunpack.c.h.b16 %v2490
      %v3694 = vunpack.c.l.b16 %v2491
      %v3695 = vunpack.c.h.b16 %v2491
      %v3696 = vunpack.c.l.b16 %v2492
      %v3697 = vunpack.c.h.b16 %v2492
      %v3698 = vunpack.c.l.b16 %v2493
      %v3699 = vunpack.c.h.b16 %v2493
      %v3700 = vunpack.c.l.b16 %v2494
      %v3701 = vunpack.c.h.b16 %v2494
      %v3702 = vunpack.c.l.b16 %v2495
      %v3703 = vunpack.c.h.b16 %v2495
      %v3704 = vunpack.c.l.b16 %v2496
      %v3705 = vunpack.c.h.b16 %v2496
      %v3706 = vunpack.c.l.b16 %v2497
      %v3707 = vunpack.c.h.b16 %v2497
      %v3708 = vunpack.c.l.b16 %v2498
      %v3709 = vunpack.c.h.b16 %v2498
      %v3710 = vunpack.c.l.b16 %v2499
      %v3711 = vunpack.c.h.b16 %v2499
      %v3712 = vunpack.c.l.b16 %v2500
      %v3713 = vunpack.c.h.b16 %v2500
      %v3714 = vunpack.c.l.b16 %v2501
      %v3715 = vunpack.c.h.b16 %v2501
      %v3716 = vunpack.c.l.b16 %v2502
      %v3717 = vunpack.c.h.b16 %v2502
      %v3718 = vunpack.c.l.b16 %v2503
      %v3719 = vunpack.c.h.b16 %v2503
      %v3720 = vunpack.c.l.b16 %v2504
      %v3721 = vunpack.c.h.b16 %v2504
      %v3722 = vunpack.c.l.b16 %v2505
      %v3723 = vunpack.c.h.b16 %v2505
      %v3724 = vunpack.c.l.b16 %v2506
      %v3725 = vunpack.c.h.b16 %v2506
      %v3726 = vunpack.c.l.b16 %v2507
      %v3727 = vunpack.c.h.b16 %v2507
      %v3728 = vunpack.c.l.b16 %v2508
      %v3729 = vunpack.c.h.b16 %v2508
      %v3730 = vunpack.c.l.b16 %v2509
      %v3731 = vunpack.c.h.b16 %v2509
      %v3732 = vunpack.c.l.b16 %v2510
      %v3733 = vunpack.c.h.b16 %v2510
      %v3734 = vunpack.c.l.b16 %v2511
      %v3735 = vunpack.c.h.b16 %v2511
      %v3736 = vunpack.c.l.b16 %v2512
      %v3737 = vunpack.c.h.b16 %v2512
      %v3738 = vunpack.c.l.b16 %v2513
      %v3739 = vunpack.c.h.b16 %v2513
      %v3740 = vunpack.c.l.b16 %v2514
      %v3741 = vunpack.c.h.b16 %v2514
      %v3742 = vunpack.c.l.b16 %v2515
      %v3743 = vunpack.c.h.b16 %v2515
      %v3744 = vunpack.c.l.b16 %v2516
      %v3745 = vunpack.c.h.b16 %v2516
      %v3746 = vunpack.c.l.b16 %v2517
      %v3747 = vunpack.c.h.b16 %v2517
      %v3748 = vunpack.c.l.b16 %v2518
      %v3749 = vunpack.c.h.b16 %v2518
      %v3750 = vunpack.c.l.b16 %v2519
      %v3751 = vunpack.c.h.b16 %v2519
      %v3752 = vunpack.c.l.b16 %v2520
      %v3753 = vunpack.c.h.b16 %v2520
      %v3754 = vunpack.c.l.b16 %v2521
      %v3755 = vunpack.c.h.b16 %v2521
      %v3756 = vunpack.c.l.b16 %v2522
      %v3757 = vunpack.c.h.b16 %v2522
      %v3758 = vunpack.c.l.b16 %v2523
      %v3759 = vunpack.c.h.b16 %v2523
      %v3760 = vunpack.c.l.b16 %v2524
      %v3761 = vunpack.c.h.b16 %v2524
      %v3762 = vunpack.c.l.b16 %v2525
      %v3763 = vunpack.c.h.b16 %v2525
      %v3764 = vunpack.c.l.b16 %v2526
      %v3765 = vunpack.c.h.b16 %v2526
      %v3766 = vunpack.c.l.b16 %v2527
      %v3767 = vunpack.c.h.b16 %v2527
      %v3768 = vunpack.c.l.b16 %v2528
      %v3769 = vunpack.c.h.b16 %v2528
      %v3770 = vunpack.c.l.b16 %v2529
      %v3771 = vunpack.c.h.b16 %v2529
      %v3772 = vunpack.c.l.b16 %v2530
      %v3773 = vunpack.c.h.b16 %v2530
      %v3774 = vunpack.c.l.b16 %v2531
      %v3775 = vunpack.c.h.b16 %v2531
      %v3776 = vunpack.c.l.b16 %v2532
      %v3777 = vunpack.c.h.b16 %v2532
      %v3778 = vunpack.c.l.b16 %v2533
      %v3779 = vunpack.c.h.b16 %v2533
      %v3780 = vunpack.c.l.b16 %v2534
      %v3781 = vunpack.c.h.b16 %v2534
      %v3782 = vunpack.c.l.b16 %v2535
      %v3783 = vunpack.c.h.b16 %v2535
      %v3784 = vunpack.c.l.b16 %v2536
      %v3785 = vunpack.c.h.b16 %v2536
      %v3786 = vunpack.c.l.b16 %v2537
      %v3787 = vunpack.c.h.b16 %v2537
      %v3788 = vunpack.c.l.b16 %v2538
      %v3789 = vunpack.c.h.b16 %v2538
      %v3790 = vunpack.c.l.b16 %v2539
      %v3791 = vunpack.c.h.b16 %v2539
      %v3792 = vunpack.c.l.b16 %v2540
      %v3793 = vunpack.c.h.b16 %v2540
      %v3794 = vunpack.c.l.b16 %v2541
      %v3795 = vunpack.c.h.b16 %v2541
      %v3796 = vunpack.c.l.b16 %v2542
      %v3797 = vunpack.c.h.b16 %v2542
      %v3798 = vunpack.c.l.b16 %v2543
      %v3799 = vunpack.c.h.b16 %v2543
      %v3800 = vunpack.c.l.b16 %v2544
      %v3801 = vunpack.c.h.b16 %v2544
      %v3802 = vunpack.c.l.b16 %v2545
      %v3803 = vunpack.c.h.b16 %v2545
      %v3804 = vunpack.c.l.b16 %v2546
      %v3805 = vunpack.c.h.b16 %v2546
      %v3806 = vunpack.c.l.b16 %v2547
      %v3807 = vunpack.c.h.b16 %v2547
      %v3808 = vunpack.c.l.b16 %v2548
      %v3809 = vunpack.c.h.b16 %v2548
      %v3810 = vunpack.c.l.b16 %v2549
      %v3811 = vunpack.c.h.b16 %v2549
      %v3812 = vunpack.c.l.b16 %v2550
      %v3813 = vunpack.c.h.b16 %v2550
      %v3814 = vunpack.c.l.b16 %v2551
      %v3815 = vunpack.c.h.b16 %v2551
      %v3816 = vunpack.c.l.b16 %v2552
      %v3817 = vunpack.c.h.b16 %v2552
      %v3818 = vunpack.c.l.b16 %v2553
      %v3819 = vunpack.c.h.b16 %v2553
      %v3820 = vunpack.c.l.b16 %v2554
      %v3821 = vunpack.c.h.b16 %v2554
      %v3822 = vunpack.c.l.b16 %v2555
      %v3823 = vunpack.c.h.b16 %v2555
      %v3824 = vunpack.c.l.b16 %v2556
      %v3825 = vunpack.c.h.b16 %v2556
      %v3826 = vunpack.c.l.b16 %v2557
      %v3827 = vunpack.c.h.b16 %v2557
      %v3828 = vunpack.c.l.b16 %v2558
      %v3829 = vunpack.c.h.b16 %v2558
      %v3830 = vunpack.c.l.b16 %v2559
      %v3831 = vunpack.c.h.b16 %v2559
      %v3832 = vunpack.c.l.b16 %v2560
      %v3833 = vunpack.c.h.b16 %v2560
      %v3834 = vunpack.c.l.b16 %v2561
      %v3835 = vunpack.c.h.b16 %v2561
      %v3836 = vunpack.c.l.b16 %v2562
      %v3837 = vunpack.c.h.b16 %v2562
      %v3838 = vunpack.c.l.b16 %v2563
      %v3839 = vunpack.c.h.b16 %v2563
      %v3840 = vunpack.c.l.b16 %v2564
      %v3841 = vunpack.c.h.b16 %v2564
      %v3842 = vunpack.c.l.b16 %v2565
      %v3843 = vunpack.c.h.b16 %v2565
      %v3844 = vunpack.c.l.b16 %v2566
      %v3845 = vunpack.c.h.b16 %v2566
      %v3846 = vunpack.c.l.b16 %v2567
      %v3847 = vunpack.c.h.b16 %v2567
      %v3848 = vunpack.c.l.b16 %v2568
      %v3849 = vunpack.c.h.b16 %v2568
      %v3850 = vunpack.c.l.b16 %v2569
      %v3851 = vunpack.c.h.b16 %v2569
      %v3852 = vunpack.c.l.b16 %v2570
      %v3853 = vunpack.c.h.b16 %v2570
      %v3854 = vunpack.c.l.b16 %v2571
      %v3855 = vunpack.c.h.b16 %v2571
      %v3856 = vunpack.c.l.b16 %v2572
      %v3857 = vunpack.c.h.b16 %v2572
      %v3858 = vunpack.c.l.b16 %v2573
      %v3859 = vunpack.c.h.b16 %v2573
      %v3860 = vunpack.c.l.b16 %v2574
      %v3861 = vunpack.c.h.b16 %v2574
      %v3862 = vunpack.c.l.b16 %v2575
      %v3863 = vunpack.c.h.b16 %v2575
      %v3864 = vunpack.c.l.b16 %v2576
      %v3865 = vunpack.c.h.b16 %v2576
      %v3866 = vunpack.c.l.b16 %v2577
      %v3867 = vunpack.c.h.b16 %v2577
      %v3868 = vunpack.c.l.b16 %v2578
      %v3869 = vunpack.c.h.b16 %v2578
      %v3870 = vunpack.c.l.b16 %v2579
      %v3871 = vunpack.c.h.b16 %v2579
      %v3872 = vunpack.c.l.b16 %v2580
      %v3873 = vunpack.c.h.b16 %v2580
      %v3874 = vunpack.c.l.b16 %v2581
      %v3875 = vunpack.c.h.b16 %v2581
      %v3876 = vunpack.c.l.b16 %v2582
      %v3877 = vunpack.c.h.b16 %v2582
      %v3878 = vunpack.c.l.b16 %v2583
      %v3879 = vunpack.c.h.b16 %v2583
      %v3880 = vunpack.c.l.b16 %v2584
      %v3881 = vunpack.c.h.b16 %v2584
      %v3882 = vunpack.c.l.b16 %v2585
      %v3883 = vunpack.c.h.b16 %v2585
      %v3884 = vunpack.c.l.b16 %v2586
      %v3885 = vunpack.c.h.b16 %v2586
      %v3886 = vunpack.c.l.b16 %v2587
      %v3887 = vunpack.c.h.b16 %v2587
      %v3888 = vunpack.c.l.b16 %v2588
      %v3889 = vunpack.c.h.b16 %v2588
      %v3890 = vunpack.c.l.b16 %v2589
      %v3891 = vunpack.c.h.b16 %v2589
      %v3892 = vunpack.c.l.b16 %v2590
      %v3893 = vunpack.c.h.b16 %v2590
      %v3894 = vunpack.c.l.b16 %v2591
      %v3895 = vunpack.c.h.b16 %v2591
      %v3896 = vunpack.c.l.b16 %v2592
      %v3897 = vunpack.c.h.b16 %v2592
      %v3898 = vunpack.c.l.b16 %v2593
      %v3899 = vunpack.c.h.b16 %v2593
      %v3900 = vunpack.c.l.b16 %v2594
      %v3901 = vunpack.c.h.b16 %v2594
      %v3902 = vunpack.c.l.b16 %v2595
      %v3903 = vunpack.c.h.b16 %v2595
      %v3904 = vunpack.c.l.b16 %v2596
      %v3905 = vunpack.c.h.b16 %v2596
      %v3906 = vunpack.c.l.b16 %v2597
      %v3907 = vunpack.c.h.b16 %v2597
      %v3908 = vunpack.c.l.b16 %v2598
      %v3909 = vunpack.c.h.b16 %v2598
      %v3910 = vunpack.c.l.b16 %v2599
      %v3911 = vunpack.c.h.b16 %v2599
      %v3912 = vunpack.c.l.b16 %v2600
      %v3913 = vunpack.c.h.b16 %v2600
      %v3914 = vunpack.c.l.b16 %v2601
      %v3915 = vunpack.c.h.b16 %v2601
      %v3916 = vunpack.c.l.b16 %v2602
      %v3917 = vunpack.c.h.b16 %v2602
      %v3918 = vunpack.c.l.b16 %v2603
      %v3919 = vunpack.c.h.b16 %v2603
      %v3920 = vunpack.c.l.b16 %v2604
      %v3921 = vunpack.c.h.b16 %v2604
      %v3922 = vunpack.c.l.b16 %v2605
      %v3923 = vunpack.c.h.b16 %v2605
      %v3924 = vunpack.c.l.b16 %v2606
      %v3925 = vunpack.c.h.b16 %v2606
      %v3926 = vunpack.c.l.b16 %v2607
      %v3927 = vunpack.c.h.b16 %v2607
      %v3928 = vunpack.c.l.b16 %v2608
      %v3929 = vunpack.c.h.b16 %v2608
      %v3930 = vunpack.c.l.b16 %v2609
      %v3931 = vunpack.c.h.b16 %v2609
      %v3932 = vunpack.c.l.b16 %v2610
      %v3933 = vunpack.c.h.b16 %v2610
      %v3934 = vunpack.c.l.b16 %v2611
      %v3935 = vunpack.c.h.b16 %v2611
      %v3936 = vunpack.c.l.b16 %v2612
      %v3937 = vunpack.c.h.b16 %v2612
      %v3938 = vunpack.c.l.b16 %v2613
      %v3939 = vunpack.c.h.b16 %v2613
      %v3940 = vunpack.c.l.b16 %v2614
      %v3941 = vunpack.c.h.b16 %v2614
      %v3942 = vunpack.c.l.b16 %v2615
      %v3943 = vunpack.c.h.b16 %v2615
      %v3944 = vunpack.c.l.b16 %v2616
      %v3945 = vunpack.c.h.b16 %v2616
      %v3946 = vunpack.c.l.b16 %v2617
      %v3947 = vunpack.c.h.b16 %v2617
      %v3948 = vunpack.c.l.b16 %v2618
      %v3949 = vunpack.c.h.b16 %v2618
      %v3950 = vunpack.c.l.b16 %v2619
      %v3951 = vunpack.c.h.b16 %v2619
      %v3952 = vunpack.c.l.b16 %v2620
      %v3953 = vunpack.c.h.b16 %v2620
      %v3954 = vunpack.c.l.b16 %v2621
      %v3955 = vunpack.c.h.b16 %v2621
      %v3956 = vunpack.c.l.b16 %v2622
      %v3957 = vunpack.c.h.b16 %v2622
      %v3958 = vunpack.c.l.b16 %v2623
      %v3959 = vunpack.c.h.b16 %v2623
      %v3960 = vunpack.c.l.b16 %v2624
      %v3961 = vunpack.c.h.b16 %v2624
      %v3962 = vunpack.c.l.b16 %v2625
      %v3963 = vunpack.c.h.b16 %v2625
      %v3964 = vunpack.c.l.b16 %v2626
      %v3965 = vunpack.c.h.b16 %v2626
      %v3966 = vunpack.c.l.b16 %v2627
      %v3967 = vunpack.c.h.b16 %v2627
      %v3968 = vunpack.c.l.b16 %v2628
      %v3969 = vunpack.c.h.b16 %v2628
      %v3970 = vunpack.c.l.b16 %v2629
      %v3971 = vunpack.c.h.b16 %v2629
      %v3972 = vunpack.c.l.b16 %v2630
      %v3973 = vunpack.c.h.b16 %v2630
      %v3974 = vunpack.c.l.b16 %v2631
      %v3975 = vunpack.c.h.b16 %v2631
      %v3976 = vunpack.c.l.b16 %v2632
      %v3977 = vunpack.c.h.b16 %v2632
      %v3978 = vunpack.c.l.b16 %v2633
      %v3979 = vunpack.c.h.b16 %v2633
      %v3980 = vunpack.c.l.b16 %v2634
      %v3981 = vunpack.c.h.b16 %v2634
      %v3982 = vunpack.c.l.b16 %v2635
      %v3983 = vunpack.c.h.b16 %v2635
      %v3984 = vunpack.c.l.b16 %v2636
      %v3985 = vunpack.c.h.b16 %v2636
      %v3986 = vunpack.c.l.b16 %v2637
      %v3987 = vunpack.c.h.b16 %v2637
      %v3988 = vunpack.c.l.b16 %v2638
      %v3989 = vunpack.c.h.b16 %v2638
      %v3990 = vunpack.c.l.b16 %v2639
      %v3991 = vunpack.c.h.b16 %v2639
      %v3992 = vunpack.c.l.b16 %v2640
      %v3993 = vunpack.c.h.b16 %v2640
      %v3994 = vunpack.c.l.b16 %v2641
      %v3995 = vunpack.c.h.b16 %v2641
      %v3996 = vunpack.c.l.b16 %v2642
      %v3997 = vunpack.c.h.b16 %v2642
      %v3998 = vunpack.c.l.b16 %v2643
      %v3999 = vunpack.c.h.b16 %v2643
      %v4000 = vunpack.c.l.b16 %v2644
      %v4001 = vunpack.c.h.b16 %v2644
      %v4002 = vunpack.c.l.b16 %v2645
      %v4003 = vunpack.c.h.b16 %v2645
      %v4004 = vunpack.c.l.b16 %v2646
      %v4005 = vunpack.c.h.b16 %v2646
      %v4006 = vunpack.c.l.b16 %v2647
      %v4007 = vunpack.c.h.b16 %v2647
      %v4008 = vunpack.c.l.b16 %v2648
      %v4009 = vunpack.c.h.b16 %v2648
      %v4010 = vunpack.c.l.b16 %v2649
      %v4011 = vunpack.c.h.b16 %v2649
      %v4012 = vunpack.c.l.b16 %v2650
      %v4013 = vunpack.c.h.b16 %v2650
      %v4014 = vunpack.c.l.b16 %v2651
      %v4015 = vunpack.c.h.b16 %v2651
      %v4016 = vunpack.c.l.b16 %v2652
      %v4017 = vunpack.c.h.b16 %v2652
      %v4018 = vunpack.c.l.b16 %v2653
      %v4019 = vunpack.c.h.b16 %v2653
      %v4020 = vunpack.c.l.b16 %v2654
      %v4021 = vunpack.c.h.b16 %v2654
      %v4022 = vunpack.c.l.b16 %v2655
      %v4023 = vunpack.c.h.b16 %v2655
      %v4024 = vunpack.c.l.b16 %v2656
      %v4025 = vunpack.c.h.b16 %v2656
      %v4026 = vunpack.c.l.b16 %v2657
      %v4027 = vunpack.c.h.b16 %v2657
      %v4028 = vunpack.c.l.b16 %v2658
      %v4029 = vunpack.c.h.b16 %v2658
      %v4030 = vunpack.c.l.b16 %v2659
      %v4031 = vunpack.c.h.b16 %v2659
      %v4032 = vunpack.c.l.b16 %v2660
      %v4033 = vunpack.c.h.b16 %v2660
      %v4034 = vunpack.c.l.b16 %v2661
      %v4035 = vunpack.c.h.b16 %v2661
      %v4036 = vunpack.c.l.b16 %v2662
      %v4037 = vunpack.c.h.b16 %v2662
      %v4038 = vunpack.c.l.b16 %v2663
      %v4039 = vunpack.c.h.b16 %v2663
      %v4040 = vunpack.c.l.b16 %v2664
      %v4041 = vunpack.c.h.b16 %v2664
      %v4042 = vunpack.c.l.b16 %v2665
      %v4043 = vunpack.c.h.b16 %v2665
      %v4044 = vunpack.c.l.b16 %v2666
      %v4045 = vunpack.c.h.b16 %v2666
      %v4046 = vunpack.c.l.b16 %v2667
      %v4047 = vunpack.c.h.b16 %v2667
      %v4048 = vunpack.c.l.b16 %v2668
      %v4049 = vunpack.c.h.b16 %v2668
      %v4050 = vunpack.c.l.b16 %v2669
      %v4051 = vunpack.c.h.b16 %v2669
      %v4052 = vunpack.c.l.b16 %v2670
      %v4053 = vunpack.c.h.b16 %v2670
      %v4054 = vunpack.c.l.b16 %v2671
      %v4055 = vunpack.c.h.b16 %v2671
      %v4056 = vunpack.c.l.b16 %v2672
      %v4057 = vunpack.c.h.b16 %v2672
      %v4058 = vunpack.c.l.b16 %v2673
      %v4059 = vunpack.c.h.b16 %v2673
      %v4060 = vunpack.c.l.b16 %v2674
      %v4061 = vunpack.c.h.b16 %v2674
      %v4062 = vunpack.c.l.b16 %v2675
      %v4063 = vunpack.c.h.b16 %v2675
      %v4064 = vunpack.c.l.b16 %v2676
      %v4065 = vunpack.c.h.b16 %v2676
      %v4066 = vunpack.c.l.b16 %v2677
      %v4067 = vunpack.c.h.b16 %v2677
      %v4068 = vunpack.c.l.b16 %v2678
      %v4069 = vunpack.c.h.b16 %v2678
      %v4070 = vunpack.c.l.b16 %v2679
      %v4071 = vunpack.c.h.b16 %v2679
      %v4072 = vunpack.c.l.b16 %v2680
      %v4073 = vunpack.c.h.b16 %v2680
      %v4074 = vunpack.c.l.b16 %v2681
      %v4075 = vunpack.c.h.b16 %v2681
      %v4076 = vunpack.c.l.b16 %v2682
      %v4077 = vunpack.c.h.b16 %v2682
      %v4078 = vunpack.c.l.b16 %v2683
      %v4079 = vunpack.c.h.b16 %v2683
      %v4080 = vunpack.c.l.b16 %v2684
      %v4081 = vunpack.c.h.b16 %v2684
      %v4082 = vunpack.c.l.b16 %v2685
      %v4083 = vunpack.c.h.b16 %v2685
      %v4084 = vunpack.c.l.b16 %v2686
      %v4085 = vunpack.c.h.b16 %v2686
      %v4086 = vunpack.c.l.b16 %v2687
      %v4087 = vunpack.c.h.b16 %v2687
      %v4088 = vunpack.c.l.b16 %v2688
      %v4089 = vunpack.c.h.b16 %v2688
      %v4090 = vunpack.c.l.b16 %v2689
      %v4091 = vunpack.c.h.b16 %v2689
      %v4092 = vunpack.c.l.b16 %v2690
      %v4093 = vunpack.c.h.b16 %v2690
      %v4094 = vunpack.c.l.b16 %v2691
      %v4095 = vunpack.c.h.b16 %v2691
      %v4096 = vunpack.c.l.b16 %v2692
      %v4097 = vunpack.c.h.b16 %v2692
      %v4098 = vunpack.c.l.b16 %v2693
      %v4099 = vunpack.c.h.b16 %v2693
      %v4100 = vunpack.c.l.b16 %v2694
      %v4101 = vunpack.c.h.b16 %v2694
      %v4102 = vunpack.c.l.b16 %v2695
      %v4103 = vunpack.c.h.b16 %v2695
      %v4104 = vunpack.c.l.b16 %v2696
      %v4105 = vunpack.c.h.b16 %v2696
      %v4106 = vunpack.c.l.b16 %v2697
      %v4107 = vunpack.c.h.b16 %v2697
      %v4108 = vunpack.c.l.b16 %v2698
      %v4109 = vunpack.c.h.b16 %v2698
      %v4110 = vunpack.c.l.b16 %v2699
      %v4111 = vunpack.c.h.b16 %v2699
      %v4112 = vunpack.c.l.b16 %v2700
      %v4113 = vunpack.c.h.b16 %v2700
      %v4114 = vunpack.c.l.b16 %v2701
      %v4115 = vunpack.c.h.b16 %v2701
      %v4116 = vunpack.c.l.b16 %v2702
      %v4117 = vunpack.c.h.b16 %v2702
      %v4118 = vunpack.c.l.b16 %v2703
      %v4119 = vunpack.c.h.b16 %v2703
      %v4120 = vunpack.c.l.b16 %v2704
      %v4121 = vunpack.c.h.b16 %v2704
      %v4122 = vunpack.c.l.b16 %v2705
      %v4123 = vunpack.c.h.b16 %v2705
      %v4124 = vunpack.c.l.b16 %v2706
      %v4125 = vunpack.c.h.b16 %v2706
      %v4126 = vunpack.c.l.b16 %v2707
      %v4127 = vunpack.c.h.b16 %v2707
      %v4128 = vunpack.c.l.b16 %v2708
      %v4129 = vunpack.c.h.b16 %v2708
      %v4130 = vunpack.c.l.b16 %v2709
      %v4131 = vunpack.c.h.b16 %v2709
      %v4132 = vunpack.c.l.b16 %v2710
      %v4133 = vunpack.c.h.b16 %v2710
      %v4134 = vunpack.c.l.b16 %v2711
      %v4135 = vunpack.c.h.b16 %v2711
      %v4136 = vunpack.c.l.b16 %v2712
      %v4137 = vunpack.c.h.b16 %v2712
      %v4138 = vunpack.c.l.b16 %v2713
      %v4139 = vunpack.c.h.b16 %v2713
      %v4140 = vunpack.c.l.b16 %v2714
      %v4141 = vunpack.c.h.b16 %v2714
      %v4142 = vunpack.c.l.b16 %v2715
      %v4143 = vunpack.c.h.b16 %v2715
      %v4144 = vunpack.c.l.b16 %v2716
      %v4145 = vunpack.c.h.b16 %v2716
      %v4146 = vunpack.c.l.b16 %v2717
      %v4147 = vunpack.c.h.b16 %v2717
      %v4148 = vunpack.c.l.b16 %v2718
      %v4149 = vunpack.c.h.b16 %v2718
      %v4150 = vunpack.c.l.b16 %v2719
      %v4151 = vunpack.c.h.b16 %v2719
      %v4152 = vunpack.c.l.b16 %v2720
      %v4153 = vunpack.c.h.b16 %v2720
      %v4154 = vunpack.c.l.b16 %v2721
      %v4155 = vunpack.c.h.b16 %v2721
      %v4156 = vunpack.c.l.b16 %v2722
      %v4157 = vunpack.c.h.b16 %v2722
      %v4158 = vunpack.c.l.b16 %v2723
      %v4159 = vunpack.c.h.b16 %v2723
      %v4160 = vunpack.c.l.b16 %v2724
      %v4161 = vunpack.c.h.b16 %v2724
      %v4162 = vunpack.c.l.b16 %v2725
      %v4163 = vunpack.c.h.b16 %v2725
      %v4164 = vunpack.c.l.b16 %v2726
      %v4165 = vunpack.c.h.b16 %v2726
      %v4166 = vunpack.c.l.b16 %v2727
      %v4167 = vunpack.c.h.b16 %v2727
      %v4168 = vunpack.c.l.b16 %v2728
      %v4169 = vunpack.c.h.b16 %v2728
      %v4170 = vunpack.c.l.b16 %v2729
      %v4171 = vunpack.c.h.b16 %v2729
      %v4172 = vunpack.c.l.b16 %v2730
      %v4173 = vunpack.c.h.b16 %v2730
      %v4174 = vunpack.c.l.b16 %v2731
      %v4175 = vunpack.c.h.b16 %v2731
      %v4176 = vunpack.c.l.b16 %v2732
      %v4177 = vunpack.c.h.b16 %v2732
      %v4178 = vunpack.c.l.b16 %v2733
      %v4179 = vunpack.c.h.b16 %v2733
      %v4180 = vunpack.c.l.b16 %v2734
      %v4181 = vunpack.c.h.b16 %v2734
      %v4182 = vunpack.c.l.b16 %v2735
      %v4183 = vunpack.c.h.b16 %v2735
      %v4184 = vunpack.c.l.b16 %v2736
      %v4185 = vunpack.c.h.b16 %v2736
      %v4186 = vunpack.c.l.b16 %v2737
      %v4187 = vunpack.c.h.b16 %v2737
      %v4188 = vunpack.c.l.b16 %v2738
      %v4189 = vunpack.c.h.b16 %v2738
      %v4190 = vunpack.c.l.b16 %v2739
      %v4191 = vunpack.c.h.b16 %v2739
      %v4192 = vunpack.c.l.b16 %v2740
      %v4193 = vunpack.c.h.b16 %v2740
      %v4194 = vunpack.c.l.b16 %v2741
      %v4195 = vunpack.c.h.b16 %v2741
      %v4196 = vunpack.c.l.b16 %v2742
      %v4197 = vunpack.c.h.b16 %v2742
      %v4198 = vunpack.c.l.b16 %v2743
      %v4199 = vunpack.c.h.b16 %v2743
      %v4200 = vunpack.c.l.b16 %v2744
      %v4201 = vunpack.c.h.b16 %v2744
      %v4202 = vunpack.c.l.b16 %v2745
      %v4203 = vunpack.c.h.b16 %v2745
      %v4204 = vunpack.c.l.b16 %v2746
      %v4205 = vunpack.c.h.b16 %v2746
      %v4206 = vunpack.c.l.b16 %v2747
      %v4207 = vunpack.c.h.b16 %v2747
      %v4208 = vunpack.c.l.b16 %v2748
      %v4209 = vunpack.c.h.b16 %v2748
      %v4210 = vunpack.c.l.b16 %v2749
      %v4211 = vunpack.c.h.b16 %v2749
      %v4212 = vunpack.c.l.b16 %v2750
      %v4213 = vunpack.c.h.b16 %v2750
      %v4214 = vunpack.c.l.b16 %v2751
      %v4215 = vunpack.c.h.b16 %v2751
      %v4216 = vunpack.c.l.b16 %v2752
      %v4217 = vunpack.c.h.b16 %v2752
      %v4218 = vunpack.c.l.b16 %v2753
      %v4219 = vunpack.c.h.b16 %v2753
      %v4220 = vunpack.c.l.b16 %v2754
      %v4221 = vunpack.c.h.b16 %v2754
      %v4222 = vunpack.c.l.b16 %v2755
      %v4223 = vunpack.c.h.b16 %v2755
      %v4224 = vunpack.c.l.b16 %v2756
      %v4225 = vunpack.c.h.b16 %v2756
      %v4226 = vunpack.c.l.b16 %v2757
      %v4227 = vunpack.c.h.b16 %v2757
      %v4228 = vunpack.c.l.b16 %v2758
      %v4229 = vunpack.c.h.b16 %v2758
      %v4230 = vunpack.c.l.b16 %v2759
      %v4231 = vunpack.c.h.b16 %v2759
      %v4232 = vunpack.c.l.b16 %v2760
      %v4233 = vunpack.c.h.b16 %v2760
      %v4234 = vunpack.c.l.b16 %v2761
      %v4235 = vunpack.c.h.b16 %v2761
      %v4236 = vunpack.c.l.b16 %v2762
      %v4237 = vunpack.c.h.b16 %v2762
      %v4238 = vunpack.c.l.b16 %v2763
      %v4239 = vunpack.c.h.b16 %v2763
      %v4240 = vunpack.c.l.b16 %v2764
      %v4241 = vunpack.c.h.b16 %v2764
      %v4242 = vunpack.c.l.b16 %v2765
      %v4243 = vunpack.c.h.b16 %v2765
      %v4244 = vunpack.c.l.b16 %v2766
      %v4245 = vunpack.c.h.b16 %v2766
      %v4246 = vunpack.c.l.b16 %v2767
      %v4247 = vunpack.c.h.b16 %v2767
      %v4248 = vunpack.c.l.b16 %v2768
      %v4249 = vunpack.c.h.b16 %v2768
      %v4250 = vunpack.c.l.b16 %v2769
      %v4251 = vunpack.c.h.b16 %v2769
      %v4252 = vunpack.c.l.b16 %v2770
      %v4253 = vunpack.c.h.b16 %v2770
      %v4254 = vunpack.c.l.b16 %v2771
      %v4255 = vunpack.c.h.b16 %v2771
      %v4256 = vunpack.c.l.b16 %v2772
      %v4257 = vunpack.c.h.b16 %v2772
      %v4258 = vunpack.c.l.b16 %v2773
      %v4259 = vunpack.c.h.b16 %v2773
      %v4260 = vunpack.c.l.b16 %v2774
      %v4261 = vunpack.c.h.b16 %v2774
      %v4262 = vunpack.c.l.b16 %v2775
      %v4263 = vunpack.c.h.b16 %v2775
      %v4264 = vunpack.c.l.b16 %v2776
      %v4265 = vunpack.c.h.b16 %v2776
      %v4266 = vunpack.c.l.b16 %v2777
      %v4267 = vunpack.c.h.b16 %v2777
      %v4268 = vunpack.c.l.b16 %v2778
      %v4269 = vunpack.c.h.b16 %v2778
      %v4270 = vunpack.c.l.b16 %v2779
      %v4271 = vunpack.c.h.b16 %v2779
      %v4272 = vunpack.c.l.b16 %v2780
      %v4273 = vunpack.c.h.b16 %v2780
      %v4274 = vunpack.c.l.b16 %v2781
      %v4275 = vunpack.c.h.b16 %v2781
      %v4276 = vunpack.c.l.b16 %v2782
      %v4277 = vunpack.c.h.b16 %v2782
      %v4278 = vunpack.c.l.b16 %v2783
      %v4279 = vunpack.c.h.b16 %v2783
      %v4280 = vunpack.c.l.b16 %v2784
      %v4281 = vunpack.c.h.b16 %v2784
      %v4282 = vunpack.c.l.b16 %v2785
      %v4283 = vunpack.c.h.b16 %v2785
      %v4284 = vunpack.c.l.b16 %v2786
      %v4285 = vunpack.c.h.b16 %v2786
      %v4286 = vunpack.c.l.b16 %v2787
      %v4287 = vunpack.c.h.b16 %v2787
      %v4288 = vunpack.c.l.b16 %v2788
      %v4289 = vunpack.c.h.b16 %v2788
      %v4290 = vunpack.c.l.b16 %v2789
      %v4291 = vunpack.c.h.b16 %v2789
      %v4292 = vunpack.c.l.b16 %v2790
      %v4293 = vunpack.c.h.b16 %v2790
      %v4294 = vunpack.c.l.b16 %v2791
      %v4295 = vunpack.c.h.b16 %v2791
      %v4296 = vunpack.c.l.b16 %v2792
      %v4297 = vunpack.c.h.b16 %v2792
      %v4298 = vunpack.c.l.b16 %v2793
      %v4299 = vunpack.c.h.b16 %v2793
      %v4300 = vunpack.c.l.b16 %v2794
      %v4301 = vunpack.c.h.b16 %v2794
      %v4302 = vunpack.c.l.b16 %v2795
      %v4303 = vunpack.c.h.b16 %v2795
      %v4304 = vunpack.c.l.b16 %v2796
      %v4305 = vunpack.c.h.b16 %v2796
      %v4306 = vunpack.c.l.b16 %v2797
      %v4307 = vunpack.c.h.b16 %v2797
      %v4308 = vunpack.c.l.b16 %v2798
      %v4309 = vunpack.c.h.b16 %v2798
      %v4310 = vunpack.c.l.b16 %v2799
      %v4311 = vunpack.c.h.b16 %v2799
      %v4312 = vunpack.c.l.b16 %v2800
      %v4313 = vunpack.c.h.b16 %v2800
      %v4314 = vunpack.c.l.b16 %v2801
      %v4315 = vunpack.c.h.b16 %v2801
      %v4316 = vunpack.c.l.b16 %v2802
      %v4317 = vunpack.c.h.b16 %v2802
      %v4318 = vunpack.c.l.b16 %v2803
      %v4319 = vunpack.c.h.b16 %v2803
      %v4320 = vunpack.c.l.b16 %v2804
      %v4321 = vunpack.c.h.b16 %v2804
      %v4322 = vunpack.c.l.b16 %v2805
      %v4323 = vunpack.c.h.b16 %v2805
      %v4324 = vunpack.c.l.b16 %v2806
      %v4325 = vunpack.c.h.b16 %v2806
      %v4326 = vunpack.c.l.b16 %v2807
      %v4327 = vunpack.c.h.b16 %v2807
      %v4328 = vunpack.c.l.b16 %v2808
      %v4329 = vunpack.c.h.b16 %v2808
      %v4330 = vunpack.c.l.b16 %v2809
      %v4331 = vunpack.c.h.b16 %v2809
      %v4332 = vunpack.c.l.b16 %v2810
      %v4333 = vunpack.c.h.b16 %v2810
      %v4334 = vunpack.c.l.b16 %v2811
      %v4335 = vunpack.c.h.b16 %v2811
      %v4336 = vunpack.c.l.b16 %v2812
      %v4337 = vunpack.c.h.b16 %v2812
      %v4338 = vunpack.c.l.b16 %v2813
      %v4339 = vunpack.c.h.b16 %v2813
      %v4340 = vunpack.c.l.b16 %v2814
      %v4341 = vunpack.c.h.b16 %v2814
      %v4342 = vunpack.c.l.b16 %v2815
      %v4343 = vunpack.c.h.b16 %v2815
      %v4344 = vunpack.c.l.b16 %v2816
      %v4345 = vunpack.c.h.b16 %v2816
      %v4346 = vunpack.c.l.b16 %v2817
      %v4347 = vunpack.c.h.b16 %v2817
      %v4348 = vunpack.c.l.b16 %v2818
      %v4349 = vunpack.c.h.b16 %v2818
      %v4350 = vunpack.c.l.b16 %v2819
      %v4351 = vunpack.c.h.b16 %v2819
      %v4352 = vunpack.c.l.b16 %v2820
      %v4353 = vunpack.c.h.b16 %v2820
      %v4354 = vunpack.c.l.b16 %v2821
      %v4355 = vunpack.c.h.b16 %v2821
      %v4356 = vunpack.c.l.b16 %v2822
      %v4357 = vunpack.c.h.b16 %v2822
      %v4358 = vunpack.c.l.b16 %v2823
      %v4359 = vunpack.c.h.b16 %v2823
      %v4360 = vunpack.c.l.b16 %v2824
      %v4361 = vunpack.c.h.b16 %v2824
      %v4362 = vunpack.c.l.b16 %v2825
      %v4363 = vunpack.c.h.b16 %v2825
      %v4364 = vunpack.c.l.b16 %v2826
      %v4365 = vunpack.c.h.b16 %v2826
      %v4366 = vunpack.c.l.b16 %v2827
      %v4367 = vunpack.c.h.b16 %v2827
      %v4368 = vunpack.c.l.b16 %v2828
      %v4369 = vunpack.c.h.b16 %v2828
      %v4370 = vunpack.c.l.b16 %v2829
      %v4371 = vunpack.c.h.b16 %v2829
      %v4372 = vunpack.c.l.b16 %v2830
      %v4373 = vunpack.c.h.b16 %v2830
      %v4374 = vunpack.c.l.b16 %v2831
      %v4375 = vunpack.c.h.b16 %v2831
      %v4376 = vunpack.c.l.b16 %v2832
      %v4377 = vunpack.c.h.b16 %v2832
      %v4378 = vunpack.c.l.b16 %v2833
      %v4379 = vunpack.c.h.b16 %v2833
      %v4380 = vunpack.c.l.b16 %v2834
      %v4381 = vunpack.c.h.b16 %v2834
      %v4382 = vunpack.c.l.b16 %v2835
      %v4383 = vunpack.c.h.b16 %v2835
      %v4384 = vunpack.c.l.b16 %v2836
      %v4385 = vunpack.c.h.b16 %v2836
      %v4386 = vunpack.c.l.b16 %v2837
      %v4387 = vunpack.c.h.b16 %v2837
      %v4388 = vunpack.c.l.b16 %v2838
      %v4389 = vunpack.c.h.b16 %v2838
      %v4390 = vunpack.c.l.b16 %v2839
      %v4391 = vunpack.c.h.b16 %v2839
      %v4392 = vunpack.c.l.b16 %v2840
      %v4393 = vunpack.c.h.b16 %v2840
      %v4394 = vunpack.c.l.b16 %v2841
      %v4395 = vunpack.c.h.b16 %v2841
      %v4396 = vunpack.c.l.b16 %v2842
      %v4397 = vunpack.c.h.b16 %v2842
      %v4398 = vunpack.c.l.b16 %v2843
      %v4399 = vunpack.c.h.b16 %v2843
      %v4400 = vunpack.c.l.b16 %v2844
      %v4401 = vunpack.c.h.b16 %v2844
      %v4402 = vunpack.c.l.b16 %v2845
      %v4403 = vunpack.c.h.b16 %v2845
      %v4404 = vunpack.c.l.b16 %v2846
      %v4405 = vunpack.c.h.b16 %v2846
      %v4406 = vunpack.c.l.b16 %v2847
      %v4407 = vunpack.c.h.b16 %v2847
      %v4408 = vunpack.c.l.b16 %v2848
      %v4409 = vunpack.c.h.b16 %v2848
      %v4410 = vunpack.c.l.b16 %v2849
      %v4411 = vunpack.c.h.b16 %v2849
      %v4412 = vunpack.c.l.b16 %v2850
      %v4413 = vunpack.c.h.b16 %v2850
      %v4414 = vunpack.c.l.b16 %v2851
      %v4415 = vunpack.c.h.b16 %v2851
      %v4416 = vunpack.c.l.b16 %v2852
      %v4417 = vunpack.c.h.b16 %v2852
      %v4418 = vunpack.c.l.b16 %v2853
      %v4419 = vunpack.c.h.b16 %v2853
      %v4420 = vunpack.c.l.b16 %v2854
      %v4421 = vunpack.c.h.b16 %v2854
      %v4422 = vunpack.c.l.b16 %v2855
      %v4423 = vunpack.c.h.b16 %v2855
      %v4424 = vunpack.c.l.b16 %v2856
      %v4425 = vunpack.c.h.b16 %v2856
      %v4426 = vunpack.c.l.b16 %v2857
      %v4427 = vunpack.c.h.b16 %v2857
      %v4428 = vunpack.c.l.b16 %v2858
      %v4429 = vunpack.c.h.b16 %v2858
      %v4430 = vunpack.c.l.b16 %v2859
      %v4431 = vunpack.c.h.b16 %v2859
      %v4432 = vunpack.c.l.b16 %v2860
      %v4433 = vunpack.c.h.b16 %v2860
      %v4434 = vunpack.c.l.b16 %v2861
      %v4435 = vunpack.c.h.b16 %v2861
      %v4436 = vunpack.c.l.b16 %v2862
      %v4437 = vunpack.c.h.b16 %v2862
      %v4438 = vunpack.c.l.b16 %v2863
      %v4439 = vunpack.c.h.b16 %v2863
      %v4440 = vunpack.c.l.b16 %v2864
      %v4441 = vunpack.c.h.b16 %v2864
      %v4442 = vunpack.c.l.b16 %v2865
      %v4443 = vunpack.c.h.b16 %v2865
      %v4444 = vpack.c.b16 %v3428, %v3420
      %v4445 = vpack.c.b16 %v3429, %v3421
      %v4446 = vpack.c.b16 %v3430, %v3422
      %v4447 = vpack.c.b16 %v3431, %v3423
      %v4448 = vpack.c.b16 %v3432, %v3424
      %v4449 = vpack.c.b16 %v3433, %v3425
      %v4450 = vpack.c.b16 %v3434, %v3426
      %v4451 = vpack.c.b16 %v3435, %v3427
      %v4452 = vpack.c.b16 %v3444, %v3436
      %v4453 = vpack.c.b16 %v3445, %v3437
      %v4454 = vpack.c.b16 %v3446, %v3438
      %v4455 = vpack.c.b16 %v3447, %v3439
      %v4456 = vpack.c.b16 %v3448, %v3440
      %v4457 = vpack.c.b16 %v3449, %v3441
      %v4458 = vpack.c.b16 %v3450, %v3442
      %v4459 = vpack.c.b16 %v3451, %v3443
      %v4460 = vpack.c.b16 %v3460, %v3452
      %v4461 = vpack.c.b16 %v3461, %v3453
      %v4462 = vpack.c.b16 %v3462, %v3454
      %v4463 = vpack.c.b16 %v3463, %v3455
      %v4464 = vpack.c.b16 %v3464, %v3456
      %v4465 = vpack.c.b16 %v3465, %v3457
      %v4466 = vpack.c.b16 %v3466, %v3458
      %v4467 = vpack.c.b16 %v3467, %v3459
      %v4468 = vpack.c.b16 %v3476, %v3468
      %v4469 = vpack.c.b16 %v3477, %v3469
      %v4470 = vpack.c.b16 %v3478, %v3470
      %v4471 = vpack.c.b16 %v3479, %v3471
      %v4472 = vpack.c.b16 %v3480, %v3472
      %v4473 = vpack.c.b16 %v3481, %v3473
      %v4474 = vpack.c.b16 %v3482, %v3474
      %v4475 = vpack.c.b16 %v3483, %v3475
      %v4476 = vpack.c.b16 %v3492, %v3484
      %v4477 = vpack.c.b16 %v3493, %v3485
      %v4478 = vpack.c.b16 %v3494, %v3486
      %v4479 = vpack.c.b16 %v3495, %v3487
      %v4480 = vpack.c.b16 %v3496, %v3488
      %v4481 = vpack.c.b16 %v3497, %v3489
      %v4482 = vpack.c.b16 %v3498, %v3490
      %v4483 = vpack.c.b16 %v3499, %v3491
      %v4484 = vpack.c.b16 %v3508, %v3500
      %v4485 = vpack.c.b16 %v3509, %v3501
      %v4486 = vpack.c.b16 %v3510, %v3502
      %v4487 = vpack.c.b16 %v3511, %v3503
      %v4488 = vpack.c.b16 %v3512, %v3504
      %v4489 = vpack.c.b16 %v3513, %v3505
      %v4490 = vpack.c.b16 %v3514, %v3506
      %v4491 = vpack.c.b16 %v3515, %v3507
      %v4492 = vpack.c.b16 %v3524, %v3516
      %v4493 = vpack.c.b16 %v3525, %v3517
      %v4494 = vpack.c.b16 %v3526, %v3518
      %v4495 = vpack.c.b16 %v3527, %v3519
      %v4496 = vpack.c.b16 %v3528, %v3520
      %v4497 = vpack.c.b16 %v3529, %v3521
      %v4498 = vpack.c.b16 %v3530, %v3522
      %v4499 = vpack.c.b16 %v3531, %v3523
      %v4500 = vpack.c.b16 %v3540, %v3532
      %v4501 = vpack.c.b16 %v3541, %v3533
      %v4502 = vpack.c.b16 %v3542, %v3534
      %v4503 = vpack.c.b16 %v3543, %v3535
      %v4504 = vpack.c.b16 %v3544, %v3536
      %v4505 = vpack.c.b16 %v3545, %v3537
      %v4506 = vpack.c.b16 %v3546, %v3538
      %v4507 = vpack.c.b16 %v3547, %v3539
      %v4508 = vpack.c.b16 %v3556, %v3548
      %v4509 = vpack.c.b16 %v3557, %v3549
      %v4510 = vpack.c.b16 %v3558, %v3550
      %v4511 = vpack.c.b16 %v3559, %v3551
      %v4512 = vpack.c.b16 %v3560, %v3552
      %v4513 = vpack.c.b16 %v3561, %v3553
      %v4514 = vpack.c.b16 %v3562, %v3554
      %v4515 = vpack.c.b16 %v3563, %v3555
      %v4516 = vpack.c.b16 %v3572, %v3564
      %v4517 = vpack.c.b16 %v3573, %v3565
      %v4518 = vpack.c.b16 %v3574, %v3566
      %v4519 = vpack.c.b16 %v3575, %v3567
      %v4520 = vpack.c.b16 %v3576, %v3568
      %v4521 = vpack.c.b16 %v3577, %v3569
      %v4522 = vpack.c.b16 %v3578, %v3570
      %v4523 = vpack.c.b16 %v3579, %v3571
      %v4524 = vpack.c.b16 %v3588, %v3580
      %v4525 = vpack.c.b16 %v3589, %v3581
      %v4526 = vpack.c.b16 %v3590, %v3582
      %v4527 = vpack.c.b16 %v3591, %v3583
      %v4528 = vpack.c.b16 %v3592, %v3584
      %v4529 = vpack.c.b16 %v3593, %v3585
      %v4530 = vpack.c.b16 %v3594, %v3586
      %v4531 = vpack.c.b16 %v3595, %v3587
      %v4532 = vpack.c.b16 %v3604, %v3596
      %v4533 = vpack.c.b16 %v3605, %v3597
      %v4534 = vpack.c.b16 %v3606, %v3598
      %v4535 = vpack.c.b16 %v3607, %v3599
      %v4536 = vpack.c.b16 %v3608, %v3600
      %v4537 = vpack.c.b16 %v3609, %v3601
      %v4538 = vpack.c.b16 %v3610, %v3602
      %v4539 = vpack.c.b16 %v3611, %v3603
      %v4540 = vpack.c.b16 %v3620, %v3612
      %v4541 = vpack.c.b16 %v3621, %v3613
      %v4542 = vpack.c.b16 %v3622, %v3614
      %v4543 = vpack.c.b16 %v3623, %v3615
      %v4544 = vpack.c.b16 %v3624, %v3616
      %v4545 = vpack.c.b16 %v3625, %v3617
      %v4546 = vpack.c.b16 %v3626, %v3618
      %v4547 = vpack.c.b16 %v3627, %v3619
      %v4548 = vpack.c.b16 %v3636, %v3628
      %v4549 = vpack.c.b16 %v3637, %v3629
      %v4550 = vpack.c.b16 %v3638, %v3630
      %v4551 = vpack.c.b16 %v3639, %v3631
      %v4552 = vpack.c.b16 %v3640, %v3632
      %v4553 = vpack.c.b16 %v3641, %v3633
      %v4554 = vpack.c.b16 %v3642, %v3634
      %v4555 = vpack.c.b16 %v3643, %v3635
      %v4556 = vpack.c.b16 %v3652, %v3644
      %v4557 = vpack.c.b16 %v3653, %v3645
      %v4558 = vpack.c.b16 %v3654, %v3646
      %v4559 = vpack.c.b16 %v3655, %v3647
      %v4560 = vpack.c.b16 %v3656, %v3648
      %v4561 = vpack.c.b16 %v3657, %v3649
      %v4562 = vpack.c.b16 %v3658, %v3650
      %v4563 = vpack.c.b16 %v3659, %v3651
      %v4564 = vpack.c.b16 %v3668, %v3660
      %v4565 = vpack.c.b16 %v3669, %v3661
      %v4566 = vpack.c.b16 %v3670, %v3662
      %v4567 = vpack.c.b16 %v3671, %v3663
      %v4568 = vpack.c.b16 %v3672, %v3664
      %v4569 = vpack.c.b16 %v3673, %v3665
      %v4570 = vpack.c.b16 %v3674, %v3666
      %v4571 = vpack.c.b16 %v3675, %v3667
      %v4572 = vpack.c.b16 %v3684, %v3676
      %v4573 = vpack.c.b16 %v3685, %v3677
      %v4574 = vpack.c.b16 %v3686, %v3678
      %v4575 = vpack.c.b16 %v3687, %v3679
      %v4576 = vpack.c.b16 %v3688, %v3680
      %v4577 = vpack.c.b16 %v3689, %v3681
      %v4578 = vpack.c.b16 %v3690, %v3682
      %v4579 = vpack.c.b16 %v3691, %v3683
      %v4580 = vpack.c.b16 %v3700, %v3692
      %v4581 = vpack.c.b16 %v3701, %v3693
      %v4582 = vpack.c.b16 %v3702, %v3694
      %v4583 = vpack.c.b16 %v3703, %v3695
      %v4584 = vpack.c.b16 %v3704, %v3696
      %v4585 = vpack.c.b16 %v3705, %v3697
      %v4586 = vpack.c.b16 %v3706, %v3698
      %v4587 = vpack.c.b16 %v3707, %v3699
      %v4588 = vpack.c.b16 %v3716, %v3708
      %v4589 = vpack.c.b16 %v3717, %v3709
      %v4590 = vpack.c.b16 %v3718, %v3710
      %v4591 = vpack.c.b16 %v3719, %v3711
      %v4592 = vpack.c.b16 %v3720, %v3712
      %v4593 = vpack.c.b16 %v3721, %v3713
      %v4594 = vpack.c.b16 %v3722, %v3714
      %v4595 = vpack.c.b16 %v3723, %v3715
      %v4596 = vpack.c.b16 %v3732, %v3724
      %v4597 = vpack.c.b16 %v3733, %v3725
      %v4598 = vpack.c.b16 %v3734, %v3726
      %v4599 = vpack.c.b16 %v3735, %v3727
      %v4600 = vpack.c.b16 %v3736, %v3728
      %v4601 = vpack.c.b16 %v3737, %v3729
      %v4602 = vpack.c.b16 %v3738, %v3730
      %v4603 = vpack.c.b16 %v3739, %v3731
      %v4604 = vpack.c.b16 %v3748, %v3740
      %v4605 = vpack.c.b16 %v3749, %v3741
      %v4606 = vpack.c.b16 %v3750, %v3742
      %v4607 = vpack.c.b16 %v3751, %v3743
      %v4608 = vpack.c.b16 %v3752, %v3744
      %v4609 = vpack.c.b16 %v3753, %v3745
      %v4610 = vpack.c.b16 %v3754, %v3746
      %v4611 = vpack.c.b16 %v3755, %v3747
      %v4612 = vpack.c.b16 %v3764, %v3756
      %v4613 = vpack.c.b16 %v3765, %v3757
      %v4614 = vpack.c.b16 %v3766, %v3758
      %v4615 = vpack.c.b16 %v3767, %v3759
      %v4616 = vpack.c.b16 %v3768, %v3760
      %v4617 = vpack.c.b16 %v3769, %v3761
      %v4618 = vpack.c.b16 %v3770, %v3762
      %v4619 = vpack.c.b16 %v3771, %v3763
      %v4620 = vpack.c.b16 %v3780, %v3772
      %v4621 = vpack.c.b16 %v3781, %v3773
      %v4622 = vpack.c.b16 %v3782, %v3774
      %v4623 = vpack.c.b16 %v3783, %v3775
      %v4624 = vpack.c.b16 %v3784, %v3776
      %v4625 = vpack.c.b16 %v3785, %v3777
      %v4626 = vpack.c.b16 %v3786, %v3778
      %v4627 = vpack.c.b16 %v3787, %v3779
      %v4628 = vpack.c.b16 %v3796, %v3788
      %v4629 = vpack.c.b16 %v3797, %v3789
      %v4630 = vpack.c.b16 %v3798, %v3790
      %v4631 = vpack.c.b16 %v3799, %v3791
      %v4632 = vpack.c.b16 %v3800, %v3792
      %v4633 = vpack.c.b16 %v3801, %v3793
      %v4634 = vpack.c.b16 %v3802, %v3794
      %v4635 = vpack.c.b16 %v3803, %v3795
      %v4636 = vpack.c.b16 %v3812, %v3804
      %v4637 = vpack.c.b16 %v3813, %v3805
      %v4638 = vpack.c.b16 %v3814, %v3806
      %v4639 = vpack.c.b16 %v3815, %v3807
      %v4640 = vpack.c.b16 %v3816, %v3808
      %v4641 = vpack.c.b16 %v3817, %v3809
      %v4642 = vpack.c.b16 %v3818, %v3810
      %v4643 = vpack.c.b16 %v3819, %v3811
      %v4644 = vpack.c.b16 %v3828, %v3820
      %v4645 = vpack.c.b16 %v3829, %v3821
      %v4646 = vpack.c.b16 %v3830, %v3822
      %v4647 = vpack.c.b16 %v3831, %v3823
      %v4648 = vpack.c.b16 %v3832, %v3824
      %v4649 = vpack.c.b16 %v3833, %v3825
      %v4650 = vpack.c.b16 %v3834, %v3826
      %v4651 = vpack.c.b16 %v3835, %v3827
      %v4652 = vpack.c.b16 %v3844, %v3836
      %v4653 = vpack.c.b16 %v3845, %v3837
      %v4654 = vpack.c.b16 %v3846, %v3838
      %v4655 = vpack.c.b16 %v3847, %v3839
      %v4656 = vpack.c.b16 %v3848, %v3840
      %v4657 = vpack.c.b16 %v3849, %v3841
      %v4658 = vpack.c.b16 %v3850, %v3842
      %v4659 = vpack.c.b16 %v3851, %v3843
      %v4660 = vpack.c.b16 %v3860, %v3852
      %v4661 = vpack.c.b16 %v3861, %v3853
      %v4662 = vpack.c.b16 %v3862, %v3854
      %v4663 = vpack.c.b16 %v3863, %v3855
      %v4664 = vpack.c.b16 %v3864, %v3856
      %v4665 = vpack.c.b16 %v3865, %v3857
      %v4666 = vpack.c.b16 %v3866, %v3858
      %v4667 = vpack.c.b16 %v3867, %v3859
      %v4668 = vpack.c.b16 %v3876, %v3868
      %v4669 = vpack.c.b16 %v3877, %v3869
      %v4670 = vpack.c.b16 %v3878, %v3870
      %v4671 = vpack.c.b16 %v3879, %v3871
      %v4672 = vpack.c.b16 %v3880, %v3872
      %v4673 = vpack.c.b16 %v3881, %v3873
      %v4674 = vpack.c.b16 %v3882, %v3874
      %v4675 = vpack.c.b16 %v3883, %v3875
      %v4676 = vpack.c.b16 %v3892, %v3884
      %v4677 = vpack.c.b16 %v3893, %v3885
      %v4678 = vpack.c.b16 %v3894, %v3886
      %v4679 = vpack.c.b16 %v3895, %v3887
      %v4680 = vpack.c.b16 %v3896, %v3888
      %v4681 = vpack.c.b16 %v3897, %v3889
      %v4682 = vpack.c.b16 %v3898, %v3890
      %v4683 = vpack.c.b16 %v3899, %v3891
      %v4684 = vpack.c.b16 %v3908, %v3900
      %v4685 = vpack.c.b16 %v3909, %v3901
      %v4686 = vpack.c.b16 %v3910, %v3902
      %v4687 = vpack.c.b16 %v3911, %v3903
      %v4688 = vpack.c.b16 %v3912, %v3904
      %v4689 = vpack.c.b16 %v3913, %v3905
      %v4690 = vpack.c.b16 %v3914, %v3906
      %v4691 = vpack.c.b16 %v3915, %v3907
      %v4692 = vpack.c.b16 %v3924, %v3916
      %v4693 = vpack.c.b16 %v3925, %v3917
      %v4694 = vpack.c.b16 %v3926, %v3918
      %v4695 = vpack.c.b16 %v3927, %v3919
      %v4696 = vpack.c.b16 %v3928, %v3920
      %v4697 = vpack.c.b16 %v3929, %v3921
      %v4698 = vpack.c.b16 %v3930, %v3922
      %v4699 = vpack.c.b16 %v3931, %v3923
      %v4700 = vpack.c.b16 %v3940, %v3932
      %v4701 = vpack.c.b16 %v3941, %v3933
      %v4702 = vpack.c.b16 %v3942, %v3934
      %v4703 = vpack.c.b16 %v3943, %v3935
      %v4704 = vpack.c.b16 %v3944, %v3936
      %v4705 = vpack.c.b16 %v3945, %v3937
      %v4706 = vpack.c.b16 %v3946, %v3938
      %v4707 = vpack.c.b16 %v3947, %v3939
      %v4708 = vpack.c.b16 %v3956, %v3948
      %v4709 = vpack.c.b16 %v3957, %v3949
      %v4710 = vpack.c.b16 %v3958, %v3950
      %v4711 = vpack.c.b16 %v3959, %v3951
      %v4712 = vpack.c.b16 %v3960, %v3952
      %v4713 = vpack.c.b16 %v3961, %v3953
      %v4714 = vpack.c.b16 %v3962, %v3954
      %v4715 = vpack.c.b16 %v3963, %v3955
      %v4716 = vpack.c.b16 %v3972, %v3964
      %v4717 = vpack.c.b16 %v3973, %v3965
      %v4718 = vpack.c.b16 %v3974, %v3966
      %v4719 = vpack.c.b16 %v3975, %v3967
      %v4720 = vpack.c.b16 %v3976, %v3968
      %v4721 = vpack.c.b16 %v3977, %v3969
      %v4722 = vpack.c.b16 %v3978, %v3970
      %v4723 = vpack.c.b16 %v3979, %v3971
      %v4724 = vpack.c.b16 %v3988, %v3980
      %v4725 = vpack.c.b16 %v3989, %v3981
      %v4726 = vpack.c.b16 %v3990, %v3982
      %v4727 = vpack.c.b16 %v3991, %v3983
      %v4728 = vpack.c.b16 %v3992, %v3984
      %v4729 = vpack.c.b16 %v3993, %v3985
      %v4730 = vpack.c.b16 %v3994, %v3986
      %v4731 = vpack.c.b16 %v3995, %v3987
      %v4732 = vpack.c.b16 %v4004, %v3996
      %v4733 = vpack.c.b16 %v4005, %v3997
      %v4734 = vpack.c.b16 %v4006, %v3998
      %v4735 = vpack.c.b16 %v4007, %v3999
      %v4736 = vpack.c.b16 %v4008, %v4000
      %v4737 = vpack.c.b16 %v4009, %v4001
      %v4738 = vpack.c.b16 %v4010, %v4002
      %v4739 = vpack.c.b16 %v4011, %v4003
      %v4740 = vpack.c.b16 %v4020, %v4012
      %v4741 = vpack.c.b16 %v4021, %v4013
      %v4742 = vpack.c.b16 %v4022, %v4014
      %v4743 = vpack.c.b16 %v4023, %v4015
      %v4744 = vpack.c.b16 %v4024, %v4016
      %v4745 = vpack.c.b16 %v4025, %v4017
      %v4746 = vpack.c.b16 %v4026, %v4018
      %v4747 = vpack.c.b16 %v4027, %v4019
      %v4748 = vpack.c.b16 %v4036, %v4028
      %v4749 = vpack.c.b16 %v4037, %v4029
      %v4750 = vpack.c.b16 %v4038, %v4030
      %v4751 = vpack.c.b16 %v4039, %v4031
      %v4752 = vpack.c.b16 %v4040, %v4032
      %v4753 = vpack.c.b16 %v4041, %v4033
      %v4754 = vpack.c.b16 %v4042, %v4034
      %v4755 = vpack.c.b16 %v4043, %v4035
      %v4756 = vpack.c.b16 %v4052, %v4044
      %v4757 = vpack.c.b16 %v4053, %v4045
      %v4758 = vpack.c.b16 %v4054, %v4046
      %v4759 = vpack.c.b16 %v4055, %v4047
      %v4760 = vpack.c.b16 %v4056, %v4048
      %v4761 = vpack.c.b16 %v4057, %v4049
      %v4762 = vpack.c.b16 %v4058, %v4050
      %v4763 = vpack.c.b16 %v4059, %v4051
      %v4764 = vpack.c.b16 %v4068, %v4060
      %v4765 = vpack.c.b16 %v4069, %v4061
      %v4766 = vpack.c.b16 %v4070, %v4062
      %v4767 = vpack.c.b16 %v4071, %v4063
      %v4768 = vpack.c.b16 %v4072, %v4064
      %v4769 = vpack.c.b16 %v4073, %v4065
      %v4770 = vpack.c.b16 %v4074, %v4066
      %v4771 = vpack.c.b16 %v4075, %v4067
      %v4772 = vpack.c.b16 %v4084, %v4076
      %v4773 = vpack.c.b16 %v4085, %v4077
      %v4774 = vpack.c.b16 %v4086, %v4078
      %v4775 = vpack.c.b16 %v4087, %v4079
      %v4776 = vpack.c.b16 %v4088, %v4080
      %v4777 = vpack.c.b16 %v4089, %v4081
      %v4778 = vpack.c.b16 %v4090, %v4082
      %v4779 = vpack.c.b16 %v4091, %v4083
      %v4780 = vpack.c.b16 %v4100, %v4092
      %v4781 = vpack.c.b16 %v4101, %v4093
      %v4782 = vpack.c.b16 %v4102, %v4094
      %v4783 = vpack.c.b16 %v4103, %v4095
      %v4784 = vpack.c.b16 %v4104, %v4096
      %v4785 = vpack.c.b16 %v4105, %v4097
      %v4786 = vpack.c.b16 %v4106, %v4098
      %v4787 = vpack.c.b16 %v4107, %v4099
      %v4788 = vpack.c.b16 %v4116, %v4108
      %v4789 = vpack.c.b16 %v4117, %v4109
      %v4790 = vpack.c.b16 %v4118, %v4110
      %v4791 = vpack.c.b16 %v4119, %v4111
      %v4792 = vpack.c.b16 %v4120, %v4112
      %v4793 = vpack.c.b16 %v4121, %v4113
      %v4794 = vpack.c.b16 %v4122, %v4114
      %v4795 = vpack.c.b16 %v4123, %v4115
      %v4796 = vpack.c.b16 %v4132, %v4124
      %v4797 = vpack.c.b16 %v4133, %v4125
      %v4798 = vpack.c.b16 %v4134, %v4126
      %v4799 = vpack.c.b16 %v4135, %v4127
      %v4800 = vpack.c.b16 %v4136, %v4128
      %v4801 = vpack.c.b16 %v4137, %v4129
      %v4802 = vpack.c.b16 %v4138, %v4130
      %v4803 = vpack.c.b16 %v4139, %v4131
      %v4804 = vpack.c.b16 %v4148, %v4140
      %v4805 = vpack.c.b16 %v4149, %v4141
      %v4806 = vpack.c.b16 %v4150, %v4142
      %v4807 = vpack.c.b16 %v4151, %v4143
      %v4808 = vpack.c.b16 %v4152, %v4144
      %v4809 = vpack.c.b16 %v4153, %v4145
      %v4810 = vpack.c.b16 %v4154, %v4146
      %v4811 = vpack.c.b16 %v4155, %v4147
      %v4812 = vpack.c.b16 %v4164, %v4156
      %v4813 = vpack.c.b16 %v4165, %v4157
      %v4814 = vpack.c.b16 %v4166, %v4158
      %v4815 = vpack.c.b16 %v4167, %v4159
      %v4816 = vpack.c.b16 %v4168, %v4160
      %v4817 = vpack.c.b16 %v4169, %v4161
      %v4818 = vpack.c.b16 %v4170, %v4162
      %v4819 = vpack.c.b16 %v4171, %v4163
      %v4820 = vpack.c.b16 %v4180, %v4172
      %v4821 = vpack.c.b16 %v4181, %v4173
      %v4822 = vpack.c.b16 %v4182, %v4174
      %v4823 = vpack.c.b16 %v4183, %v4175
      %v4824 = vpack.c.b16 %v4184, %v4176
      %v4825 = vpack.c.b16 %v4185, %v4177
      %v4826 = vpack.c.b16 %v4186, %v4178
      %v4827 = vpack.c.b16 %v4187, %v4179
      %v4828 = vpack.c.b16 %v4196, %v4188
      %v4829 = vpack.c.b16 %v4197, %v4189
      %v4830 = vpack.c.b16 %v4198, %v4190
      %v4831 = vpack.c.b16 %v4199, %v4191
      %v4832 = vpack.c.b16 %v4200, %v4192
      %v4833 = vpack.c.b16 %v4201, %v4193
      %v4834 = vpack.c.b16 %v4202, %v4194
      %v4835 = vpack.c.b16 %v4203, %v4195
      %v4836 = vpack.c.b16 %v4212, %v4204
      %v4837 = vpack.c.b16 %v4213, %v4205
      %v4838 = vpack.c.b16 %v4214, %v4206
      %v4839 = vpack.c.b16 %v4215, %v4207
      %v4840 = vpack.c.b16 %v4216, %v4208
      %v4841 = vpack.c.b16 %v4217, %v4209
      %v4842 = vpack.c.b16 %v4218, %v4210
      %v4843 = vpack.c.b16 %v4219, %v4211
      %v4844 = vpack.c.b16 %v4228, %v4220
      %v4845 = vpack.c.b16 %v4229, %v4221
      %v4846 = vpack.c.b16 %v4230, %v4222
      %v4847 = vpack.c.b16 %v4231, %v4223
      %v4848 = vpack.c.b16 %v4232, %v4224
      %v4849 = vpack.c.b16 %v4233, %v4225
      %v4850 = vpack.c.b16 %v4234, %v4226
      %v4851 = vpack.c.b16 %v4235, %v4227
      %v4852 = vpack.c.b16 %v4244, %v4236
      %v4853 = vpack.c.b16 %v4245, %v4237
      %v4854 = vpack.c.b16 %v4246, %v4238
      %v4855 = vpack.c.b16 %v4247, %v4239
      %v4856 = vpack.c.b16 %v4248, %v4240
      %v4857 = vpack.c.b16 %v4249, %v4241
      %v4858 = vpack.c.b16 %v4250, %v4242
      %v4859 = vpack.c.b16 %v4251, %v4243
      %v4860 = vpack.c.b16 %v4260, %v4252
      %v4861 = vpack.c.b16 %v4261, %v4253
      %v4862 = vpack.c.b16 %v4262, %v4254
      %v4863 = vpack.c.b16 %v4263, %v4255
      %v4864 = vpack.c.b16 %v4264, %v4256
      %v4865 = vpack.c.b16 %v4265, %v4257
      %v4866 = vpack.c.b16 %v4266, %v4258
      %v4867 = vpack.c.b16 %v4267, %v4259
      %v4868 = vpack.c.b16 %v4276, %v4268
      %v4869 = vpack.c.b16 %v4277, %v4269
      %v4870 = vpack.c.b16 %v4278, %v4270
      %v4871 = vpack.c.b16 %v4279, %v4271
      %v4872 = vpack.c.b16 %v4280, %v4272
      %v4873 = vpack.c.b16 %v4281, %v4273
      %v4874 = vpack.c.b16 %v4282, %v4274
      %v4875 = vpack.c.b16 %v4283, %v4275
      %v4876 = vpack.c.b16 %v4292, %v4284
      %v4877 = vpack.c.b16 %v4293, %v4285
      %v4878 = vpack.c.b16 %v4294, %v4286
      %v4879 = vpack.c.b16 %v4295, %v4287
      %v4880 = vpack.c.b16 %v4296, %v4288
      %v4881 = vpack.c.b16 %v4297, %v4289
      %v4882 = vpack.c.b16 %v4298, %v4290
      %v4883 = vpack.c.b16 %v4299, %v4291
      %v4884 = vpack.c.b16 %v4308, %v4300
      %v4885 = vpack.c.b16 %v4309, %v4301
      %v4886 = vpack.c.b16 %v4310, %v4302
      %v4887 = vpack.c.b16 %v4311, %v4303
      %v4888 = vpack.c.b16 %v4312, %v4304
      %v4889 = vpack.c.b16 %v4313, %v4305
      %v4890 = vpack.c.b16 %v4314, %v4306
      %v4891 = vpack.c.b16 %v4315, %v4307
      %v4892 = vpack.c.b16 %v4324, %v4316
      %v4893 = vpack.c.b16 %v4325, %v4317
      %v4894 = vpack.c.b16 %v4326, %v4318
      %v4895 = vpack.c.b16 %v4327, %v4319
      %v4896 = vpack.c.b16 %v4328, %v4320
      %v4897 = vpack.c.b16 %v4329, %v4321
      %v4898 = vpack.c.b16 %v4330, %v4322
      %v4899 = vpack.c.b16 %v4331, %v4323
      %v4900 = vpack.c.b16 %v4340, %v4332
      %v4901 = vpack.c.b16 %v4341, %v4333
      %v4902 = vpack.c.b16 %v4342, %v4334
      %v4903 = vpack.c.b16 %v4343, %v4335
      %v4904 = vpack.c.b16 %v4344, %v4336
      %v4905 = vpack.c.b16 %v4345, %v4337
      %v4906 = vpack.c.b16 %v4346, %v4338
      %v4907 = vpack.c.b16 %v4347, %v4339
      %v4908 = vpack.c.b16 %v4356, %v4348
      %v4909 = vpack.c.b16 %v4357, %v4349
      %v4910 = vpack.c.b16 %v4358, %v4350
      %v4911 = vpack.c.b16 %v4359, %v4351
      %v4912 = vpack.c.b16 %v4360, %v4352
      %v4913 = vpack.c.b16 %v4361, %v4353
      %v4914 = vpack.c.b16 %v4362, %v4354
      %v4915 = vpack.c.b16 %v4363, %v4355
      %v4916 = vpack.c.b16 %v4372, %v4364
      %v4917 = vpack.c.b16 %v4373, %v4365
      %v4918 = vpack.c.b16 %v4374, %v4366
      %v4919 = vpack.c.b16 %v4375, %v4367
      %v4920 = vpack.c.b16 %v4376, %v4368
      %v4921 = vpack.c.b16 %v4377, %v4369
      %v4922 = vpack.c.b16 %v4378, %v4370
      %v4923 = vpack.c.b16 %v4379, %v4371
      %v4924 = vpack.c.b16 %v4388, %v4380
      %v4925 = vpack.c.b16 %v4389, %v4381
      %v4926 = vpack.c.b16 %v4390, %v4382
      %v4927 = vpack.c.b16 %v4391, %v4383
      %v4928 = vpack.c.b16 %v4392, %v4384
      %v4929 = vpack.c.b16 %v4393, %v4385
      %v4930 = vpack.c.b16 %v4394, %v4386
      %v4931 = vpack.c.b16 %v4395, %v4387
      %v4932 = vpack.c.b16 %v4404, %v4396
      %v4933 = vpack.c.b16 %v4405, %v4397
      %v4934 = vpack.c.b16 %v4406, %v4398
      %v4935 = vpack.c.b16 %v4407, %v4399
      %v4936 = vpack.c.b16 %v4408, %v4400
      %v4937 = vpack.c.b16 %v4409, %v4401
      %v4938 = vpack.c.b16 %v4410, %v4402
      %v4939 = vpack.c.b16 %v4411, %v4403
      %v4940 = vpack.c.b16 %v4420, %v4412
      %v4941 = vpack.c.b16 %v4421, %v4413
      %v4942 = vpack.c.b16 %v4422, %v4414
      %v4943 = vpack.c.b16 %v4423, %v4415
      %v4944 = vpack.c.b16 %v4424, %v4416
      %v4945 = vpack.c.b16 %v4425, %v4417
      %v4946 = vpack.c.b16 %v4426, %v4418
      %v4947 = vpack.c.b16 %v4427, %v4419
      %v4948 = vpack.c.b16 %v4436, %v4428
      %v4949 = vpack.c.b16 %v4437, %v4429
      %v4950 = vpack.c.b16 %v4438, %v4430
      %v4951 = vpack.c.b16 %v4439, %v4431
      %v4952 = vpack.c.b16 %v4440, %v4432
      %v4953 = vpack.c.b16 %v4441, %v4433
      %v4954 = vpack.c.b16 %v4442, %v4434
      %v4955 = vpack.c.b16 %v4443, %v4435
      %5468 = vmatprep.subr.bf16.mxu0 %v4445
      %5469 = vmatpush1.bf16.msra.mxu0 %v4444
      %5470 = vmatprep.subr.bf16.mxu0 %v4453
      %5471 = vmatpush1.bf16.msra.mxu0 %v4452
      %5472 = vmatprep.subr.bf16.mxu0 %v4461
      %5473 = vmatpush1.bf16.msra.mxu0 %v4460
      %5474 = vmatprep.subr.bf16.mxu0 %v4469
      %5475 = vmatpush1.bf16.msra.mxu0 %v4468
      %5476 = vmatprep.subr.bf16.mxu0 %v4477
      %5477 = vmatpush1.bf16.msra.mxu0 %v4476
      %5478 = vmatprep.subr.bf16.mxu0 %v4485
      %5479 = vmatpush1.bf16.msra.mxu0 %v4484
      %5480 = vmatprep.subr.bf16.mxu0 %v4493
      %5481 = vmatpush1.bf16.msra.mxu0 %v4492
      %5482 = vmatprep.subr.bf16.mxu0 %v4501
      %5483 = vmatpush1.bf16.msra.mxu0 %v4500
      %5484 = vmatprep.subr.bf16.mxu0 %v4509
      %5485 = vmatpush1.bf16.msra.mxu0 %v4508
      %5486 = vmatprep.subr.bf16.mxu0 %v4517
      %5487 = vmatpush1.bf16.msra.mxu0 %v4516
      %5488 = vmatprep.subr.bf16.mxu0 %v4525
      %5489 = vmatpush1.bf16.msra.mxu0 %v4524
      %5490 = vmatprep.subr.bf16.mxu0 %v4533
      %5491 = vmatpush1.bf16.msra.mxu0 %v4532
      %5492 = vmatprep.subr.bf16.mxu0 %v4541
      %5493 = vmatpush1.bf16.msra.mxu0 %v4540
      %5494 = vmatprep.subr.bf16.mxu0 %v4549
      %5495 = vmatpush1.bf16.msra.mxu0 %v4548
      %5496 = vmatprep.subr.bf16.mxu0 %v4557
      %5497 = vmatpush1.bf16.msra.mxu0 %v4556
      %5498 = vmatprep.subr.bf16.mxu0 %v4565
      %5499 = vmatpush1.bf16.msra.mxu0 %v4564
      %5500 = vmatprep.mubr.bf16.mxu0 %v2347
      %5501 = vmatmul.mubr.bf16.gmra.mrb[0].mxu0 %v2346
      %v5502 = vpop.f32.mrb[0].mxu0
      %v5503 = vadd.f32 %v2871, %v5502
      %v5504 = vpop.f32.mrb[0].mxu0
      %v5505 = vadd.f32 %v2875, %v5504
      %v5506 = vpop.f32.mrb[0].mxu0
      %v5507 = vpop.f32.mrb[0].mxu0
      %5508 = vdwg.mxu0
      %5509 = vmatprep.subr.bf16.mxu0 %v4573
      %5510 = vmatpush1.bf16.msra.mxu0 %v4572
      %5511 = vmatprep.subr.bf16.mxu0 %v4581
      %5512 = vmatpush1.bf16.msra.mxu0 %v4580
      %5513 = vmatprep.subr.bf16.mxu0 %v4589
      %5514 = vmatpush1.bf16.msra.mxu0 %v4588
      %5515 = vmatprep.subr.bf16.mxu0 %v4597
      %5516 = vmatpush1.bf16.msra.mxu0 %v4596
      %5517 = vmatprep.subr.bf16.mxu0 %v4605
      %5518 = vmatpush1.bf16.msra.mxu0 %v4604
      %5519 = vmatprep.subr.bf16.mxu0 %v4613
      %5520 = vmatpush1.bf16.msra.mxu0 %v4612
      %5521 = vmatprep.subr.bf16.mxu0 %v4621
      %5522 = vmatpush1.bf16.msra.mxu0 %v4620
      %5523 = vmatprep.subr.bf16.mxu0 %v4629
      %5524 = vmatpush1.bf16.msra.mxu0 %v4628
      %5525 = vmatprep.subr.bf16.mxu0 %v4637
      %5526 = vmatpush1.bf16.msra.mxu0 %v4636
      %5527 = vmatprep.subr.bf16.mxu0 %v4645
      %5528 = vmatpush1.bf16.msra.mxu0 %v4644
      %5529 = vmatprep.subr.bf16.mxu0 %v4653
      %5530 = vmatpush1.bf16.msra.mxu0 %v4652
      %5531 = vmatprep.subr.bf16.mxu0 %v4661
      %5532 = vmatpush1.bf16.msra.mxu0 %v4660
      %5533 = vmatprep.subr.bf16.mxu0 %v4669
      %5534 = vmatpush1.bf16.msra.mxu0 %v4668
      %5535 = vmatprep.subr.bf16.mxu0 %v4677
      %5536 = vmatpush1.bf16.msra.mxu0 %v4676
      %5537 = vmatprep.subr.bf16.mxu0 %v4685
      %5538 = vmatpush1.bf16.msra.mxu0 %v4684
      %5539 = vmatprep.subr.bf16.mxu0 %v4693
      %5540 = vmatpush1.bf16.msra.mxu0 %v4692
      %5541 = vmatprep.mubr.bf16.mxu0 %v2349
      %5542 = vmatmul.mubr.bf16.gmra.mrb[0].mxu0 %v2348
      %v5543 = vpop.f32.mrb[0].mxu0
      %v5544 = vadd.f32 %v5503, %v5543
      %v5545 = vpop.f32.mrb[0].mxu0
      %v5546 = vadd.f32 %v5505, %v5545
      %v5547 = vpop.f32.mrb[0].mxu0
      %v5548 = vpop.f32.mrb[0].mxu0
      %5549 = vdwg.mxu0
      %5550 = vmatprep.subr.bf16.mxu0 %v4701
      %5551 = vmatpush1.bf16.msra.mxu0 %v4700
      %5552 = vmatprep.subr.bf16.mxu0 %v4709
      %5553 = vmatpush1.bf16.msra.mxu0 %v4708
      %5554 = vmatprep.subr.bf16.mxu0 %v4717
      %5555 = vmatpush1.bf16.msra.mxu0 %v4716
      %5556 = vmatprep.subr.bf16.mxu0 %v4725
      %5557 = vmatpush1.bf16.msra.mxu0 %v4724
      %5558 = vmatprep.subr.bf16.mxu0 %v4733
      %5559 = vmatpush1.bf16.msra.mxu0 %v4732
      %5560 = vmatprep.subr.bf16.mxu0 %v4741
      %5561 = vmatpush1.bf16.msra.mxu0 %v4740
      %5562 = vmatprep.subr.bf16.mxu0 %v4749
      %5563 = vmatpush1.bf16.msra.mxu0 %v4748
      %5564 = vmatprep.subr.bf16.mxu0 %v4757
      %5565 = vmatpush1.bf16.msra.mxu0 %v4756
      %5566 = vmatprep.subr.bf16.mxu0 %v4765
      %5567 = vmatpush1.bf16.msra.mxu0 %v4764
      %5568 = vmatprep.subr.bf16.mxu0 %v4773
      %5569 = vmatpush1.bf16.msra.mxu0 %v4772
      %5570 = vmatprep.subr.bf16.mxu0 %v4781
      %5571 = vmatpush1.bf16.msra.mxu0 %v4780
      %5572 = vmatprep.subr.bf16.mxu0 %v4789
      %5573 = vmatpush1.bf16.msra.mxu0 %v4788
      %5574 = vmatprep.subr.bf16.mxu0 %v4797
      %5575 = vmatpush1.bf16.msra.mxu0 %v4796
      %5576 = vmatprep.subr.bf16.mxu0 %v4805
      %5577 = vmatpush1.bf16.msra.mxu0 %v4804
      %5578 = vmatprep.subr.bf16.mxu0 %v4813
      %5579 = vmatpush1.bf16.msra.mxu0 %v4812
      %5580 = vmatprep.subr.bf16.mxu0 %v4821
      %5581 = vmatpush1.bf16.msra.mxu0 %v4820
      %5582 = vmatprep.mubr.bf16.mxu0 %v2351
      %5583 = vmatmul.mubr.bf16.gmra.mrb[0].mxu0 %v2350
      %v5584 = vpop.f32.mrb[0].mxu0
      %v5585 = vadd.f32 %v5544, %v5584
      %v5586 = vpop.f32.mrb[0].mxu0
      %v5587 = vadd.f32 %v5546, %v5586
      %v5588 = vpop.f32.mrb[0].mxu0
      %v5589 = vpop.f32.mrb[0].mxu0
      %5590 = vdwg.mxu0
      %5591 = vmatprep.subr.bf16.mxu0 %v4829
      %5592 = vmatpush1.bf16.msra.mxu0 %v4828
      %5593 = vmatprep.subr.bf16.mxu0 %v4837
      %5594 = vmatpush1.bf16.msra.mxu0 %v4836
      %5595 = vmatprep.subr.bf16.mxu0 %v4845
      %5596 = vmatpush1.bf16.msra.mxu0 %v4844
      %5597 = vmatprep.subr.bf16.mxu0 %v4853
      %5598 = vmatpush1.bf16.msra.mxu0 %v4852
      %5599 = vmatprep.subr.bf16.mxu0 %v4861
      %5600 = vmatpush1.bf16.msra.mxu0 %v4860
      %5601 = vmatprep.subr.bf16.mxu0 %v4869
      %5602 = vmatpush1.bf16.msra.mxu0 %v4868
      %5603 = vmatprep.subr.bf16.mxu0 %v4877
      %5604 = vmatpush1.bf16.msra.mxu0 %v4876
      %5605 = vmatprep.subr.bf16.mxu0 %v4885
      %5606 = vmatpush1.bf16.msra.mxu0 %v4884
      %5607 = vmatprep.subr.bf16.mxu0 %v4893
      %5608 = vmatpush1.bf16.msra.mxu0 %v4892
      %5609 = vmatprep.subr.bf16.mxu0 %v4901
      %5610 = vmatpush1.bf16.msra.mxu0 %v4900
      %5611 = vmatprep.subr.bf16.mxu0 %v4909
      %5612 = vmatpush1.bf16.msra.mxu0 %v4908
      %5613 = vmatprep.subr.bf16.mxu0 %v4917
      %5614 = vmatpush1.bf16.msra.mxu0 %v4916
      %5615 = vmatprep.subr.bf16.mxu0 %v4925
      %5616 = vmatpush1.bf16.msra.mxu0 %v4924
      %5617 = vmatprep.subr.bf16.mxu0 %v4933
      %5618 = vmatpush1.bf16.msra.mxu0 %v4932
      %5619 = vmatprep.subr.bf16.mxu0 %v4941
      %5620 = vmatpush1.bf16.msra.mxu0 %v4940
      %5621 = vmatprep.subr.bf16.mxu0 %v4949
      %5622 = vmatpush1.bf16.msra.mxu0 %v4948
      %5623 = vmatprep.mubr.bf16.mxu0 %v2353
      %5624 = vmatmul.mubr.bf16.gmra.mrb[0].mxu0 %v2352
      %v5625 = vpop.f32.mrb[0].mxu0
      %v5626 = vadd.f32 %v5585, %v5625
      %v5627 = vpop.f32.mrb[0].mxu0
      %v5628 = vadd.f32 %v5587, %v5627
      %v5629 = vpop.f32.mrb[0].mxu0
      %v5630 = vpop.f32.mrb[0].mxu0
      %5631 = vdwg.mxu0
      %5632 = vmatprep.subr.bf16.mxu0 %v4447
      %5633 = vmatpush1.bf16.msra.mxu0 %v4446
      %5634 = vmatprep.subr.bf16.mxu0 %v4455
      %5635 = vmatpush1.bf16.msra.mxu0 %v4454
      %5636 = vmatprep.subr.bf16.mxu0 %v4463
      %5637 = vmatpush1.bf16.msra.mxu0 %v4462
      %5638 = vmatprep.subr.bf16.mxu0 %v4471
      %5639 = vmatpush1.bf16.msra.mxu0 %v4470
      %5640 = vmatprep.subr.bf16.mxu0 %v4479
      %5641 = vmatpush1.bf16.msra.mxu0 %v4478
      %5642 = vmatprep.subr.bf16.mxu0 %v4487
      %5643 = vmatpush1.bf16.msra.mxu0 %v4486
      %5644 = vmatprep.subr.bf16.mxu0 %v4495
      %5645 = vmatpush1.bf16.msra.mxu0 %v4494
      %5646 = vmatprep.subr.bf16.mxu0 %v4503
      %5647 = vmatpush1.bf16.msra.mxu0 %v4502
      %5648 = vmatprep.subr.bf16.mxu0 %v4511
      %5649 = vmatpush1.bf16.msra.mxu0 %v4510
      %5650 = vmatprep.subr.bf16.mxu0 %v4519
      %5651 = vmatpush1.bf16.msra.mxu0 %v4518
      %5652 = vmatprep.subr.bf16.mxu0 %v4527
      %5653 = vmatpush1.bf16.msra.mxu0 %v4526
      %5654 = vmatprep.subr.bf16.mxu0 %v4535
      %5655 = vmatpush1.bf16.msra.mxu0 %v4534
      %5656 = vmatprep.subr.bf16.mxu0 %v4543
      %5657 = vmatpush1.bf16.msra.mxu0 %v4542
      %5658 = vmatprep.subr.bf16.mxu0 %v4551
      %5659 = vmatpush1.bf16.msra.mxu0 %v4550
      %5660 = vmatprep.subr.bf16.mxu0 %v4559
      %5661 = vmatpush1.bf16.msra.mxu0 %v4558
      %5662 = vmatprep.subr.bf16.mxu0 %v4567
      %5663 = vmatpush1.bf16.msra.mxu0 %v4566
      %5664 = vmatprep.mubr.bf16.mxu0 %v2347
      %5665 = vmatmul.mubr.bf16.gmra.mrb[0].mxu0 %v2346
      %v5666 = vpop.f32.mrb[0].mxu0
      %v5667 = vadd.f32 %v2879, %v5666
      %v5668 = vpop.f32.mrb[0].mxu0
      %v5669 = vadd.f32 %v2883, %v5668
      %v5670 = vpop.f32.mrb[0].mxu0
      %v5671 = vpop.f32.mrb[0].mxu0
      %5672 = vdwg.mxu0
      %5673 = vmatprep.subr.bf16.mxu0 %v4575
      %5674 = vmatpush1.bf16.msra.mxu0 %v4574
      %5675 = vmatprep.subr.bf16.mxu0 %v4583
      %5676 = vmatpush1.bf16.msra.mxu0 %v4582
      %5677 = vmatprep.subr.bf16.mxu0 %v4591
      %5678 = vmatpush1.bf16.msra.mxu0 %v4590
      %5679 = vmatprep.subr.bf16.mxu0 %v4599
      %5680 = vmatpush1.bf16.msra.mxu0 %v4598
      %5681 = vmatprep.subr.bf16.mxu0 %v4607
      %5682 = vmatpush1.bf16.msra.mxu0 %v4606
      %5683 = vmatprep.subr.bf16.mxu0 %v4615
      %5684 = vmatpush1.bf16.msra.mxu0 %v4614
      %5685 = vmatprep.subr.bf16.mxu0 %v4623
      %5686 = vmatpush1.bf16.msra.mxu0 %v4622
      %5687 = vmatprep.subr.bf16.mxu0 %v4631
      %5688 = vmatpush1.bf16.msra.mxu0 %v4630
      %5689 = vmatprep.subr.bf16.mxu0 %v4639
      %5690 = vmatpush1.bf16.msra.mxu0 %v4638
      %5691 = vmatprep.subr.bf16.mxu0 %v4647
      %5692 = vmatpush1.bf16.msra.mxu0 %v4646
      %5693 = vmatprep.subr.bf16.mxu0 %v4655
      %5694 = vmatpush1.bf16.msra.mxu0 %v4654
      %5695 = vmatprep.subr.bf16.mxu0 %v4663
      %5696 = vmatpush1.bf16.msra.mxu0 %v4662
      %5697 = vmatprep.subr.bf16.mxu0 %v4671
      %5698 = vmatpush1.bf16.msra.mxu0 %v4670
      %5699 = vmatprep.subr.bf16.mxu0 %v4679
      %5700 = vmatpush1.bf16.msra.mxu0 %v4678
      %5701 = vmatprep.subr.bf16.mxu0 %v4687
      %5702 = vmatpush1.bf16.msra.mxu0 %v4686
      %5703 = vmatprep.subr.bf16.mxu0 %v4695
      %5704 = vmatpush1.bf16.msra.mxu0 %v4694
      %5705 = vmatprep.mubr.bf16.mxu0 %v2349
      %5706 = vmatmul.mubr.bf16.gmra.mrb[0].mxu0 %v2348
      %v5707 = vpop.f32.mrb[0].mxu0
      %v5708 = vadd.f32 %v5667, %v5707
      %v5709 = vpop.f32.mrb[0].mxu0
      %v5710 = vadd.f32 %v5669, %v5709
      %v5711 = vpop.f32.mrb[0].mxu0
      %v5712 = vpop.f32.mrb[0].mxu0
      %5713 = vdwg.mxu0
      %5714 = vmatprep.subr.bf16.mxu0 %v4703
      %5715 = vmatpush1.bf16.msra.mxu0 %v4702
      %5716 = vmatprep.subr.bf16.mxu0 %v4711
      %5717 = vmatpush1.bf16.msra.mxu0 %v4710
      %5718 = vmatprep.subr.bf16.mxu0 %v4719
      %5719 = vmatpush1.bf16.msra.mxu0 %v4718
      %5720 = vmatprep.subr.bf16.mxu0 %v4727
      %5721 = vmatpush1.bf16.msra.mxu0 %v4726
      %5722 = vmatprep.subr.bf16.mxu0 %v4735
      %5723 = vmatpush1.bf16.msra.mxu0 %v4734
      %5724 = vmatprep.subr.bf16.mxu0 %v4743
      %5725 = vmatpush1.bf16.msra.mxu0 %v4742
      %5726 = vmatprep.subr.bf16.mxu0 %v4751
      %5727 = vmatpush1.bf16.msra.mxu0 %v4750
      %5728 = vmatprep.subr.bf16.mxu0 %v4759
      %5729 = vmatpush1.bf16.msra.mxu0 %v4758
      %5730 = vmatprep.subr.bf16.mxu0 %v4767
      %5731 = vmatpush1.bf16.msra.mxu0 %v4766
      %5732 = vmatprep.subr.bf16.mxu0 %v4775
      %5733 = vmatpush1.bf16.msra.mxu0 %v4774
      %5734 = vmatprep.subr.bf16.mxu0 %v4783
      %5735 = vmatpush1.bf16.msra.mxu0 %v4782
      %5736 = vmatprep.subr.bf16.mxu0 %v4791
      %5737 = vmatpush1.bf16.msra.mxu0 %v4790
      %5738 = vmatprep.subr.bf16.mxu0 %v4799
      %5739 = vmatpush1.bf16.msra.mxu0 %v4798
      %5740 = vmatprep.subr.bf16.mxu0 %v4807
      %5741 = vmatpush1.bf16.msra.mxu0 %v4806
      %5742 = vmatprep.subr.bf16.mxu0 %v4815
      %5743 = vmatpush1.bf16.msra.mxu0 %v4814
      %5744 = vmatprep.subr.bf16.mxu0 %v4823
      %5745 = vmatpush1.bf16.msra.mxu0 %v4822
      %5746 = vmatprep.mubr.bf16.mxu0 %v2351
      %5747 = vmatmul.mubr.bf16.gmra.mrb[0].mxu0 %v2350
      %v5748 = vpop.f32.mrb[0].mxu0
      %v5749 = vadd.f32 %v5708, %v5748
      %v5750 = vpop.f32.mrb[0].mxu0
      %v5751 = vadd.f32 %v5710, %v5750
      %v5752 = vpop.f32.mrb[0].mxu0
      %v5753 = vpop.f32.mrb[0].mxu0
      %5754 = vdwg.mxu0
      %5755 = vmatprep.subr.bf16.mxu0 %v4831
      %5756 = vmatpush1.bf16.msra.mxu0 %v4830
      %5757 = vmatprep.subr.bf16.mxu0 %v4839
      %5758 = vmatpush1.bf16.msra.mxu0 %v4838
      %5759 = vmatprep.subr.bf16.mxu0 %v4847
      %5760 = vmatpush1.bf16.msra.mxu0 %v4846
      %5761 = vmatprep.subr.bf16.mxu0 %v4855
      %5762 = vmatpush1.bf16.msra.mxu0 %v4854
      %5763 = vmatprep.subr.bf16.mxu0 %v4863
      %5764 = vmatpush1.bf16.msra.mxu0 %v4862
      %5765 = vmatprep.subr.bf16.mxu0 %v4871
      %5766 = vmatpush1.bf16.msra.mxu0 %v4870
      %5767 = vmatprep.subr.bf16.mxu0 %v4879
      %5768 = vmatpush1.bf16.msra.mxu0 %v4878
      %5769 = vmatprep.subr.bf16.mxu0 %v4887
      %5770 = vmatpush1.bf16.msra.mxu0 %v4886
      %5771 = vmatprep.subr.bf16.mxu0 %v4895
      %5772 = vmatpush1.bf16.msra.mxu0 %v4894
      %5773 = vmatprep.subr.bf16.mxu0 %v4903
      %5774 = vmatpush1.bf16.msra.mxu0 %v4902
      %5775 = vmatprep.subr.bf16.mxu0 %v4911
      %5776 = vmatpush1.bf16.msra.mxu0 %v4910
      %5777 = vmatprep.subr.bf16.mxu0 %v4919
      %5778 = vmatpush1.bf16.msra.mxu0 %v4918
      %5779 = vmatprep.subr.bf16.mxu0 %v4927
      %5780 = vmatpush1.bf16.msra.mxu0 %v4926
      %5781 = vmatprep.subr.bf16.mxu0 %v4935
      %5782 = vmatpush1.bf16.msra.mxu0 %v4934
      %5783 = vmatprep.subr.bf16.mxu0 %v4943
      %5784 = vmatpush1.bf16.msra.mxu0 %v4942
      %5785 = vmatprep.subr.bf16.mxu0 %v4951
      %5786 = vmatpush1.bf16.msra.mxu0 %v4950
      %5787 = vmatprep.mubr.bf16.mxu0 %v2353
      %5788 = vmatmul.mubr.bf16.gmra.mrb[0].mxu0 %v2352
      %v5789 = vpop.f32.mrb[0].mxu0
      %v5790 = vadd.f32 %v5749, %v5789
      %v5791 = vpop.f32.mrb[0].mxu0
      %v5792 = vadd.f32 %v5751, %v5791
      %v5793 = vpop.f32.mrb[0].mxu0
      %v5794 = vpop.f32.mrb[0].mxu0
      %5795 = vdwg.mxu0
      %5796 = vmatprep.subr.bf16.mxu0 %v4449
      %5797 = vmatpush1.bf16.msra.mxu0 %v4448
      %5798 = vmatprep.subr.bf16.mxu0 %v4457
      %5799 = vmatpush1.bf16.msra.mxu0 %v4456
      %5800 = vmatprep.subr.bf16.mxu0 %v4465
      %5801 = vmatpush1.bf16.msra.mxu0 %v4464
      %5802 = vmatprep.subr.bf16.mxu0 %v4473
      %5803 = vmatpush1.bf16.msra.mxu0 %v4472
      %5804 = vmatprep.subr.bf16.mxu0 %v4481
      %5805 = vmatpush1.bf16.msra.mxu0 %v4480
      %5806 = vmatprep.subr.bf16.mxu0 %v4489
      %5807 = vmatpush1.bf16.msra.mxu0 %v4488
      %5808 = vmatprep.subr.bf16.mxu0 %v4497
      %5809 = vmatpush1.bf16.msra.mxu0 %v4496
      %5810 = vmatprep.subr.bf16.mxu0 %v4505
      %5811 = vmatpush1.bf16.msra.mxu0 %v4504
      %5812 = vmatprep.subr.bf16.mxu0 %v4513
      %5813 = vmatpush1.bf16.msra.mxu0 %v4512
      %5814 = vmatprep.subr.bf16.mxu0 %v4521
      %5815 = vmatpush1.bf16.msra.mxu0 %v4520
      %5816 = vmatprep.subr.bf16.mxu0 %v4529
      %5817 = vmatpush1.bf16.msra.mxu0 %v4528
      %5818 = vmatprep.subr.bf16.mxu0 %v4537
      %5819 = vmatpush1.bf16.msra.mxu0 %v4536
      %5820 = vmatprep.subr.bf16.mxu0 %v4545
      %5821 = vmatpush1.bf16.msra.mxu0 %v4544
      %5822 = vmatprep.subr.bf16.mxu0 %v4553
      %5823 = vmatpush1.bf16.msra.mxu0 %v4552
      %5824 = vmatprep.subr.bf16.mxu0 %v4561
      %5825 = vmatpush1.bf16.msra.mxu0 %v4560
      %5826 = vmatprep.subr.bf16.mxu0 %v4569
      %5827 = vmatpush1.bf16.msra.mxu0 %v4568
      %5828 = vmatprep.mubr.bf16.mxu0 %v2347
      %5829 = vmatmul.mubr.bf16.gmra.mrb[0].mxu0 %v2346
      %v5830 = vpop.f32.mrb[0].mxu0
      %v5831 = vadd.f32 %v2887, %v5830
      %v5832 = vpop.f32.mrb[0].mxu0
      %v5833 = vadd.f32 %v2891, %v5832
      %v5834 = vpop.f32.mrb[0].mxu0
      %v5835 = vpop.f32.mrb[0].mxu0
      %5836 = vdwg.mxu0
      %5837 = vmatprep.subr.bf16.mxu0 %v4577
      %5838 = vmatpush1.bf16.msra.mxu0 %v4576
      %5839 = vmatprep.subr.bf16.mxu0 %v4585
      %5840 = vmatpush1.bf16.msra.mxu0 %v4584
      %5841 = vmatprep.subr.bf16.mxu0 %v4593
      %5842 = vmatpush1.bf16.msra.mxu0 %v4592
      %5843 = vmatprep.subr.bf16.mxu0 %v4601
      %5844 = vmatpush1.bf16.msra.mxu0 %v4600
      %5845 = vmatprep.subr.bf16.mxu0 %v4609
      %5846 = vmatpush1.bf16.msra.mxu0 %v4608
      %5847 = vmatprep.subr.bf16.mxu0 %v4617
      %5848 = vmatpush1.bf16.msra.mxu0 %v4616
      %5849 = vmatprep.subr.bf16.mxu0 %v4625
      %5850 = vmatpush1.bf16.msra.mxu0 %v4624
      %5851 = vmatprep.subr.bf16.mxu0 %v4633
      %5852 = vmatpush1.bf16.msra.mxu0 %v4632
      %5853 = vmatprep.subr.bf16.mxu0 %v4641
      %5854 = vmatpush1.bf16.msra.mxu0 %v4640
      %5855 = vmatprep.subr.bf16.mxu0 %v4649
      %5856 = vmatpush1.bf16.msra.mxu0 %v4648
      %5857 = vmatprep.subr.bf16.mxu0 %v4657
      %5858 = vmatpush1.bf16.msra.mxu0 %v4656
      %5859 = vmatprep.subr.bf16.mxu0 %v4665
      %5860 = vmatpush1.bf16.msra.mxu0 %v4664
      %5861 = vmatprep.subr.bf16.mxu0 %v4673
      %5862 = vmatpush1.bf16.msra.mxu0 %v4672
      %5863 = vmatprep.subr.bf16.mxu0 %v4681
      %5864 = vmatpush1.bf16.msra.mxu0 %v4680
      %5865 = vmatprep.subr.bf16.mxu0 %v4689
      %5866 = vmatpush1.bf16.msra.mxu0 %v4688
      %5867 = vmatprep.subr.bf16.mxu0 %v4697
      %5868 = vmatpush1.bf16.msra.mxu0 %v4696
      %5869 = vmatprep.mubr.bf16.mxu0 %v2349
      %5870 = vmatmul.mubr.bf16.gmra.mrb[0].mxu0 %v2348
      %v5871 = vpop.f32.mrb[0].mxu0
      %v5872 = vadd.f32 %v5831, %v5871
      %v5873 = vpop.f32.mrb[0].mxu0
      %v5874 = vadd.f32 %v5833, %v5873
      %v5875 = vpop.f32.mrb[0].mxu0
      %v5876 = vpop.f32.mrb[0].mxu0
      %5877 = vdwg.mxu0
      %5878 = vmatprep.subr.bf16.mxu0 %v4705
      %5879 = vmatpush1.bf16.msra.mxu0 %v4704
      %5880 = vmatprep.subr.bf16.mxu0 %v4713
      %5881 = vmatpush1.bf16.msra.mxu0 %v4712
      %5882 = vmatprep.subr.bf16.mxu0 %v4721
      %5883 = vmatpush1.bf16.msra.mxu0 %v4720
      %5884 = vmatprep.subr.bf16.mxu0 %v4729
      %5885 = vmatpush1.bf16.msra.mxu0 %v4728
      %5886 = vmatprep.subr.bf16.mxu0 %v4737
      %5887 = vmatpush1.bf16.msra.mxu0 %v4736
      %5888 = vmatprep.subr.bf16.mxu0 %v4745
      %5889 = vmatpush1.bf16.msra.mxu0 %v4744
      %5890 = vmatprep.subr.bf16.mxu0 %v4753
      %5891 = vmatpush1.bf16.msra.mxu0 %v4752
      %5892 = vmatprep.subr.bf16.mxu0 %v4761
      %5893 = vmatpush1.bf16.msra.mxu0 %v4760
      %5894 = vmatprep.subr.bf16.mxu0 %v4769
      %5895 = vmatpush1.bf16.msra.mxu0 %v4768
      %5896 = vmatprep.subr.bf16.mxu0 %v4777
      %5897 = vmatpush1.bf16.msra.mxu0 %v4776
      %5898 = vmatprep.subr.bf16.mxu0 %v4785
      %5899 = vmatpush1.bf16.msra.mxu0 %v4784
      %5900 = vmatprep.subr.bf16.mxu0 %v4793
      %5901 = vmatpush1.bf16.msra.mxu0 %v4792
      %5902 = vmatprep.subr.bf16.mxu0 %v4801
      %5903 = vmatpush1.bf16.msra.mxu0 %v4800
      %5904 = vmatprep.subr.bf16.mxu0 %v4809
      %5905 = vmatpush1.bf16.msra.mxu0 %v4808
      %5906 = vmatprep.subr.bf16.mxu0 %v4817
      %5907 = vmatpush1.bf16.msra.mxu0 %v4816
      %5908 = vmatprep.subr.bf16.mxu0 %v4825
      %5909 = vmatpush1.bf16.msra.mxu0 %v4824
      %5910 = vmatprep.mubr.bf16.mxu0 %v2351
      %5911 = vmatmul.mubr.bf16.gmra.mrb[0].mxu0 %v2350
      %v5912 = vpop.f32.mrb[0].mxu0
      %v5913 = vadd.f32 %v5872, %v5912
      %v5914 = vpop.f32.mrb[0].mxu0
      %v5915 = vadd.f32 %v5874, %v5914
      %v5916 = vpop.f32.mrb[0].mxu0
      %v5917 = vpop.f32.mrb[0].mxu0
      %5918 = vdwg.mxu0
      %5919 = vmatprep.subr.bf16.mxu0 %v4833
      %5920 = vmatpush1.bf16.msra.mxu0 %v4832
      %5921 = vmatprep.subr.bf16.mxu0 %v4841
      %5922 = vmatpush1.bf16.msra.mxu0 %v4840
      %5923 = vmatprep.subr.bf16.mxu0 %v4849
      %5924 = vmatpush1.bf16.msra.mxu0 %v4848
      %5925 = vmatprep.subr.bf16.mxu0 %v4857
      %5926 = vmatpush1.bf16.msra.mxu0 %v4856
      %5927 = vmatprep.subr.bf16.mxu0 %v4865
      %5928 = vmatpush1.bf16.msra.mxu0 %v4864
      %5929 = vmatprep.subr.bf16.mxu0 %v4873
      %5930 = vmatpush1.bf16.msra.mxu0 %v4872
      %5931 = vmatprep.subr.bf16.mxu0 %v4881
      %5932 = vmatpush1.bf16.msra.mxu0 %v4880
      %5933 = vmatprep.subr.bf16.mxu0 %v4889
      %5934 = vmatpush1.bf16.msra.mxu0 %v4888
      %5935 = vmatprep.subr.bf16.mxu0 %v4897
      %5936 = vmatpush1.bf16.msra.mxu0 %v4896
      %5937 = vmatprep.subr.bf16.mxu0 %v4905
      %5938 = vmatpush1.bf16.msra.mxu0 %v4904
      %5939 = vmatprep.subr.bf16.mxu0 %v4913
      %5940 = vmatpush1.bf16.msra.mxu0 %v4912
      %5941 = vmatprep.subr.bf16.mxu0 %v4921
      %5942 = vmatpush1.bf16.msra.mxu0 %v4920
      %5943 = vmatprep.subr.bf16.mxu0 %v4929
      %5944 = vmatpush1.bf16.msra.mxu0 %v4928
      %5945 = vmatprep.subr.bf16.mxu0 %v4937
      %5946 = vmatpush1.bf16.msra.mxu0 %v4936
      %5947 = vmatprep.subr.bf16.mxu0 %v4945
      %5948 = vmatpush1.bf16.msra.mxu0 %v4944
      %5949 = vmatprep.subr.bf16.mxu0 %v4953
      %5950 = vmatpush1.bf16.msra.mxu0 %v4952
      %5951 = vmatprep.mubr.bf16.mxu0 %v2353
      %5952 = vmatmul.mubr.bf16.gmra.mrb[0].mxu0 %v2352
      %v5953 = vpop.f32.mrb[0].mxu0
      %v5954 = vadd.f32 %v5913, %v5953
      %v5955 = vpop.f32.mrb[0].mxu0
      %v5956 = vadd.f32 %v5915, %v5955
      %v5957 = vpop.f32.mrb[0].mxu0
      %v5958 = vpop.f32.mrb[0].mxu0
      %5959 = vdwg.mxu0
      %5960 = vmatprep.subr.bf16.mxu0 %v4451
      %5961 = vmatpush1.bf16.msra.mxu0 %v4450
      %5962 = vmatprep.subr.bf16.mxu0 %v4459
      %5963 = vmatpush1.bf16.msra.mxu0 %v4458
      %5964 = vmatprep.subr.bf16.mxu0 %v4467
      %5965 = vmatpush1.bf16.msra.mxu0 %v4466
      %5966 = vmatprep.subr.bf16.mxu0 %v4475
      %5967 = vmatpush1.bf16.msra.mxu0 %v4474
      %5968 = vmatprep.subr.bf16.mxu0 %v4483
      %5969 = vmatpush1.bf16.msra.mxu0 %v4482
      %5970 = vmatprep.subr.bf16.mxu0 %v4491
      %5971 = vmatpush1.bf16.msra.mxu0 %v4490
      %5972 = vmatprep.subr.bf16.mxu0 %v4499
      %5973 = vmatpush1.bf16.msra.mxu0 %v4498
      %5974 = vmatprep.subr.bf16.mxu0 %v4507
      %5975 = vmatpush1.bf16.msra.mxu0 %v4506
      %5976 = vmatprep.subr.bf16.mxu0 %v4515
      %5977 = vmatpush1.bf16.msra.mxu0 %v4514
      %5978 = vmatprep.subr.bf16.mxu0 %v4523
      %5979 = vmatpush1.bf16.msra.mxu0 %v4522
      %5980 = vmatprep.subr.bf16.mxu0 %v4531
      %5981 = vmatpush1.bf16.msra.mxu0 %v4530
      %5982 = vmatprep.subr.bf16.mxu0 %v4539
      %5983 = vmatpush1.bf16.msra.mxu0 %v4538
      %5984 = vmatprep.subr.bf16.mxu0 %v4547
      %5985 = vmatpush1.bf16.msra.mxu0 %v4546
      %5986 = vmatprep.subr.bf16.mxu0 %v4555
      %5987 = vmatpush1.bf16.msra.mxu0 %v4554
      %5988 = vmatprep.subr.bf16.mxu0 %v4563
      %5989 = vmatpush1.bf16.msra.mxu0 %v4562
      %5990 = vmatprep.subr.bf16.mxu0 %v4571
      %5991 = vmatpush1.bf16.msra.mxu0 %v4570
      %5992 = vmatprep.mubr.bf16.mxu0 %v2347
      %5993 = vmatmul.mubr.bf16.gmra.mrb[0].mxu0 %v2346
      %v5994 = vpop.f32.mrb[0].mxu0
      %v5995 = vadd.f32 %v2895, %v5994
      %v5996 = vpop.f32.mrb[0].mxu0
      %v5997 = vadd.f32 %v2899, %v5996
      %v5998 = vpop.f32.mrb[0].mxu0
      %v5999 = vpop.f32.mrb[0].mxu0
      %6000 = vdwg.mxu0
      %6001 = vmatprep.subr.bf16.mxu0 %v4579
      %6002 = vmatpush1.bf16.msra.mxu0 %v4578
      %6003 = vmatprep.subr.bf16.mxu0 %v4587
      %6004 = vmatpush1.bf16.msra.mxu0 %v4586
      %6005 = vmatprep.subr.bf16.mxu0 %v4595
      %6006 = vmatpush1.bf16.msra.mxu0 %v4594
      %6007 = vmatprep.subr.bf16.mxu0 %v4603
      %6008 = vmatpush1.bf16.msra.mxu0 %v4602
      %6009 = vmatprep.subr.bf16.mxu0 %v4611
      %6010 = vmatpush1.bf16.msra.mxu0 %v4610
      %6011 = vmatprep.subr.bf16.mxu0 %v4619
      %6012 = vmatpush1.bf16.msra.mxu0 %v4618
      %6013 = vmatprep.subr.bf16.mxu0 %v4627
      %6014 = vmatpush1.bf16.msra.mxu0 %v4626
      %6015 = vmatprep.subr.bf16.mxu0 %v4635
      %6016 = vmatpush1.bf16.msra.mxu0 %v4634
      %6017 = vmatprep.subr.bf16.mxu0 %v4643
      %6018 = vmatpush1.bf16.msra.mxu0 %v4642
      %6019 = vmatprep.subr.bf16.mxu0 %v4651
      %6020 = vmatpush1.bf16.msra.mxu0 %v4650
      %6021 = vmatprep.subr.bf16.mxu0 %v4659
      %6022 = vmatpush1.bf16.msra.mxu0 %v4658
      %6023 = vmatprep.subr.bf16.mxu0 %v4667
      %6024 = vmatpush1.bf16.msra.mxu0 %v4666
      %6025 = vmatprep.subr.bf16.mxu0 %v4675
      %6026 = vmatpush1.bf16.msra.mxu0 %v4674
      %6027 = vmatprep.subr.bf16.mxu0 %v4683
      %6028 = vmatpush1.bf16.msra.mxu0 %v4682
      %6029 = vmatprep.subr.bf16.mxu0 %v4691
      %6030 = vmatpush1.bf16.msra.mxu0 %v4690
      %6031 = vmatprep.subr.bf16.mxu0 %v4699
      %6032 = vmatpush1.bf16.msra.mxu0 %v4698
      %6033 = vmatprep.mubr.bf16.mxu0 %v2349
      %6034 = vmatmul.mubr.bf16.gmra.mrb[0].mxu0 %v2348
      %v6035 = vpop.f32.mrb[0].mxu0
      %v6036 = vadd.f32 %v5995, %v6035
      %v6037 = vpop.f32.mrb[0].mxu0
      %v6038 = vadd.f32 %v5997, %v6037
      %v6039 = vpop.f32.mrb[0].mxu0
      %v6040 = vpop.f32.mrb[0].mxu0
      %6041 = vdwg.mxu0
      %6042 = vmatprep.subr.bf16.mxu0 %v4707
      %6043 = vmatpush1.bf16.msra.mxu0 %v4706
      %6044 = vmatprep.subr.bf16.mxu0 %v4715
      %6045 = vmatpush1.bf16.msra.mxu0 %v4714
      %6046 = vmatprep.subr.bf16.mxu0 %v4723
      %6047 = vmatpush1.bf16.msra.mxu0 %v4722
      %6048 = vmatprep.subr.bf16.mxu0 %v4731
      %6049 = vmatpush1.bf16.msra.mxu0 %v4730
      %6050 = vmatprep.subr.bf16.mxu0 %v4739
      %6051 = vmatpush1.bf16.msra.mxu0 %v4738
      %6052 = vmatprep.subr.bf16.mxu0 %v4747
      %6053 = vmatpush1.bf16.msra.mxu0 %v4746
      %6054 = vmatprep.subr.bf16.mxu0 %v4755
      %6055 = vmatpush1.bf16.msra.mxu0 %v4754
      %6056 = vmatprep.subr.bf16.mxu0 %v4763
      %6057 = vmatpush1.bf16.msra.mxu0 %v4762
      %6058 = vmatprep.subr.bf16.mxu0 %v4771
      %6059 = vmatpush1.bf16.msra.mxu0 %v4770
      %6060 = vmatprep.subr.bf16.mxu0 %v4779
      %6061 = vmatpush1.bf16.msra.mxu0 %v4778
      %6062 = vmatprep.subr.bf16.mxu0 %v4787
      %6063 = vmatpush1.bf16.msra.mxu0 %v4786
      %6064 = vmatprep.subr.bf16.mxu0 %v4795
      %6065 = vmatpush1.bf16.msra.mxu0 %v4794
      %6066 = vmatprep.subr.bf16.mxu0 %v4803
      %6067 = vmatpush1.bf16.msra.mxu0 %v4802
      %6068 = vmatprep.subr.bf16.mxu0 %v4811
      %6069 = vmatpush1.bf16.msra.mxu0 %v4810
      %6070 = vmatprep.subr.bf16.mxu0 %v4819
      %6071 = vmatpush1.bf16.msra.mxu0 %v4818
      %6072 = vmatprep.subr.bf16.mxu0 %v4827
      %6073 = vmatpush1.bf16.msra.mxu0 %v4826
      %6074 = vmatprep.mubr.bf16.mxu0 %v2351
      %6075 = vmatmul.mubr.bf16.gmra.mrb[0].mxu0 %v2350
      %v6076 = vpop.f32.mrb[0].mxu0
      %v6077 = vadd.f32 %v6036, %v6076
      %v6078 = vpop.f32.mrb[0].mxu0
      %v6079 = vadd.f32 %v6038, %v6078
      %v6080 = vpop.f32.mrb[0].mxu0
      %v6081 = vpop.f32.mrb[0].mxu0
      %6082 = vdwg.mxu0
      %6083 = vmatprep.subr.bf16.mxu0 %v4835
      %6084 = vmatpush1.bf16.msra.mxu0 %v4834
      %6085 = vmatprep.subr.bf16.mxu0 %v4843
      %6086 = vmatpush1.bf16.msra.mxu0 %v4842
      %6087 = vmatprep.subr.bf16.mxu0 %v4851
      %6088 = vmatpush1.bf16.msra.mxu0 %v4850
      %6089 = vmatprep.subr.bf16.mxu0 %v4859
      %6090 = vmatpush1.bf16.msra.mxu0 %v4858
      %6091 = vmatprep.subr.bf16.mxu0 %v4867
      %6092 = vmatpush1.bf16.msra.mxu0 %v4866
      %6093 = vmatprep.subr.bf16.mxu0 %v4875
      %6094 = vmatpush1.bf16.msra.mxu0 %v4874
      %6095 = vmatprep.subr.bf16.mxu0 %v4883
      %6096 = vmatpush1.bf16.msra.mxu0 %v4882
      %6097 = vmatprep.subr.bf16.mxu0 %v4891
      %6098 = vmatpush1.bf16.msra.mxu0 %v4890
      %6099 = vmatprep.subr.bf16.mxu0 %v4899
      %6100 = vmatpush1.bf16.msra.mxu0 %v4898
      %6101 = vmatprep.subr.bf16.mxu0 %v4907
      %6102 = vmatpush1.bf16.msra.mxu0 %v4906
      %6103 = vmatprep.subr.bf16.mxu0 %v4915
      %6104 = vmatpush1.bf16.msra.mxu0 %v4914
      %6105 = vmatprep.subr.bf16.mxu0 %v4923
      %6106 = vmatpush1.bf16.msra.mxu0 %v4922
      %6107 = vmatprep.subr.bf16.mxu0 %v4931
      %6108 = vmatpush1.bf16.msra.mxu0 %v4930
      %6109 = vmatprep.subr.bf16.mxu0 %v4939
      %6110 = vmatpush1.bf16.msra.mxu0 %v4938
      %6111 = vmatprep.subr.bf16.mxu0 %v4947
      %6112 = vmatpush1.bf16.msra.mxu0 %v4946
      %6113 = vmatprep.subr.bf16.mxu0 %v4955
      %6114 = vmatpush1.bf16.msra.mxu0 %v4954
      %6115 = vmatprep.mubr.bf16.mxu0 %v2353
      %6116 = vmatmul.mubr.bf16.gmra.mrb[0].mxu0 %v2352
      %v6117 = vpop.f32.mrb[0].mxu0
      %v6118 = vadd.f32 %v6077, %v6117
      %v6119 = vpop.f32.mrb[0].mxu0
      %v6120 = vadd.f32 %v6079, %v6119
      %v6121 = vpop.f32.mrb[0].mxu0
      %v6122 = vpop.f32.mrb[0].mxu0
      %6123 = vdwg.mxu0
      %v6124 = vtanh.pop %v5626
      %v6125 = vtanh.pop %v5628
      %v6126 = vtanh.pop %v5790
      %v6127 = vtanh.pop %v5792
      %v6128 = vtanh.pop %v5954
      %v6129 = vtanh.pop %v5956
      %v6130 = vtanh.pop %v6118
      %v6131 = vtanh.pop %v6120
      %v6132 = vpack.c.bf16 %v6124, %v6124
      %v6133 = vpack.c.bf16 %v6125, %v6125
      %v6134 = vpack.c.bf16 %v6126, %v6126
      %v6135 = vpack.c.bf16 %v6127, %v6127
      %v6136 = vpack.c.bf16 %v6128, %v6128
      %v6137 = vpack.c.bf16 %v6129, %v6129
      %v6138 = vpack.c.bf16 %v6130, %v6130
      %v6139 = vpack.c.bf16 %v6131, %v6131
      %v6140 = vld [vmem:[#allocation13] sm:$0xf]
      %v6141 = vld [vmem:[#allocation13 + $0x4] sm:$0xf]
      %v6142 = vld [vmem:[#allocation13 + $0x8] sm:$0xf]
      %v6143 = vld [vmem:[#allocation13 + $0xc] sm:$0xf]
      %v6144 = vld [vmem:[#allocation13 + $0x10] sm:$0xf]
      %v6145 = vld [vmem:[#allocation13 + $0x14] sm:$0xf]
      %v6146 = vld [vmem:[#allocation13 + $0x18] sm:$0xf]
      %v6147 = vld [vmem:[#allocation13 + $0x1c] sm:$0xf]
      %v6148 = vld [vmem:[#allocation13 + $0x20] sm:$0xf]
      %v6149 = vld [vmem:[#allocation13 + $0x24] sm:$0xf]
      %v6150 = vld [vmem:[#allocation13 + $0x28] sm:$0xf]
      %v6151 = vld [vmem:[#allocation13 + $0x2c] sm:$0xf]
      %v6152 = vld [vmem:[#allocation13 + $0x30] sm:$0xf]
      %v6153 = vld [vmem:[#allocation13 + $0x34] sm:$0xf]
      %v6154 = vld [vmem:[#allocation13 + $0x38] sm:$0xf]
      %v6155 = vld [vmem:[#allocation13 + $0x3c] sm:$0xf]
      %v6156 = vld [vmem:[#allocation13 + $0x40] sm:$0xf]
      %v6157 = vld [vmem:[#allocation13 + $0x44] sm:$0xf]
      %v6158 = vld [vmem:[#allocation13 + $0x48] sm:$0xf]
      %v6159 = vld [vmem:[#allocation13 + $0x4c] sm:$0xf]
      %v6160 = vld [vmem:[#allocation13 + $0x50] sm:$0xf]
      %v6161 = vld [vmem:[#allocation13 + $0x54] sm:$0xf]
      %v6162 = vld [vmem:[#allocation13 + $0x58] sm:$0xf]
      %v6163 = vld [vmem:[#allocation13 + $0x5c] sm:$0xf]
      %v6164 = vld [vmem:[#allocation13 + $0x60] sm:$0xf]
      %v6165 = vld [vmem:[#allocation13 + $0x64] sm:$0xf]
      %v6166 = vld [vmem:[#allocation13 + $0x68] sm:$0xf]
      %v6167 = vld [vmem:[#allocation13 + $0x6c] sm:$0xf]
      %v6168 = vld [vmem:[#allocation13 + $0x70] sm:$0xf]
      %v6169 = vld [vmem:[#allocation13 + $0x74] sm:$0xf]
      %v6170 = vld [vmem:[#allocation13 + $0x78] sm:$0xf]
      %v6171 = vld [vmem:[#allocation13 + $0x7c] sm:$0xf]
      %v6172 = vld [vmem:[#allocation13 + $0x80] sm:$0xf]
      %v6173 = vld [vmem:[#allocation13 + $0x84] sm:$0xf]
      %v6174 = vld [vmem:[#allocation13 + $0x88] sm:$0xf]
      %v6175 = vld [vmem:[#allocation13 + $0x8c] sm:$0xf]
      %v6176 = vld [vmem:[#allocation13 + $0x90] sm:$0xf]
      %v6177 = vld [vmem:[#allocation13 + $0x94] sm:$0xf]
      %v6178 = vld [vmem:[#allocation13 + $0x98] sm:$0xf]
      %v6179 = vld [vmem:[#allocation13 + $0x9c] sm:$0xf]
      %v6180 = vld [vmem:[#allocation13 + $0xa0] sm:$0xf]
      %v6181 = vld [vmem:[#allocation13 + $0xa4] sm:$0xf]
      %v6182 = vld [vmem:[#allocation13 + $0xa8] sm:$0xf]
      %v6183 = vld [vmem:[#allocation13 + $0xac] sm:$0xf]
      %v6184 = vld [vmem:[#allocation13 + $0xb0] sm:$0xf]
      %v6185 = vld [vmem:[#allocation13 + $0xb4] sm:$0xf]
      %v6186 = vld [vmem:[#allocation13 + $0xb8] sm:$0xf]
      %v6187 = vld [vmem:[#allocation13 + $0xbc] sm:$0xf]
      %v6188 = vld [vmem:[#allocation13 + $0xc0] sm:$0xf]
      %v6189 = vld [vmem:[#allocation13 + $0xc4] sm:$0xf]
      %v6190 = vld [vmem:[#allocation13 + $0xc8] sm:$0xf]
      %v6191 = vld [vmem:[#allocation13 + $0xcc] sm:$0xf]
      %v6192 = vld [vmem:[#allocation13 + $0xd0] sm:$0xf]
      %v6193 = vld [vmem:[#allocation13 + $0xd4] sm:$0xf]
      %v6194 = vld [vmem:[#allocation13 + $0xd8] sm:$0xf]
      %v6195 = vld [vmem:[#allocation13 + $0xdc] sm:$0xf]
      %v6196 = vld [vmem:[#allocation13 + $0xe0] sm:$0xf]
      %v6197 = vld [vmem:[#allocation13 + $0xe4] sm:$0xf]
      %v6198 = vld [vmem:[#allocation13 + $0xe8] sm:$0xf]
      %v6199 = vld [vmem:[#allocation13 + $0xec] sm:$0xf]
      %v6200 = vld [vmem:[#allocation13 + $0xf0] sm:$0xf]
      %v6201 = vld [vmem:[#allocation13 + $0xf4] sm:$0xf]
      %v6202 = vld [vmem:[#allocation13 + $0xf8] sm:$0xf]
      %v6203 = vld [vmem:[#allocation13 + $0xfc] sm:$0xf]
      %v6204 = vld [vmem:[#allocation13 + $0x100] sm:$0xf]
      %v6205 = vld [vmem:[#allocation13 + $0x104] sm:$0xf]
      %v6206 = vld [vmem:[#allocation13 + $0x108] sm:$0xf]
      %v6207 = vld [vmem:[#allocation13 + $0x10c] sm:$0xf]
      %v6208 = vld [vmem:[#allocation13 + $0x110] sm:$0xf]
      %v6209 = vld [vmem:[#allocation13 + $0x114] sm:$0xf]
      %v6210 = vld [vmem:[#allocation13 + $0x118] sm:$0xf]
      %v6211 = vld [vmem:[#allocation13 + $0x11c] sm:$0xf]
      %v6212 = vld [vmem:[#allocation13 + $0x120] sm:$0xf]
      %v6213 = vld [vmem:[#allocation13 + $0x124] sm:$0xf]
      %v6214 = vld [vmem:[#allocation13 + $0x128] sm:$0xf]
      %v6215 = vld [vmem:[#allocation13 + $0x12c] sm:$0xf]
      %v6216 = vld [vmem:[#allocation13 + $0x130] sm:$0xf]
      %v6217 = vld [vmem:[#allocation13 + $0x134] sm:$0xf]
      %v6218 = vld [vmem:[#allocation13 + $0x138] sm:$0xf]
      %v6219 = vld [vmem:[#allocation13 + $0x13c] sm:$0xf]
      %v6220 = vld [vmem:[#allocation13 + $0x140] sm:$0xf]
      %v6221 = vld [vmem:[#allocation13 + $0x144] sm:$0xf]
      %v6222 = vld [vmem:[#allocation13 + $0x148] sm:$0xf]
      %v6223 = vld [vmem:[#allocation13 + $0x14c] sm:$0xf]
      %v6224 = vld [vmem:[#allocation13 + $0x150] sm:$0xf]
      %v6225 = vld [vmem:[#allocation13 + $0x154] sm:$0xf]
      %v6226 = vld [vmem:[#allocation13 + $0x158] sm:$0xf]
      %v6227 = vld [vmem:[#allocation13 + $0x15c] sm:$0xf]
      %v6228 = vld [vmem:[#allocation13 + $0x160] sm:$0xf]
      %v6229 = vld [vmem:[#allocation13 + $0x164] sm:$0xf]
      %v6230 = vld [vmem:[#allocation13 + $0x168] sm:$0xf]
      %v6231 = vld [vmem:[#allocation13 + $0x16c] sm:$0xf]
      %v6232 = vld [vmem:[#allocation13 + $0x170] sm:$0xf]
      %v6233 = vld [vmem:[#allocation13 + $0x174] sm:$0xf]
      %v6234 = vld [vmem:[#allocation13 + $0x178] sm:$0xf]
      %v6235 = vld [vmem:[#allocation13 + $0x17c] sm:$0xf]
      %v6236 = vld [vmem:[#allocation13 + $0x180] sm:$0xf]
      %v6237 = vld [vmem:[#allocation13 + $0x184] sm:$0xf]
      %v6238 = vld [vmem:[#allocation13 + $0x188] sm:$0xf]
      %v6239 = vld [vmem:[#allocation13 + $0x18c] sm:$0xf]
      %v6240 = vld [vmem:[#allocation13 + $0x190] sm:$0xf]
      %v6241 = vld [vmem:[#allocation13 + $0x194] sm:$0xf]
      %v6242 = vld [vmem:[#allocation13 + $0x198] sm:$0xf]
      %v6243 = vld [vmem:[#allocation13 + $0x19c] sm:$0xf]
      %v6244 = vld [vmem:[#allocation13 + $0x1a0] sm:$0xf]
      %v6245 = vld [vmem:[#allocation13 + $0x1a4] sm:$0xf]
      %v6246 = vld [vmem:[#allocation13 + $0x1a8] sm:$0xf]
      %v6247 = vld [vmem:[#allocation13 + $0x1ac] sm:$0xf]
      %v6248 = vld [vmem:[#allocation13 + $0x1b0] sm:$0xf]
      %v6249 = vld [vmem:[#allocation13 + $0x1b4] sm:$0xf]
      %v6250 = vld [vmem:[#allocation13 + $0x1b8] sm:$0xf]
      %v6251 = vld [vmem:[#allocation13 + $0x1bc] sm:$0xf]
      %v6252 = vld [vmem:[#allocation13 + $0x1c0] sm:$0xf]
      %v6253 = vld [vmem:[#allocation13 + $0x1c4] sm:$0xf]
      %v6254 = vld [vmem:[#allocation13 + $0x1c8] sm:$0xf]
      %v6255 = vld [vmem:[#allocation13 + $0x1cc] sm:$0xf]
      %v6256 = vld [vmem:[#allocation13 + $0x1d0] sm:$0xf]
      %v6257 = vld [vmem:[#allocation13 + $0x1d4] sm:$0xf]
      %v6258 = vld [vmem:[#allocation13 + $0x1d8] sm:$0xf]
      %v6259 = vld [vmem:[#allocation13 + $0x1dc] sm:$0xf]
      %v6260 = vld [vmem:[#allocation13 + $0x1e0] sm:$0xf]
      %v6261 = vld [vmem:[#allocation13 + $0x1e4] sm:$0xf]
      %v6262 = vld [vmem:[#allocation13 + $0x1e8] sm:$0xf]
      %v6263 = vld [vmem:[#allocation13 + $0x1ec] sm:$0xf]
      %v6264 = vld [vmem:[#allocation13 + $0x1f0] sm:$0xf]
      %v6265 = vld [vmem:[#allocation13 + $0x1f4] sm:$0xf]
      %v6266 = vld [vmem:[#allocation13 + $0x1f8] sm:$0xf]
      %v6267 = vld [vmem:[#allocation13 + $0x1fc] sm:$0xf]
      %v6268 = vld [vmem:[#allocation15] sm:$0x1]
      %v6270 = vlaneseq
      %v6271 = vshrl.u32 %v6270, 7
      %v6272 = vsub.s32 0, %v6271
      %v6273 = vrot.slane %v6268, %v6272
      %v6403 = vunpack.c.l.b16 %v6140
      %v6404 = vunpack.c.l.b16 %v6141
      %v6405 = vunpack.c.l.b16 %v6142
      %v6406 = vunpack.c.l.b16 %v6143
      %v6407 = vunpack.c.l.b16 %v6144
      %v6408 = vunpack.c.l.b16 %v6145
      %v6409 = vunpack.c.l.b16 %v6146
      %v6410 = vunpack.c.l.b16 %v6147
      %v6411 = vunpack.c.l.b16 %v6148
      %v6412 = vunpack.c.l.b16 %v6149
      %v6413 = vunpack.c.l.b16 %v6150
      %v6414 = vunpack.c.l.b16 %v6151
      %v6415 = vunpack.c.l.b16 %v6152
      %v6416 = vunpack.c.l.b16 %v6153
      %v6417 = vunpack.c.l.b16 %v6154
      %v6418 = vunpack.c.l.b16 %v6155
      %v6419 = vunpack.c.l.b16 %v6156
      %v6420 = vunpack.c.l.b16 %v6157
      %v6421 = vunpack.c.l.b16 %v6158
      %v6422 = vunpack.c.l.b16 %v6159
      %v6423 = vunpack.c.l.b16 %v6160
      %v6424 = vunpack.c.l.b16 %v6161
      %v6425 = vunpack.c.l.b16 %v6162
      %v6426 = vunpack.c.l.b16 %v6163
      %v6427 = vunpack.c.l.b16 %v6164
      %v6428 = vunpack.c.l.b16 %v6165
      %v6429 = vunpack.c.l.b16 %v6166
      %v6430 = vunpack.c.l.b16 %v6167
      %v6431 = vunpack.c.l.b16 %v6168
      %v6432 = vunpack.c.l.b16 %v6169
      %v6433 = vunpack.c.l.b16 %v6170
      %v6434 = vunpack.c.l.b16 %v6171
      %v6435 = vunpack.c.l.b16 %v6172
      %v6436 = vunpack.c.l.b16 %v6173
      %v6437 = vunpack.c.l.b16 %v6174
      %v6438 = vunpack.c.l.b16 %v6175
      %v6439 = vunpack.c.l.b16 %v6176
      %v6440 = vunpack.c.l.b16 %v6177
      %v6441 = vunpack.c.l.b16 %v6178
      %v6442 = vunpack.c.l.b16 %v6179
      %v6443 = vunpack.c.l.b16 %v6180
      %v6444 = vunpack.c.l.b16 %v6181
      %v6445 = vunpack.c.l.b16 %v6182
      %v6446 = vunpack.c.l.b16 %v6183
      %v6447 = vunpack.c.l.b16 %v6184
      %v6448 = vunpack.c.l.b16 %v6185
      %v6449 = vunpack.c.l.b16 %v6186
      %v6450 = vunpack.c.l.b16 %v6187
      %v6451 = vunpack.c.l.b16 %v6188
      %v6452 = vunpack.c.l.b16 %v6189
      %v6453 = vunpack.c.l.b16 %v6190
      %v6454 = vunpack.c.l.b16 %v6191
      %v6455 = vunpack.c.l.b16 %v6192
      %v6456 = vunpack.c.l.b16 %v6193
      %v6457 = vunpack.c.l.b16 %v6194
      %v6458 = vunpack.c.l.b16 %v6195
      %v6459 = vunpack.c.l.b16 %v6196
      %v6460 = vunpack.c.l.b16 %v6197
      %v6461 = vunpack.c.l.b16 %v6198
      %v6462 = vunpack.c.l.b16 %v6199
      %v6463 = vunpack.c.l.b16 %v6200
      %v6464 = vunpack.c.l.b16 %v6201
      %v6465 = vunpack.c.l.b16 %v6202
      %v6466 = vunpack.c.l.b16 %v6203
      %v6467 = vunpack.c.l.b16 %v6204
      %v6468 = vunpack.c.l.b16 %v6205
      %v6469 = vunpack.c.l.b16 %v6206
      %v6470 = vunpack.c.l.b16 %v6207
      %v6471 = vunpack.c.l.b16 %v6208
      %v6472 = vunpack.c.l.b16 %v6209
      %v6473 = vunpack.c.l.b16 %v6210
      %v6474 = vunpack.c.l.b16 %v6211
      %v6475 = vunpack.c.l.b16 %v6212
      %v6476 = vunpack.c.l.b16 %v6213
      %v6477 = vunpack.c.l.b16 %v6214
      %v6478 = vunpack.c.l.b16 %v6215
      %v6479 = vunpack.c.l.b16 %v6216
      %v6480 = vunpack.c.l.b16 %v6217
      %v6481 = vunpack.c.l.b16 %v6218
      %v6482 = vunpack.c.l.b16 %v6219
      %v6483 = vunpack.c.l.b16 %v6220
      %v6484 = vunpack.c.l.b16 %v6221
      %v6485 = vunpack.c.l.b16 %v6222
      %v6486 = vunpack.c.l.b16 %v6223
      %v6487 = vunpack.c.l.b16 %v6224
      %v6488 = vunpack.c.l.b16 %v6225
      %v6489 = vunpack.c.l.b16 %v6226
      %v6490 = vunpack.c.l.b16 %v6227
      %v6491 = vunpack.c.l.b16 %v6228
      %v6492 = vunpack.c.l.b16 %v6229
      %v6493 = vunpack.c.l.b16 %v6230
      %v6494 = vunpack.c.l.b16 %v6231
      %v6495 = vunpack.c.l.b16 %v6232
      %v6496 = vunpack.c.l.b16 %v6233
      %v6497 = vunpack.c.l.b16 %v6234
      %v6498 = vunpack.c.l.b16 %v6235
      %v6499 = vunpack.c.l.b16 %v6236
      %v6500 = vunpack.c.l.b16 %v6237
      %v6501 = vunpack.c.l.b16 %v6238
      %v6502 = vunpack.c.l.b16 %v6239
      %v6503 = vunpack.c.l.b16 %v6240
      %v6504 = vunpack.c.l.b16 %v6241
      %v6505 = vunpack.c.l.b16 %v6242
      %v6506 = vunpack.c.l.b16 %v6243
      %v6507 = vunpack.c.l.b16 %v6244
      %v6508 = vunpack.c.l.b16 %v6245
      %v6509 = vunpack.c.l.b16 %v6246
      %v6510 = vunpack.c.l.b16 %v6247
      %v6511 = vunpack.c.l.b16 %v6248
      %v6512 = vunpack.c.l.b16 %v6249
      %v6513 = vunpack.c.l.b16 %v6250
      %v6514 = vunpack.c.l.b16 %v6251
      %v6515 = vunpack.c.l.b16 %v6252
      %v6516 = vunpack.c.l.b16 %v6253
      %v6517 = vunpack.c.l.b16 %v6254
      %v6518 = vunpack.c.l.b16 %v6255
      %v6519 = vunpack.c.l.b16 %v6256
      %v6520 = vunpack.c.l.b16 %v6257
      %v6521 = vunpack.c.l.b16 %v6258
      %v6522 = vunpack.c.l.b16 %v6259
      %v6523 = vunpack.c.l.b16 %v6260
      %v6524 = vunpack.c.l.b16 %v6261
      %v6525 = vunpack.c.l.b16 %v6262
      %v6526 = vunpack.c.l.b16 %v6263
      %v6527 = vunpack.c.l.b16 %v6264
      %v6528 = vunpack.c.l.b16 %v6265
      %v6529 = vunpack.c.l.b16 %v6266
      %v6530 = vunpack.c.l.b16 %v6267
      %v6531 = vpack.c.b16 %v6404, %v6403
      %v6532 = vpack.c.b16 %v6406, %v6405
      %v6533 = vpack.c.b16 %v6408, %v6407
      %v6534 = vpack.c.b16 %v6410, %v6409
      %v6535 = vpack.c.b16 %v6412, %v6411
      %v6536 = vpack.c.b16 %v6414, %v6413
      %v6537 = vpack.c.b16 %v6416, %v6415
      %v6538 = vpack.c.b16 %v6418, %v6417
      %v6539 = vpack.c.b16 %v6420, %v6419
      %v6540 = vpack.c.b16 %v6422, %v6421
      %v6541 = vpack.c.b16 %v6424, %v6423
      %v6542 = vpack.c.b16 %v6426, %v6425
      %v6543 = vpack.c.b16 %v6428, %v6427
      %v6544 = vpack.c.b16 %v6430, %v6429
      %v6545 = vpack.c.b16 %v6432, %v6431
      %v6546 = vpack.c.b16 %v6434, %v6433
      %v6547 = vpack.c.b16 %v6436, %v6435
      %v6548 = vpack.c.b16 %v6438, %v6437
      %v6549 = vpack.c.b16 %v6440, %v6439
      %v6550 = vpack.c.b16 %v6442, %v6441
      %v6551 = vpack.c.b16 %v6444, %v6443
      %v6552 = vpack.c.b16 %v6446, %v6445
      %v6553 = vpack.c.b16 %v6448, %v6447
      %v6554 = vpack.c.b16 %v6450, %v6449
      %v6555 = vpack.c.b16 %v6452, %v6451
      %v6556 = vpack.c.b16 %v6454, %v6453
      %v6557 = vpack.c.b16 %v6456, %v6455
      %v6558 = vpack.c.b16 %v6458, %v6457
      %v6559 = vpack.c.b16 %v6460, %v6459
      %v6560 = vpack.c.b16 %v6462, %v6461
      %v6561 = vpack.c.b16 %v6464, %v6463
      %v6562 = vpack.c.b16 %v6466, %v6465
      %v6563 = vpack.c.b16 %v6468, %v6467
      %v6564 = vpack.c.b16 %v6470, %v6469
      %v6565 = vpack.c.b16 %v6472, %v6471
      %v6566 = vpack.c.b16 %v6474, %v6473
      %v6567 = vpack.c.b16 %v6476, %v6475
      %v6568 = vpack.c.b16 %v6478, %v6477
      %v6569 = vpack.c.b16 %v6480, %v6479
      %v6570 = vpack.c.b16 %v6482, %v6481
      %v6571 = vpack.c.b16 %v6484, %v6483
      %v6572 = vpack.c.b16 %v6486, %v6485
      %v6573 = vpack.c.b16 %v6488, %v6487
      %v6574 = vpack.c.b16 %v6490, %v6489
      %v6575 = vpack.c.b16 %v6492, %v6491
      %v6576 = vpack.c.b16 %v6494, %v6493
      %v6577 = vpack.c.b16 %v6496, %v6495
      %v6578 = vpack.c.b16 %v6498, %v6497
      %v6579 = vpack.c.b16 %v6500, %v6499
      %v6580 = vpack.c.b16 %v6502, %v6501
      %v6581 = vpack.c.b16 %v6504, %v6503
      %v6582 = vpack.c.b16 %v6506, %v6505
      %v6583 = vpack.c.b16 %v6508, %v6507
      %v6584 = vpack.c.b16 %v6510, %v6509
      %v6585 = vpack.c.b16 %v6512, %v6511
      %v6586 = vpack.c.b16 %v6514, %v6513
      %v6587 = vpack.c.b16 %v6516, %v6515
      %v6588 = vpack.c.b16 %v6518, %v6517
      %v6589 = vpack.c.b16 %v6520, %v6519
      %v6590 = vpack.c.b16 %v6522, %v6521
      %v6591 = vpack.c.b16 %v6524, %v6523
      %v6592 = vpack.c.b16 %v6526, %v6525
      %v6593 = vpack.c.b16 %v6528, %v6527
      %v6594 = vpack.c.b16 %v6530, %v6529
      %6659 = vmatprep.subr.bf16.mxu0 0
      %6660 = vmatpush1.bf16.msra.mxu0 %v6531
      %6661 = vmatprep.subr.bf16.mxu0 0
      %6662 = vmatpush1.bf16.msra.mxu0 %v6532
      %6663 = vmatprep.subr.bf16.mxu0 0
      %6664 = vmatpush1.bf16.msra.mxu0 %v6533
      %6665 = vmatprep.subr.bf16.mxu0 0
      %6666 = vmatpush1.bf16.msra.mxu0 %v6534
      %6667 = vmatprep.subr.bf16.mxu0 0
      %6668 = vmatpush1.bf16.msra.mxu0 %v6535
      %6669 = vmatprep.subr.bf16.mxu0 0
      %6670 = vmatpush1.bf16.msra.mxu0 %v6536
      %6671 = vmatprep.subr.bf16.mxu0 0
      %6672 = vmatpush1.bf16.msra.mxu0 %v6537
      %6673 = vmatprep.subr.bf16.mxu0 0
      %6674 = vmatpush1.bf16.msra.mxu0 %v6538
      %6675 = vmatprep.subr.bf16.mxu0 0
      %6676 = vmatpush1.bf16.msra.mxu0 %v6539
      %6677 = vmatprep.subr.bf16.mxu0 0
      %6678 = vmatpush1.bf16.msra.mxu0 %v6540
      %6679 = vmatprep.subr.bf16.mxu0 0
      %6680 = vmatpush1.bf16.msra.mxu0 %v6541
      %6681 = vmatprep.subr.bf16.mxu0 0
      %6682 = vmatpush1.bf16.msra.mxu0 %v6542
      %6683 = vmatprep.subr.bf16.mxu0 0
      %6684 = vmatpush1.bf16.msra.mxu0 %v6543
      %6685 = vmatprep.subr.bf16.mxu0 0
      %6686 = vmatpush1.bf16.msra.mxu0 %v6544
      %6687 = vmatprep.subr.bf16.mxu0 0
      %6688 = vmatpush1.bf16.msra.mxu0 %v6545
      %6689 = vmatprep.subr.bf16.mxu0 0
      %6690 = vmatpush1.bf16.msra.mxu0 %v6546
      %6691 = vmatprep.mubr.bf16.mxu0 %v6133
      %6692 = vmatmul.mubr.bf16.gmra.mrb[0].mxu0 %v6132
      %v6693 = vpop.f32.mrb[0].mxu0
      %v6694 = vadd.f32 %v6273, %v6693
      %v6695 = vpop.f32.mrb[0].mxu0
      %v6696 = vpop.f32.mrb[0].mxu0
      %v6697 = vpop.f32.mrb[0].mxu0
      %6698 = vdwg.mxu0
      %6699 = vmatprep.subr.bf16.mxu0 0
      %6700 = vmatpush1.bf16.msra.mxu0 %v6547
      %6701 = vmatprep.subr.bf16.mxu0 0
      %6702 = vmatpush1.bf16.msra.mxu0 %v6548
      %6703 = vmatprep.subr.bf16.mxu0 0
      %6704 = vmatpush1.bf16.msra.mxu0 %v6549
      %6705 = vmatprep.subr.bf16.mxu0 0
      %6706 = vmatpush1.bf16.msra.mxu0 %v6550
      %6707 = vmatprep.subr.bf16.mxu0 0
      %6708 = vmatpush1.bf16.msra.mxu0 %v6551
      %6709 = vmatprep.subr.bf16.mxu0 0
      %6710 = vmatpush1.bf16.msra.mxu0 %v6552
      %6711 = vmatprep.subr.bf16.mxu0 0
      %6712 = vmatpush1.bf16.msra.mxu0 %v6553
      %6713 = vmatprep.subr.bf16.mxu0 0
      %6714 = vmatpush1.bf16.msra.mxu0 %v6554
      %6715 = vmatprep.subr.bf16.mxu0 0
      %6716 = vmatpush1.bf16.msra.mxu0 %v6555
      %6717 = vmatprep.subr.bf16.mxu0 0
      %6718 = vmatpush1.bf16.msra.mxu0 %v6556
      %6719 = vmatprep.subr.bf16.mxu0 0
      %6720 = vmatpush1.bf16.msra.mxu0 %v6557
      %6721 = vmatprep.subr.bf16.mxu0 0
      %6722 = vmatpush1.bf16.msra.mxu0 %v6558
      %6723 = vmatprep.subr.bf16.mxu0 0
      %6724 = vmatpush1.bf16.msra.mxu0 %v6559
      %6725 = vmatprep.subr.bf16.mxu0 0
      %6726 = vmatpush1.bf16.msra.mxu0 %v6560
      %6727 = vmatprep.subr.bf16.mxu0 0
      %6728 = vmatpush1.bf16.msra.mxu0 %v6561
      %6729 = vmatprep.subr.bf16.mxu0 0
      %6730 = vmatpush1.bf16.msra.mxu0 %v6562
      %6731 = vmatprep.mubr.bf16.mxu0 %v6135
      %6732 = vmatmul.mubr.bf16.gmra.mrb[0].mxu0 %v6134
      %v6733 = vpop.f32.mrb[0].mxu0
      %v6734 = vadd.f32 %v6694, %v6733
      %v6735 = vpop.f32.mrb[0].mxu0
      %v6736 = vpop.f32.mrb[0].mxu0
      %v6737 = vpop.f32.mrb[0].mxu0
      %6738 = vdwg.mxu0
      %6739 = vmatprep.subr.bf16.mxu0 0
      %6740 = vmatpush1.bf16.msra.mxu0 %v6563
      %6741 = vmatprep.subr.bf16.mxu0 0
      %6742 = vmatpush1.bf16.msra.mxu0 %v6564
      %6743 = vmatprep.subr.bf16.mxu0 0
      %6744 = vmatpush1.bf16.msra.mxu0 %v6565
      %6745 = vmatprep.subr.bf16.mxu0 0
      %6746 = vmatpush1.bf16.msra.mxu0 %v6566
      %6747 = vmatprep.subr.bf16.mxu0 0
      %6748 = vmatpush1.bf16.msra.mxu0 %v6567
      %6749 = vmatprep.subr.bf16.mxu0 0
      %6750 = vmatpush1.bf16.msra.mxu0 %v6568
      %6751 = vmatprep.subr.bf16.mxu0 0
      %6752 = vmatpush1.bf16.msra.mxu0 %v6569
      %6753 = vmatprep.subr.bf16.mxu0 0
      %6754 = vmatpush1.bf16.msra.mxu0 %v6570
      %6755 = vmatprep.subr.bf16.mxu0 0
      %6756 = vmatpush1.bf16.msra.mxu0 %v6571
      %6757 = vmatprep.subr.bf16.mxu0 0
      %6758 = vmatpush1.bf16.msra.mxu0 %v6572
      %6759 = vmatprep.subr.bf16.mxu0 0
      %6760 = vmatpush1.bf16.msra.mxu0 %v6573
      %6761 = vmatprep.subr.bf16.mxu0 0
      %6762 = vmatpush1.bf16.msra.mxu0 %v6574
      %6763 = vmatprep.subr.bf16.mxu0 0
      %6764 = vmatpush1.bf16.msra.mxu0 %v6575
      %6765 = vmatprep.subr.bf16.mxu0 0
      %6766 = vmatpush1.bf16.msra.mxu0 %v6576
      %6767 = vmatprep.subr.bf16.mxu0 0
      %6768 = vmatpush1.bf16.msra.mxu0 %v6577
      %6769 = vmatprep.subr.bf16.mxu0 0
      %6770 = vmatpush1.bf16.msra.mxu0 %v6578
      %6771 = vmatprep.mubr.bf16.mxu0 %v6137
      %6772 = vmatmul.mubr.bf16.gmra.mrb[0].mxu0 %v6136
      %v6773 = vpop.f32.mrb[0].mxu0
      %v6774 = vadd.f32 %v6734, %v6773
      %v6775 = vpop.f32.mrb[0].mxu0
      %v6776 = vpop.f32.mrb[0].mxu0
      %v6777 = vpop.f32.mrb[0].mxu0
      %6778 = vdwg.mxu0
      %6779 = vmatprep.subr.bf16.mxu0 0
      %6780 = vmatpush1.bf16.msra.mxu0 %v6579
      %6781 = vmatprep.subr.bf16.mxu0 0
      %6782 = vmatpush1.bf16.msra.mxu0 %v6580
      %6783 = vmatprep.subr.bf16.mxu0 0
      %6784 = vmatpush1.bf16.msra.mxu0 %v6581
      %6785 = vmatprep.subr.bf16.mxu0 0
      %6786 = vmatpush1.bf16.msra.mxu0 %v6582
      %6787 = vmatprep.subr.bf16.mxu0 0
      %6788 = vmatpush1.bf16.msra.mxu0 %v6583
      %6789 = vmatprep.subr.bf16.mxu0 0
      %6790 = vmatpush1.bf16.msra.mxu0 %v6584
      %6791 = vmatprep.subr.bf16.mxu0 0
      %6792 = vmatpush1.bf16.msra.mxu0 %v6585
      %6793 = vmatprep.subr.bf16.mxu0 0
      %6794 = vmatpush1.bf16.msra.mxu0 %v6586
      %6795 = vmatprep.subr.bf16.mxu0 0
      %6796 = vmatpush1.bf16.msra.mxu0 %v6587
      %6797 = vmatprep.subr.bf16.mxu0 0
      %6798 = vmatpush1.bf16.msra.mxu0 %v6588
      %6799 = vmatprep.subr.bf16.mxu0 0
      %6800 = vmatpush1.bf16.msra.mxu0 %v6589
      %6801 = vmatprep.subr.bf16.mxu0 0
      %6802 = vmatpush1.bf16.msra.mxu0 %v6590
      %6803 = vmatprep.subr.bf16.mxu0 0
      %6804 = vmatpush1.bf16.msra.mxu0 %v6591
      %6805 = vmatprep.subr.bf16.mxu0 0
      %6806 = vmatpush1.bf16.msra.mxu0 %v6592
      %6807 = vmatprep.subr.bf16.mxu0 0
      %6808 = vmatpush1.bf16.msra.mxu0 %v6593
      %6809 = vmatprep.subr.bf16.mxu0 0
      %6810 = vmatpush1.bf16.msra.mxu0 %v6594
      %6811 = vmatprep.mubr.bf16.mxu0 %v6139
      %6812 = vmatmul.mubr.bf16.gmra.mrb[0].mxu0 %v6138
      %v6813 = vpop.f32.mrb[0].mxu0
      %v6814 = vadd.f32 %v6774, %v6813
      %v6815 = vpop.f32.mrb[0].mxu0
      %v6816 = vpop.f32.mrb[0].mxu0
      %v6817 = vpop.f32.mrb[0].mxu0
      %6818 = vdwg.mxu0
      %v6819 = vmax.f32 %v6814, 0.0
      %6821 = vrot.lane.b32.xlu0 %v6819, 127
      %v6822 = vpop.permute.xlu0 %6821
      %v6824 = vsub.f32 %v6819, %v6822
      %v6825 = vmul.f32 %v6824, 1.442695
      %v6826 = vpow.pop %v6825
      %v6827 = vadd.f32 %v6826, 1.0
      %v6828 = vrcp.pop %v6827
      %v6829 = vmul.f32 1.0, %v6828
      %6831 = vset.pattern.permute.xlu0 0
      %6832 = vperm.xlu0 %6831, %v6829
      %v6833 = vpop.permute.xlu0 %6832
      %6835 = vst [vmem:[#allocation16] sm:$0xff] %v6833
      %6836 = vrot.lane.b32.xlu0 %v6819, 1
      %v6837 = vpop.permute.xlu0 %6836
      %vm6839 = vcmp.ge.f32.partialorder %v6819, %v6837
      %v6840 = vsel %vm6839, 1, 0
      %6841 = vset.pattern.permute.xlu0 1
      %6842 = vperm.xlu0 %6841, %v6840
      %v6843 = vpop.permute.xlu0 %6842
      %6844 = vst [vmem:[#allocation17] sm:$0xff] %v6843
    $region65: #{tpu_custom_call.1} parent=1 // pred_fallthru
      _
    // Predicated region
    $region66: #{tpu_custom_call.1} parent=1 // pred_check
      _
    $region67: #{tpu_custom_call.1} parent=1 // pred_check_branch
      %6846 = sbr.rel (0) target = $region69
    $region68: #{tpu_custom_call.1} parent=1 // pred_region
      %s6848 = ssub.s32 128, 128
      %6849 = vsyncadd [#allocation6], %s6848
      %s6851 = sshll.u32 [#allocation16], 4
      %s6852 = int_to_ptr.vmem [resolvable:$true] %s6851
      %6854 = dma.vmem_to_hbm [thread:$0]  %s6852, 128, %s7, [#allocation6]
    $region69: #{tpu_custom_call.1} parent=1 // pred_fallthru
      _
    // Predicated region
    $region70: #{tpu_custom_call.1} parent=1 // pred_check
      _
    $region71: #{tpu_custom_call.1} parent=1 // pred_check_branch
      %6856 = sbr.rel (0) target = $region73
    $region72: #{tpu_custom_call.1} parent=1 // pred_region
      %s6858 = ssub.s32 128, 128
      %6859 = vsyncadd [#allocation18], %s6858
      %s6861 = sshll.u32 [#allocation17], 4
      %s6862 = int_to_ptr.vmem [resolvable:$true] %s6861
      %6864 = dma.vmem_to_hbm [thread:$0]  %s6862, 128, %s8, [#allocation18]
    $region73: #{tpu_custom_call.1} parent=1 // pred_fallthru
      _
    // Predicated region
    $region74: #{tpu_custom_call.1} parent=1 // pred_check
      _
    $region75: #{tpu_custom_call.1} parent=1 // pred_check_branch
      %6866 = sbr.rel (0) target = $region77
    $region76: #{tpu_custom_call.1} parent=1 // pred_region
      %6867 = dma.done [#allocation6], 128
    $region77: #{tpu_custom_call.1} parent=1 // pred_fallthru
      _
    // Predicated region
    $region78: #{tpu_custom_call.1} parent=1 // pred_check
      _
    $region79: #{tpu_custom_call.1} parent=1 // pred_check_branch
      %6869 = sbr.rel (0) target = $region81
    $region80: #{tpu_custom_call.1} parent=1 // pred_region
      %6870 = dma.done [#allocation18], 128
    $region81: #{tpu_custom_call.1} parent=1 // pred_fallthru
      _
    %6871 = vsyncpa [#allocation5], 1
    %6872 = vsyncpa [#allocation8], 1
    %6873 = vsyncpa [#allocation11], 1
    %6874 = vsyncpa [#allocation14], 1
    %6875 = vsyncpa [#allocation6], 1
    %6876 = vsyncpa [#allocation18], 1

</llo_original>
